<compile_context>
chip_gen: v7x
topology: tpu7x:2x2x1
jax: 0.10.0
libtpu: 0.0.40
codegen_flags: <defaults>
</compile_context>

<pallas_src>
from functools import partial

import jax
import jax.numpy as jnp
from jax import lax
from jax.experimental import pallas as pl
from jax.experimental.pallas import tpu as pltpu


# --------------------------------------------------------------------------- kernel
def _ktm_kernel(H, W,
                gamma_ref, mask_ref, x2_ref, x3_ref,
                wq_ref, bq_ref, wk_ref, bk_ref,
                wv2_ref, bv2_ref, wv3_ref, bv3_ref,
                w3_2_ref, bnb2_ref, w1_2_ref, b1_2_ref,
                w3_3_ref, bnb3_ref, w1_3_ref, b1_3_ref,
                wo_ref, bo_ref,
                out_ref, buf_ref):
    """Fused per-batch KTM forward, channels-first (C, HW) layout.

    x2_ref/x3_ref/out_ref : (C, HW) f32, HW on the lane dimension.
    mask_ref              : (9, HW) f32 validity mask per 3x3 tap (zero padding).
    buf_ref               : (C, HW) f32 VMEM scratch holding the shifted tap.
    """
    f32, bf16 = jnp.float32, jnp.bfloat16
    HW = H * W

    x2 = x2_ref[...]                                   # (C, HW) f32
    x3 = x3_ref[...]
    C = x2.shape[0]

    # ---- 1x1 query / key projections (bf16 operands, f32 accumulation) ----
    x_sum = (x2 + x3).astype(bf16)
    x_mul = (x2 * x3).astype(bf16)
    q = jnp.dot(wq_ref[...], x_sum, preferred_element_type=f32) + bq_ref[...]  # (C/2, HW)
    k = jnp.dot(wk_ref[...], x_mul, preferred_element_type=f32) + bk_ref[...]  # (C/2, HW)

    # ---- attention, computed directly in transposed orientation ----
    # ET[j, i] = energy[i, j] = <q[:, i], k[:, j]>; only the small k is transposed.
    # TODO(synk): for large HW, tile this flash-style (online softmax over key blocks)
    #             to stay within v7x's 64 MiB VMEM; at HW=256 one block is fine.
    kT = k.T.astype(bf16)                              # (HW, C/2)
    ET = jnp.dot(kT, q.astype(bf16), preferred_element_type=f32)   # (HW, HW)
    # torch softmax(dim=-1) over j  ==  per-column softmax of ET
    ET = ET - jnp.max(ET, axis=0, keepdims=True)
    p = jnp.exp(ET)
    denom = jnp.sum(p, axis=0, keepdims=True)          # (1, HW)
    at = (p * pl.reciprocal(denom, approx=True)).astype(bf16)      # attention^T

    def branch(x, wv_ref, bv_ref, gamma, w3_ref, bnb_ref, w1_ref, b1_ref):
        # 1x1 value projection, attention application (o = V @ A^T), residual.
        v = jnp.dot(wv_ref[...], x.astype(bf16), preferred_element_type=f32) + bv_ref[...]
        o = jnp.dot(v.astype(bf16), at, preferred_element_type=f32)   # (C, HW), K=N=HW
        y = gamma * o + x                                             # f32 residual

        # 3x3 conv (padding=1, bias-free, BN scale already folded into w3) as nine
        # shifted + masked matmuls accumulated in f32.
        acc = None
        for dy in (-1, 0, 1):
            for dx in (-1, 0, 1):
                t = (dy + 1) * 3 + (dx + 1)            # torch kernel index ky*3+kx
                s = dy * W + dx                        # flat spatial shift
                if s > 0:
                    buf_ref[:, :HW - s] = y[:, s:]
                    buf_ref[:, HW - s:] = jnp.zeros((C, s), f32)
                elif s < 0:
                    buf_ref[:, -s:] = y[:, :HW + s]
                    buf_ref[:, :-s] = jnp.zeros((C, -s), f32)
                else:
                    buf_ref[...] = y
                shifted = (buf_ref[...] * mask_ref[t:t + 1, :]).astype(bf16)
                c = jnp.dot(w3_ref[t], shifted, preferred_element_type=f32)
                acc = c if acc is None else acc + c

        # folded BatchNorm bias + ReLU, then 1x1 conv (with bias).
        acc = jnp.maximum(acc + bnb_ref[...], 0.0)
        return jnp.dot(w1_ref[...], acc.astype(bf16),
                       preferred_element_type=f32) + b1_ref[...]

    # branch 2 fully, then branch 3 (short live ranges; only `at` spans both).
    t2 = branch(x2, wv2_ref, bv2_ref, gamma_ref[0],
                w3_2_ref, bnb2_ref, w1_2_ref, b1_2_ref)
    t3 = branch(x3, wv3_ref, bv3_ref, gamma_ref[1],
                w3_3_ref, bnb3_ref, w1_3_ref, b1_3_ref)

    # conv_out (Dropout2d identity + 1x1 conv with bias)
    out_ref[...] = jnp.dot(wo_ref[...], (t2 + t3).astype(bf16),
                           preferred_element_type=f32) + bo_ref[...]


# --------------------------------------------------------------------------- glue
def _tap_masks(H, W):
    """(9, HW) f32: 1 where the 3x3 tap reads inside the image, 0 where it would
    read the zero padding.  Pure layout glue computed once in the wrapper."""
    hh = jnp.repeat(jnp.arange(H), W)        # flat index i = h*W + w
    ww = jnp.tile(jnp.arange(W), H)
    rows = []
    for dy in (-1, 0, 1):
        for dx in (-1, 0, 1):
            valid = ((hh + dy >= 0) & (hh + dy < H) &
                     (ww + dx >= 0) & (ww + dx < W))
            rows.append(valid.astype(jnp.float32))
    return jnp.stack(rows, axis=0)


def prepare_kernel_params(p):
    """Offline prep: cast matmul weights to bf16 and fold the eval-mode BatchNorm
    scale into the 3x3 conv weights (the kernel then only adds the folded bias)."""
    bf16 = jnp.bfloat16
    return dict(
        gamma=p["gamma"].astype(jnp.float32),
        wq=p["wq"].astype(bf16), bq=p["bq"],
        wk=p["wk"].astype(bf16), bk=p["bk"],
        wv2=p["wv2"].astype(bf16), bv2=p["bv2"],
        wv3=p["wv3"].astype(bf16), bv3=p["bv3"],
        w3_2=(p["w3_2"] * p["bns2"][None, :, :]).astype(bf16), bnb2=p["bnb2"],
        w3_3=(p["w3_3"] * p["bns3"][None, :, :]).astype(bf16), bnb3=p["bnb3"],
        w1_2=p["w1_2"].astype(bf16), b1_2=p["b1_2"],
        w1_3=p["w1_3"].astype(bf16), b1_3=p["b1_3"],
        wo=p["wo"].astype(bf16), bo=p["bo"],
    )


def ktm_forward(kparams, x2_nchw, x3_nchw):
    B, C, H, W = x2_nchw.shape
    HW = H * W
    C2 = C // 2

    # NCHW -> (B, C, HW): pure reshape, no transpose (channels-first kernel layout).
    x2 = x2_nchw.reshape(B, C, HW)
    x3 = x3_nchw.reshape(B, C, HW)
    masks = _tap_masks(H, W)

    def full(shape):
        return pl.BlockSpec(shape, lambda b: (0,) * len(shape))

    feat_spec = pl.BlockSpec((None, C, HW), lambda b: (b, 0, 0))

    out = pl.pallas_call(
        partial(_ktm_kernel, H, W),
        grid=(B,),
        in_specs=[
            pl.BlockSpec(memory_space=pltpu.MemorySpace.SMEM),   # gamma (2,)
            full((9, HW)),                                       # conv tap masks
            feat_spec, feat_spec,                                # x2, x3
            full((C2, C)), full((C2, 1)),                        # query_conv
            full((C2, C)), full((C2, 1)),                        # key_conv
            full((C, C)), full((C, 1)),                          # value_conv_2
            full((C, C)), full((C, 1)),                          # value_conv_3
            full((9, C, C)), full((C, 1)), full((C, C)), full((C, 1)),   # conv_2 branch
            full((9, C, C)), full((C, 1)), full((C, C)), full((C, 1)),   # conv_3 branch
            full((C, C)), full((C, 1)),                          # conv_out
        ],
        out_specs=feat_spec,
        out_shape=jax.ShapeDtypeStruct((B, C, HW), jnp.float32),
        scratch_shapes=[pltpu.VMEM((C, HW), jnp.float32)],
        compiler_params=pltpu.CompilerParams(
            dimension_semantics=("parallel",)),   # batch elements across cores
    )(kparams["gamma"], masks, x2, x3,
      kparams["wq"], kparams["bq"], kparams["wk"], kparams["bk"],
      kparams["wv2"], kparams["bv2"], kparams["wv3"], kparams["bv3"],
      kparams["w3_2"], kparams["bnb2"], kparams["w1_2"], kparams["b1_2"],
      kparams["w3_3"], kparams["bnb3"], kparams["w1_3"], kparams["b1_3"],
      kparams["wo"], kparams["bo"])

    return out.reshape(B, C, H, W)


# --------------------------------------------------------------------------- reference (pure JAX, f32)
def ktm_reference(params, x2_nchw, x3_nchw):
    B, C, H, W = x2_nchw.shape
    HW = H * W
    x2 = x2_nchw.reshape(B, C, HW)
    x3 = x3_nchw.reshape(B, C, HW)

    def proj(wmat, bias, x):                  # 1x1 conv, channels-first
        return jnp.einsum("oc,bci->boi", wmat, x) + bias

    q = proj(params["wq"], params["bq"], x2 + x3)          # (B, C/2, HW)
    k = proj(params["wk"], params["bk"], x2 * x3)
    energy = jnp.einsum("bmi,bmj->bij", q, k)               # (B, HW, HW)
    attn = jax.nn.softmax(energy, axis=-1)
    v2 = proj(params["wv2"], params["bv2"], x2)
    v3 = proj(params["wv3"], params["bv3"], x3)
    o2 = jnp.einsum("bcj,bij->bci", v2, attn)
    o3 = jnp.einsum("bcj,bij->bci", v3, attn)
    y2 = (params["gamma"][0] * o2 + x2).reshape(B, C, H, W)
    y3 = (params["gamma"][1] * o3 + x3).reshape(B, C, H, W)

    def branch(y, w3, bns, bnb, w1, b1):
        # assemble (O, I, 3, 3) from per-tap layout: w3[ky*3+kx] == W[:, :, ky, kx]
        w4 = jnp.transpose(w3.reshape(3, 3, C, C), (2, 3, 0, 1))
        t = lax.conv_general_dilated(y, w4, (1, 1), ((1, 1), (1, 1)),
                                     dimension_numbers=("NCHW", "OIHW", "NCHW"))
        t = t.reshape(B, C, HW)
        t = jnp.maximum(t * bns + bnb, 0.0)
        return jnp.einsum("oc,bci->boi", w1, t) + b1

    t2 = branch(y2, params["w3_2"], params["bns2"], params["bnb2"],
                params["w1_2"], params["b1_2"])
    t3 = branch(y3, params["w3_3"], params["bns3"], params["bnb3"],
                params["w1_3"], params["b1_3"])
    out = jnp.einsum("oc,bci->boi", params["wo"], t2 + t3) + params["bo"]
    return out.reshape(B, C, H, W)


# --------------------------------------------------------------------------- params
def init_params(key, C):
    C2 = C // 2
    ks = jax.random.split(key, 20)
    s = 0.1

    def w(k, shape):
        return (s * jax.random.normal(k, shape)).astype(jnp.float32)

    # gamma_2/gamma_3 are zeros(1) in the torch __init__; use nonzero deterministic
    # values here so the attention path actually contributes to the check.
    return dict(
        gamma=jnp.array([0.5, 0.7], jnp.float32),
        wq=w(ks[0], (C2, C)), bq=w(ks[1], (C2, 1)),
        wk=w(ks[2], (C2, C)), bk=w(ks[3], (C2, 1)),
        wv2=w(ks[4], (C, C)), bv2=w(ks[5], (C, 1)),
        wv3=w(ks[6], (C, C)), bv3=w(ks[7], (C, 1)),
        # 3x3 conv weights in per-tap layout: w3[ky*3+kx, out, in]
        w3_2=w(ks[8], (9, C, C)), w3_3=w(ks[9], (9, C, C)),
        w1_2=w(ks[10], (C, C)), b1_2=w(ks[11], (C, 1)),
        w1_3=w(ks[12], (C, C)), b1_3=w(ks[13], (C, 1)),
        wo=w(ks[14], (C, C)), bo=w(ks[15], (C, 1)),
        # BatchNorm2d (eval mode) folded to per-channel scale / bias
        bns2=(1.0 + s * jax.random.normal(ks[16], (C, 1))).astype(jnp.float32),
        bnb2=w(ks[17], (C, 1)),
        bns3=(1.0 + s * jax.random.normal(ks[18], (C, 1))).astype(jnp.float32),
        bnb3=w(ks[19], (C, 1)),
    )


# --------------------------------------------------------------------------- main
if __name__ == "__main__":
    key = jax.random.PRNGKey(0)
    kp, k1, k2 = jax.random.split(key, 3)

    B, C, H, W = 2, 32, 16, 16        # KTM(channel=32), small spatial size
    params = init_params(kp, C)
    x2 = jax.random.normal(k1, (B, C, H, W), jnp.float32)
    x3 = jax.random.normal(k2, (B, C, H, W), jnp.float32)

    kparams = prepare_kernel_params(params)   # offline: bf16 cast + BN folding
    fwd = jax.jit(partial(ktm_forward, kparams))
    out = jax.block_until_ready(fwd(x2, x3))

    assert out.shape == (B, C, H, W), out.shape
    ref = ktm_reference(params, x2, x3)
    max_err = float(jnp.max(jnp.abs(out - ref)))
    finite = bool(jnp.all(jnp.isfinite(out)))
    # bf16 MXU operands vs f32 reference: loose absolute tolerance (output scale ~3).
    if finite and max_err < 1e-1:
        print("KERNEL_OK")
    else:
        raise SystemExit(f"MISMATCH max_err={max_err} finite={finite}")
</pallas_src>

<mosaic_0001>
module attributes {stable_mosaic.version = 11 : i64} {
  func.func @_ktm_kernel(%arg0: i32, %arg1: memref<2xf32, #tpu.memory_space<smem>>, %arg2: memref<9x256xf32, #tpu.memory_space<vmem>>, %arg3: memref<1x32x256xf32, #tpu.memory_space<vmem>>, %arg4: memref<1x32x256xf32, #tpu.memory_space<vmem>>, %arg5: memref<16x32xbf16, #tpu.memory_space<vmem>>, %arg6: memref<16x1xf32, #tpu.memory_space<vmem>>, %arg7: memref<16x32xbf16, #tpu.memory_space<vmem>>, %arg8: memref<16x1xf32, #tpu.memory_space<vmem>>, %arg9: memref<32x32xbf16, #tpu.memory_space<vmem>>, %arg10: memref<32x1xf32, #tpu.memory_space<vmem>>, %arg11: memref<32x32xbf16, #tpu.memory_space<vmem>>, %arg12: memref<32x1xf32, #tpu.memory_space<vmem>>, %arg13: memref<9x32x32xbf16, #tpu.memory_space<vmem>>, %arg14: memref<32x1xf32, #tpu.memory_space<vmem>>, %arg15: memref<32x32xbf16, #tpu.memory_space<vmem>>, %arg16: memref<32x1xf32, #tpu.memory_space<vmem>>, %arg17: memref<9x32x32xbf16, #tpu.memory_space<vmem>>, %arg18: memref<32x1xf32, #tpu.memory_space<vmem>>, %arg19: memref<32x32xbf16, #tpu.memory_space<vmem>>, %arg20: memref<32x1xf32, #tpu.memory_space<vmem>>, %arg21: memref<32x32xbf16, #tpu.memory_space<vmem>>, %arg22: memref<32x1xf32, #tpu.memory_space<vmem>>, %arg23: memref<1x32x256xf32, #tpu.memory_space<vmem>>, %arg24: memref<32x256xf32, #tpu.memory_space<vmem>>) attributes {dimension_semantics = [#tpu.dimension_semantics<parallel>], iteration_bounds = array<i64: 2>, scalar_prefetch = 0 : i64, scratch_operands = 1 : i64, tpu.core_type = #tpu.core_type<tc>, window_params = [{transform_indices = @transform_0, window_bounds = array<i64: 2>}, {pipeline_mode = #tpu.pipeline_mode<synchronous>, transform_indices = @transform_1, window_bounds = array<i64: 9, 256>}, {transform_indices = @transform_2, window_bounds = array<i64: 1, 32, 256>}, {transform_indices = @transform_3, window_bounds = array<i64: 1, 32, 256>}, {pipeline_mode = #tpu.pipeline_mode<synchronous>, transform_indices = @transform_4, window_bounds = array<i64: 16, 32>}, {pipeline_mode = #tpu.pipeline_mode<synchronous>, transform_indices = @transform_5, window_bounds = array<i64: 16, 1>}, {pipeline_mode = #tpu.pipeline_mode<synchronous>, transform_indices = @transform_6, window_bounds = array<i64: 16, 32>}, {pipeline_mode = #tpu.pipeline_mode<synchronous>, transform_indices = @transform_7, window_bounds = array<i64: 16, 1>}, {pipeline_mode = #tpu.pipeline_mode<synchronous>, transform_indices = @transform_8, window_bounds = array<i64: 32, 32>}, {pipeline_mode = #tpu.pipeline_mode<synchronous>, transform_indices = @transform_9, window_bounds = array<i64: 32, 1>}, {pipeline_mode = #tpu.pipeline_mode<synchronous>, transform_indices = @transform_10, window_bounds = array<i64: 32, 32>}, {pipeline_mode = #tpu.pipeline_mode<synchronous>, transform_indices = @transform_11, window_bounds = array<i64: 32, 1>}, {pipeline_mode = #tpu.pipeline_mode<synchronous>, transform_indices = @transform_12, window_bounds = array<i64: 9, 32, 32>}, {pipeline_mode = #tpu.pipeline_mode<synchronous>, transform_indices = @transform_13, window_bounds = array<i64: 32, 1>}, {pipeline_mode = #tpu.pipeline_mode<synchronous>, transform_indices = @transform_14, window_bounds = array<i64: 32, 32>}, {pipeline_mode = #tpu.pipeline_mode<synchronous>, transform_indices = @transform_15, window_bounds = array<i64: 32, 1>}, {pipeline_mode = #tpu.pipeline_mode<synchronous>, transform_indices = @transform_16, window_bounds = array<i64: 9, 32, 32>}, {pipeline_mode = #tpu.pipeline_mode<synchronous>, transform_indices = @transform_17, window_bounds = array<i64: 32, 1>}, {pipeline_mode = #tpu.pipeline_mode<synchronous>, transform_indices = @transform_18, window_bounds = array<i64: 32, 32>}, {pipeline_mode = #tpu.pipeline_mode<synchronous>, transform_indices = @transform_19, window_bounds = array<i64: 32, 1>}, {pipeline_mode = #tpu.pipeline_mode<synchronous>, transform_indices = @transform_20, window_bounds = array<i64: 32, 32>}, {pipeline_mode = #tpu.pipeline_mode<synchronous>, transform_indices = @transform_21, window_bounds = array<i64: 32, 1>}, {transform_indices = @transform_22, window_bounds = array<i64: 1, 32, 256>}]} {
    %c0 = arith.constant 0 : index
    %c0_0 = arith.constant 0 : index
    %c0_1 = arith.constant 0 : index
    %0 = vector.load %arg3[%c0, %c0_0, %c0_1] : memref<1x32x256xf32, #tpu.memory_space<vmem>>, vector<1x32x256xf32>
    %1 = vector.shape_cast %0 : vector<1x32x256xf32> to vector<32x256xf32>
    %c0_2 = arith.constant 0 : index
    %c0_3 = arith.constant 0 : index
    %c0_4 = arith.constant 0 : index
    %2 = vector.load %arg4[%c0_2, %c0_3, %c0_4] : memref<1x32x256xf32, #tpu.memory_space<vmem>>, vector<1x32x256xf32>
    %3 = vector.shape_cast %2 : vector<1x32x256xf32> to vector<32x256xf32>
    %4 = arith.addf %1, %3 : vector<32x256xf32>
    %5 = arith.truncf %4 : vector<32x256xf32> to vector<32x256xbf16>
    %6 = arith.mulf %1, %3 : vector<32x256xf32>
    %7 = arith.truncf %6 : vector<32x256xf32> to vector<32x256xbf16>
    %c0_5 = arith.constant 0 : index
    %c0_6 = arith.constant 0 : index
    %8 = vector.load %arg5[%c0_5, %c0_6] : memref<16x32xbf16, #tpu.memory_space<vmem>>, vector<16x32xbf16>
    %cst = arith.constant dense<0.000000e+00> : vector<16x256xf32>
    %9 = tpu.matmul %8, %5, %cst {dimension_numbers = #tpu.dot_dimension_numbers<[1], [0], [0], [1], [0, 0, 1, 1], [], []>} : vector<16x32xbf16>, vector<32x256xbf16>, vector<16x256xf32> -> vector<16x256xf32>
    %c0_7 = arith.constant 0 : index
    %c0_8 = arith.constant 0 : index
    %10 = vector.load %arg6[%c0_7, %c0_8] : memref<16x1xf32, #tpu.memory_space<vmem>>, vector<16x1xf32>
    %11 = vector.broadcast %10 : vector<16x1xf32> to vector<16x256xf32>
    %12 = arith.addf %9, %11 : vector<16x256xf32>
    %c0_9 = arith.constant 0 : index
    %c0_10 = arith.constant 0 : index
    %13 = vector.load %arg7[%c0_9, %c0_10] : memref<16x32xbf16, #tpu.memory_space<vmem>>, vector<16x32xbf16>
    %cst_11 = arith.constant dense<0.000000e+00> : vector<16x256xf32>
    %14 = tpu.matmul %13, %7, %cst_11 {dimension_numbers = #tpu.dot_dimension_numbers<[1], [0], [0], [1], [0, 0, 1, 1], [], []>} : vector<16x32xbf16>, vector<32x256xbf16>, vector<16x256xf32> -> vector<16x256xf32>
    %c0_12 = arith.constant 0 : index
    %c0_13 = arith.constant 0 : index
    %15 = vector.load %arg8[%c0_12, %c0_13] : memref<16x1xf32, #tpu.memory_space<vmem>>, vector<16x1xf32>
    %16 = vector.broadcast %15 : vector<16x1xf32> to vector<16x256xf32>
    %17 = arith.addf %14, %16 : vector<16x256xf32>
    %18 = tpu.transpose %17, [1, 0] : vector<16x256xf32> -> vector<256x16xf32>
    %19 = arith.truncf %18 : vector<256x16xf32> to vector<256x16xbf16>
    %20 = arith.truncf %12 : vector<16x256xf32> to vector<16x256xbf16>
    %cst_14 = arith.constant dense<0.000000e+00> : vector<256x256xf32>
    %21 = tpu.matmul %19, %20, %cst_14 {dimension_numbers = #tpu.dot_dimension_numbers<[1], [0], [0], [1], [0, 0, 1, 1], [], []>} : vector<256x16xbf16>, vector<16x256xbf16>, vector<256x256xf32> -> vector<256x256xf32>
    %cst_15 = arith.constant dense<0xFF800000> : vector<256xf32>
    %22 = vector.multi_reduction <maximumf>, %21, %cst_15 [0] : vector<256x256xf32> to vector<256xf32>
    %23 = vector.shape_cast %22 : vector<256xf32> to vector<1x256xf32>
    %24 = vector.broadcast %23 : vector<1x256xf32> to vector<256x256xf32>
    %25 = arith.subf %21, %24 : vector<256x256xf32>
    %26 = math.exp %25 : vector<256x256xf32>
    %cst_16 = arith.constant dense<0.000000e+00> : vector<256xf32>
    %27 = vector.multi_reduction <add>, %26, %cst_16 [0] : vector<256x256xf32> to vector<256xf32>
    %28 = vector.shape_cast %27 : vector<256xf32> to vector<1x256xf32>
    %29 = tpu.reciprocal %28 {approx = true} : vector<1x256xf32> -> vector<1x256xf32>
    %30 = vector.broadcast %29 : vector<1x256xf32> to vector<256x256xf32>
    %31 = arith.mulf %26, %30 : vector<256x256xf32>
    %32 = arith.truncf %31 : vector<256x256xf32> to vector<256x256xbf16>
    %c0_17 = arith.constant 0 : index
    %33 = memref.load %arg1[%c0_17] : memref<2xf32, #tpu.memory_space<smem>>
    %c0_18 = arith.constant 0 : index
    %c0_19 = arith.constant 0 : index
    %34 = vector.load %arg9[%c0_18, %c0_19] : memref<32x32xbf16, #tpu.memory_space<vmem>>, vector<32x32xbf16>
    %35 = arith.truncf %1 : vector<32x256xf32> to vector<32x256xbf16>
    %cst_20 = arith.constant dense<0.000000e+00> : vector<32x256xf32>
    %36 = tpu.matmul %34, %35, %cst_20 {dimension_numbers = #tpu.dot_dimension_numbers<[1], [0], [0], [1], [0, 0, 1, 1], [], []>} : vector<32x32xbf16>, vector<32x256xbf16>, vector<32x256xf32> -> vector<32x256xf32>
    %c0_21 = arith.constant 0 : index
    %c0_22 = arith.constant 0 : index
    %37 = vector.load %arg10[%c0_21, %c0_22] : memref<32x1xf32, #tpu.memory_space<vmem>>, vector<32x1xf32>
    %38 = vector.broadcast %37 : vector<32x1xf32> to vector<32x256xf32>
    %39 = arith.addf %36, %38 : vector<32x256xf32>
    %40 = arith.truncf %39 : vector<32x256xf32> to vector<32x256xbf16>
    %cst_23 = arith.constant dense<0.000000e+00> : vector<32x256xf32>
    %41 = tpu.matmul %40, %32, %cst_23 {dimension_numbers = #tpu.dot_dimension_numbers<[1], [0], [0], [1], [0, 0, 1, 1], [], []>} : vector<32x256xbf16>, vector<256x256xbf16>, vector<32x256xf32> -> vector<32x256xf32>
    %42 = vector.broadcast %33 : f32 to vector<32x256xf32>
    %43 = arith.mulf %42, %41 : vector<32x256xf32>
    %44 = arith.addf %43, %1 : vector<32x256xf32>
    %45 = vector.extract_strided_slice %44 {offsets = [0, 0], sizes = [32, 239], strides = [1, 1]} : vector<32x256xf32> to vector<32x239xf32>
    %c0_24 = arith.constant 0 : index
    %c17 = arith.constant 17 : index
    %46 = vector.load %arg24[%c0_24, %c17] : memref<32x256xf32, #tpu.memory_space<vmem>>, vector<32x239xf32>
    tpu.vector_store %arg24[%c0_24, %c17], %45 {strides = array<i32>} : memref<32x256xf32, #tpu.memory_space<vmem>>, vector<32x239xf32>,
    %cst_25 = arith.constant 0.000000e+00 : f32
    %47 = vector.broadcast %cst_25 : f32 to vector<32x17xf32>
    %c0_26 = arith.constant 0 : index
    %c0_27 = arith.constant 0 : index
    %48 = vector.load %arg24[%c0_26, %c0_27] : memref<32x256xf32, #tpu.memory_space<vmem>>, vector<32x17xf32>
    tpu.vector_store %arg24[%c0_26, %c0_27], %47 {strides = array<i32>} : memref<32x256xf32, #tpu.memory_space<vmem>>, vector<32x17xf32>,
    %c0_28 = arith.constant 0 : index
    %c0_29 = arith.constant 0 : index
    %49 = vector.load %arg24[%c0_28, %c0_29] : memref<32x256xf32, #tpu.memory_space<vmem>>, vector<32x256xf32>
    %c0_30 = arith.constant 0 : index
    %c0_31 = arith.constant 0 : index
    %50 = vector.load %arg2[%c0_30, %c0_31] : memref<9x256xf32, #tpu.memory_space<vmem>>, vector<1x256xf32>
    %51 = vector.broadcast %50 : vector<1x256xf32> to vector<32x256xf32>
    %52 = arith.mulf %49, %51 : vector<32x256xf32>
    %53 = arith.truncf %52 : vector<32x256xf32> to vector<32x256xbf16>
    %c0_32 = arith.constant 0 : index
    %c0_33 = arith.constant 0 : index
    %c0_34 = arith.constant 0 : index
    %54 = vector.load %arg13[%c0_32, %c0_33, %c0_34] : memref<9x32x32xbf16, #tpu.memory_space<vmem>>, vector<1x32x32xbf16>
    %55 = vector.shape_cast %54 : vector<1x32x32xbf16> to vector<32x32xbf16>
    %cst_35 = arith.constant dense<0.000000e+00> : vector<32x256xf32>
    %56 = tpu.matmul %55, %53, %cst_35 {dimension_numbers = #tpu.dot_dimension_numbers<[1], [0], [0], [1], [0, 0, 1, 1], [], []>} : vector<32x32xbf16>, vector<32x256xbf16>, vector<32x256xf32> -> vector<32x256xf32>
    %57 = vector.extract_strided_slice %44 {offsets = [0, 0], sizes = [32, 240], strides = [1, 1]} : vector<32x256xf32> to vector<32x240xf32>
    %c0_36 = arith.constant 0 : index
    %c16 = arith.constant 16 : index
    %58 = vector.load %arg24[%c0_36, %c16] : memref<32x256xf32, #tpu.memory_space<vmem>>, vector<32x240xf32>
    tpu.vector_store %arg24[%c0_36, %c16], %57 {strides = array<i32>} : memref<32x256xf32, #tpu.memory_space<vmem>>, vector<32x240xf32>,
    %cst_37 = arith.constant 0.000000e+00 : f32
    %59 = vector.broadcast %cst_37 : f32 to vector<32x16xf32>
    %c0_38 = arith.constant 0 : index
    %c0_39 = arith.constant 0 : index
    %60 = vector.load %arg24[%c0_38, %c0_39] : memref<32x256xf32, #tpu.memory_space<vmem>>, vector<32x16xf32>
    tpu.vector_store %arg24[%c0_38, %c0_39], %59 {strides = array<i32>} : memref<32x256xf32, #tpu.memory_space<vmem>>, vector<32x16xf32>,
    %c0_40 = arith.constant 0 : index
    %c0_41 = arith.constant 0 : index
    %61 = vector.load %arg24[%c0_40, %c0_41] : memref<32x256xf32, #tpu.memory_space<vmem>>, vector<32x256xf32>
    %c1 = arith.constant 1 : index
    %c0_42 = arith.constant 0 : index
    %62 = vector.load %arg2[%c1, %c0_42] : memref<9x256xf32, #tpu.memory_space<vmem>>, vector<1x256xf32>
    %63 = vector.broadcast %62 : vector<1x256xf32> to vector<32x256xf32>
    %64 = arith.mulf %61, %63 : vector<32x256xf32>
    %65 = arith.truncf %64 : vector<32x256xf32> to vector<32x256xbf16>
    %c1_43 = arith.constant 1 : index
    %c0_44 = arith.constant 0 : index
    %c0_45 = arith.constant 0 : index
    %66 = vector.load %arg13[%c1_43, %c0_44, %c0_45] : memref<9x32x32xbf16, #tpu.memory_space<vmem>>, vector<1x32x32xbf16>
    %67 = vector.shape_cast %66 : vector<1x32x32xbf16> to vector<32x32xbf16>
    %cst_46 = arith.constant dense<0.000000e+00> : vector<32x256xf32>
    %68 = tpu.matmul %67, %65, %cst_46 {dimension_numbers = #tpu.dot_dimension_numbers<[1], [0], [0], [1], [0, 0, 1, 1], [], []>} : vector<32x32xbf16>, vector<32x256xbf16>, vector<32x256xf32> -> vector<32x256xf32>
    %69 = arith.addf %56, %68 : vector<32x256xf32>
    %70 = vector.extract_strided_slice %44 {offsets = [0, 0], sizes = [32, 241], strides = [1, 1]} : vector<32x256xf32> to vector<32x241xf32>
    %c0_47 = arith.constant 0 : index
    %c15 = arith.constant 15 : index
    %71 = vector.load %arg24[%c0_47, %c15] : memref<32x256xf32, #tpu.memory_space<vmem>>, vector<32x241xf32>
    tpu.vector_store %arg24[%c0_47, %c15], %70 {strides = array<i32>} : memref<32x256xf32, #tpu.memory_space<vmem>>, vector<32x241xf32>,
    %cst_48 = arith.constant 0.000000e+00 : f32
    %72 = vector.broadcast %cst_48 : f32 to vector<32x15xf32>
    %c0_49 = arith.constant 0 : index
    %c0_50 = arith.constant 0 : index
    %73 = vector.load %arg24[%c0_49, %c0_50] : memref<32x256xf32, #tpu.memory_space<vmem>>, vector<32x15xf32>
    tpu.vector_store %arg24[%c0_49, %c0_50], %72 {strides = array<i32>} : memref<32x256xf32, #tpu.memory_space<vmem>>, vector<32x15xf32>,
    %c0_51 = arith.constant 0 : index
    %c0_52 = arith.constant 0 : index
    %74 = vector.load %arg24[%c0_51, %c0_52] : memref<32x256xf32, #tpu.memory_space<vmem>>, vector<32x256xf32>
    %c2 = arith.constant 2 : index
    %c0_53 = arith.constant 0 : index
    %75 = vector.load %arg2[%c2, %c0_53] : memref<9x256xf32, #tpu.memory_space<vmem>>, vector<1x256xf32>
    %76 = vector.broadcast %75 : vector<1x256xf32> to vector<32x256xf32>
    %77 = arith.mulf %74, %76 : vector<32x256xf32>
    %78 = arith.truncf %77 : vector<32x256xf32> to vector<32x256xbf16>
    %c2_54 = arith.constant 2 : index
    %c0_55 = arith.constant 0 : index
    %c0_56 = arith.constant 0 : index
    %79 = vector.load %arg13[%c2_54, %c0_55, %c0_56] : memref<9x32x32xbf16, #tpu.memory_space<vmem>>, vector<1x32x32xbf16>
    %80 = vector.shape_cast %79 : vector<1x32x32xbf16> to vector<32x32xbf16>
    %cst_57 = arith.constant dense<0.000000e+00> : vector<32x256xf32>
    %81 = tpu.matmul %80, %78, %cst_57 {dimension_numbers = #tpu.dot_dimension_numbers<[1], [0], [0], [1], [0, 0, 1, 1], [], []>} : vector<32x32xbf16>, vector<32x256xbf16>, vector<32x256xf32> -> vector<32x256xf32>
    %82 = arith.addf %69, %81 : vector<32x256xf32>
    %83 = vector.extract_strided_slice %44 {offsets = [0, 0], sizes = [32, 255], strides = [1, 1]} : vector<32x256xf32> to vector<32x255xf32>
    %c0_58 = arith.constant 0 : index
    %c1_59 = arith.constant 1 : index
    %84 = vector.load %arg24[%c0_58, %c1_59] : memref<32x256xf32, #tpu.memory_space<vmem>>, vector<32x255xf32>
    tpu.vector_store %arg24[%c0_58, %c1_59], %83 {strides = array<i32>} : memref<32x256xf32, #tpu.memory_space<vmem>>, vector<32x255xf32>,
    %cst_60 = arith.constant 0.000000e+00 : f32
    %85 = vector.broadcast %cst_60 : f32 to vector<32x1xf32>
    %c0_61 = arith.constant 0 : index
    %c0_62 = arith.constant 0 : index
    %86 = vector.load %arg24[%c0_61, %c0_62] : memref<32x256xf32, #tpu.memory_space<vmem>>, vector<32x1xf32>
    tpu.vector_store %arg24[%c0_61, %c0_62], %85 {strides = array<i32>} : memref<32x256xf32, #tpu.memory_space<vmem>>, vector<32x1xf32>,
    %c0_63 = arith.constant 0 : index
    %c0_64 = arith.constant 0 : index
    %87 = vector.load %arg24[%c0_63, %c0_64] : memref<32x256xf32, #tpu.memory_space<vmem>>, vector<32x256xf32>
    %c3 = arith.constant 3 : index
    %c0_65 = arith.constant 0 : index
    %88 = vector.load %arg2[%c3, %c0_65] : memref<9x256xf32, #tpu.memory_space<vmem>>, vector<1x256xf32>
    %89 = vector.broadcast %88 : vector<1x256xf32> to vector<32x256xf32>
    %90 = arith.mulf %87, %89 : vector<32x256xf32>
    %91 = arith.truncf %90 : vector<32x256xf32> to vector<32x256xbf16>
    %c3_66 = arith.constant 3 : index
    %c0_67 = arith.constant 0 : index
    %c0_68 = arith.constant 0 : index
    %92 = vector.load %arg13[%c3_66, %c0_67, %c0_68] : memref<9x32x32xbf16, #tpu.memory_space<vmem>>, vector<1x32x32xbf16>
    %93 = vector.shape_cast %92 : vector<1x32x32xbf16> to vector<32x32xbf16>
    %cst_69 = arith.constant dense<0.000000e+00> : vector<32x256xf32>
    %94 = tpu.matmul %93, %91, %cst_69 {dimension_numbers = #tpu.dot_dimension_numbers<[1], [0], [0], [1], [0, 0, 1, 1], [], []>} : vector<32x32xbf16>, vector<32x256xbf16>, vector<32x256xf32> -> vector<32x256xf32>
    %95 = arith.addf %82, %94 : vector<32x256xf32>
    %c0_70 = arith.constant 0 : index
    %c0_71 = arith.constant 0 : index
    %96 = vector.load %arg24[%c0_70, %c0_71] : memref<32x256xf32, #tpu.memory_space<vmem>>, vector<32x256xf32>
    tpu.vector_store %arg24[%c0_70, %c0_71], %44 {strides = array<i32>} : memref<32x256xf32, #tpu.memory_space<vmem>>, vector<32x256xf32>,
    %c0_72 = arith.constant 0 : index
    %c0_73 = arith.constant 0 : index
    %97 = vector.load %arg24[%c0_72, %c0_73] : memref<32x256xf32, #tpu.memory_space<vmem>>, vector<32x256xf32>
    %c4 = arith.constant 4 : index
    %c0_74 = arith.constant 0 : index
    %98 = vector.load %arg2[%c4, %c0_74] : memref<9x256xf32, #tpu.memory_space<vmem>>, vector<1x256xf32>
    %99 = vector.broadcast %98 : vector<1x256xf32> to vector<32x256xf32>
    %100 = arith.mulf %97, %99 : vector<32x256xf32>
    %101 = arith.truncf %100 : vector<32x256xf32> to vector<32x256xbf16>
    %c4_75 = arith.constant 4 : index
    %c0_76 = arith.constant 0 : index
    %c0_77 = arith.constant 0 : index
    %102 = vector.load %arg13[%c4_75, %c0_76, %c0_77] : memref<9x32x32xbf16, #tpu.memory_space<vmem>>, vector<1x32x32xbf16>
    %103 = vector.shape_cast %102 : vector<1x32x32xbf16> to vector<32x32xbf16>
    %cst_78 = arith.constant dense<0.000000e+00> : vector<32x256xf32>
    %104 = tpu.matmul %103, %101, %cst_78 {dimension_numbers = #tpu.dot_dimension_numbers<[1], [0], [0], [1], [0, 0, 1, 1], [], []>} : vector<32x32xbf16>, vector<32x256xbf16>, vector<32x256xf32> -> vector<32x256xf32>
    %105 = arith.addf %95, %104 : vector<32x256xf32>
    %106 = vector.extract_strided_slice %44 {offsets = [0, 1], sizes = [32, 255], strides = [1, 1]} : vector<32x256xf32> to vector<32x255xf32>
    %c0_79 = arith.constant 0 : index
    %c0_80 = arith.constant 0 : index
    %107 = vector.load %arg24[%c0_79, %c0_80] : memref<32x256xf32, #tpu.memory_space<vmem>>, vector<32x255xf32>
    tpu.vector_store %arg24[%c0_79, %c0_80], %106 {strides = array<i32>} : memref<32x256xf32, #tpu.memory_space<vmem>>, vector<32x255xf32>,
    %cst_81 = arith.constant 0.000000e+00 : f32
    %108 = vector.broadcast %cst_81 : f32 to vector<32x1xf32>
    %c0_82 = arith.constant 0 : index
    %c255 = arith.constant 255 : index
    %109 = vector.load %arg24[%c0_82, %c255] : memref<32x256xf32, #tpu.memory_space<vmem>>, vector<32x1xf32>
    tpu.vector_store %arg24[%c0_82, %c255], %108 {strides = array<i32>} : memref<32x256xf32, #tpu.memory_space<vmem>>, vector<32x1xf32>,
    %c0_83 = arith.constant 0 : index
    %c0_84 = arith.constant 0 : index
    %110 = vector.load %arg24[%c0_83, %c0_84] : memref<32x256xf32, #tpu.memory_space<vmem>>, vector<32x256xf32>
    %c5 = arith.constant 5 : index
    %c0_85 = arith.constant 0 : index
    %111 = vector.load %arg2[%c5, %c0_85] : memref<9x256xf32, #tpu.memory_space<vmem>>, vector<1x256xf32>
    %112 = vector.broadcast %111 : vector<1x256xf32> to vector<32x256xf32>
    %113 = arith.mulf %110, %112 : vector<32x256xf32>
    %114 = arith.truncf %113 : vector<32x256xf32> to vector<32x256xbf16>
    %c5_86 = arith.constant 5 : index
    %c0_87 = arith.constant 0 : index
    %c0_88 = arith.constant 0 : index
    %115 = vector.load %arg13[%c5_86, %c0_87, %c0_88] : memref<9x32x32xbf16, #tpu.memory_space<vmem>>, vector<1x32x32xbf16>
    %116 = vector.shape_cast %115 : vector<1x32x32xbf16> to vector<32x32xbf16>
    %cst_89 = arith.constant dense<0.000000e+00> : vector<32x256xf32>
    %117 = tpu.matmul %116, %114, %cst_89 {dimension_numbers = #tpu.dot_dimension_numbers<[1], [0], [0], [1], [0, 0, 1, 1], [], []>} : vector<32x32xbf16>, vector<32x256xbf16>, vector<32x256xf32> -> vector<32x256xf32>
    %118 = arith.addf %105, %117 : vector<32x256xf32>
    %119 = vector.extract_strided_slice %44 {offsets = [0, 15], sizes = [32, 241], strides = [1, 1]} : vector<32x256xf32> to vector<32x241xf32>
    %c0_90 = arith.constant 0 : index
    %c0_91 = arith.constant 0 : index
    %120 = vector.load %arg24[%c0_90, %c0_91] : memref<32x256xf32, #tpu.memory_space<vmem>>, vector<32x241xf32>
    tpu.vector_store %arg24[%c0_90, %c0_91], %119 {strides = array<i32>} : memref<32x256xf32, #tpu.memory_space<vmem>>, vector<32x241xf32>,
    %cst_92 = arith.constant 0.000000e+00 : f32
    %121 = vector.broadcast %cst_92 : f32 to vector<32x15xf32>
    %c0_93 = arith.constant 0 : index
    %c241 = arith.constant 241 : index
    %122 = vector.load %arg24[%c0_93, %c241] : memref<32x256xf32, #tpu.memory_space<vmem>>, vector<32x15xf32>
    tpu.vector_store %arg24[%c0_93, %c241], %121 {strides = array<i32>} : memref<32x256xf32, #tpu.memory_space<vmem>>, vector<32x15xf32>,
    %c0_94 = arith.constant 0 : index
    %c0_95 = arith.constant 0 : index
    %123 = vector.load %arg24[%c0_94, %c0_95] : memref<32x256xf32, #tpu.memory_space<vmem>>, vector<32x256xf32>
    %c6 = arith.constant 6 : index
    %c0_96 = arith.constant 0 : index
    %124 = vector.load %arg2[%c6, %c0_96] : memref<9x256xf32, #tpu.memory_space<vmem>>, vector<1x256xf32>
    %125 = vector.broadcast %124 : vector<1x256xf32> to vector<32x256xf32>
    %126 = arith.mulf %123, %125 : vector<32x256xf32>
    %127 = arith.truncf %126 : vector<32x256xf32> to vector<32x256xbf16>
    %c6_97 = arith.constant 6 : index
    %c0_98 = arith.constant 0 : index
    %c0_99 = arith.constant 0 : index
    %128 = vector.load %arg13[%c6_97, %c0_98, %c0_99] : memref<9x32x32xbf16, #tpu.memory_space<vmem>>, vector<1x32x32xbf16>
    %129 = vector.shape_cast %128 : vector<1x32x32xbf16> to vector<32x32xbf16>
    %cst_100 = arith.constant dense<0.000000e+00> : vector<32x256xf32>
    %130 = tpu.matmul %129, %127, %cst_100 {dimension_numbers = #tpu.dot_dimension_numbers<[1], [0], [0], [1], [0, 0, 1, 1], [], []>} : vector<32x32xbf16>, vector<32x256xbf16>, vector<32x256xf32> -> vector<32x256xf32>
    %131 = arith.addf %118, %130 : vector<32x256xf32>
    %132 = vector.extract_strided_slice %44 {offsets = [0, 16], sizes = [32, 240], strides = [1, 1]} : vector<32x256xf32> to vector<32x240xf32>
    %c0_101 = arith.constant 0 : index
    %c0_102 = arith.constant 0 : index
    %133 = vector.load %arg24[%c0_101, %c0_102] : memref<32x256xf32, #tpu.memory_space<vmem>>, vector<32x240xf32>
    tpu.vector_store %arg24[%c0_101, %c0_102], %132 {strides = array<i32>} : memref<32x256xf32, #tpu.memory_space<vmem>>, vector<32x240xf32>,
    %cst_103 = arith.constant 0.000000e+00 : f32
    %134 = vector.broadcast %cst_103 : f32 to vector<32x16xf32>
    %c0_104 = arith.constant 0 : index
    %c240 = arith.constant 240 : index
    %135 = vector.load %arg24[%c0_104, %c240] : memref<32x256xf32, #tpu.memory_space<vmem>>, vector<32x16xf32>
    tpu.vector_store %arg24[%c0_104, %c240], %134 {strides = array<i32>} : memref<32x256xf32, #tpu.memory_space<vmem>>, vector<32x16xf32>,
    %c0_105 = arith.constant 0 : index
    %c0_106 = arith.constant 0 : index
    %136 = vector.load %arg24[%c0_105, %c0_106] : memref<32x256xf32, #tpu.memory_space<vmem>>, vector<32x256xf32>
    %c7 = arith.constant 7 : index
    %c0_107 = arith.constant 0 : index
    %137 = vector.load %arg2[%c7, %c0_107] : memref<9x256xf32, #tpu.memory_space<vmem>>, vector<1x256xf32>
    %138 = vector.broadcast %137 : vector<1x256xf32> to vector<32x256xf32>
    %139 = arith.mulf %136, %138 : vector<32x256xf32>
    %140 = arith.truncf %139 : vector<32x256xf32> to vector<32x256xbf16>
    %c7_108 = arith.constant 7 : index
    %c0_109 = arith.constant 0 : index
    %c0_110 = arith.constant 0 : index
    %141 = vector.load %arg13[%c7_108, %c0_109, %c0_110] : memref<9x32x32xbf16, #tpu.memory_space<vmem>>, vector<1x32x32xbf16>
    %142 = vector.shape_cast %141 : vector<1x32x32xbf16> to vector<32x32xbf16>
    %cst_111 = arith.constant dense<0.000000e+00> : vector<32x256xf32>
    %143 = tpu.matmul %142, %140, %cst_111 {dimension_numbers = #tpu.dot_dimension_numbers<[1], [0], [0], [1], [0, 0, 1, 1], [], []>} : vector<32x32xbf16>, vector<32x256xbf16>, vector<32x256xf32> -> vector<32x256xf32>
    %144 = arith.addf %131, %143 : vector<32x256xf32>
    %145 = vector.extract_strided_slice %44 {offsets = [0, 17], sizes = [32, 239], strides = [1, 1]} : vector<32x256xf32> to vector<32x239xf32>
    %c0_112 = arith.constant 0 : index
    %c0_113 = arith.constant 0 : index
    %146 = vector.load %arg24[%c0_112, %c0_113] : memref<32x256xf32, #tpu.memory_space<vmem>>, vector<32x239xf32>
    tpu.vector_store %arg24[%c0_112, %c0_113], %145 {strides = array<i32>} : memref<32x256xf32, #tpu.memory_space<vmem>>, vector<32x239xf32>,
    %cst_114 = arith.constant 0.000000e+00 : f32
    %147 = vector.broadcast %cst_114 : f32 to vector<32x17xf32>
    %c0_115 = arith.constant 0 : index
    %c239 = arith.constant 239 : index
    %148 = vector.load %arg24[%c0_115, %c239] : memref<32x256xf32, #tpu.memory_space<vmem>>, vector<32x17xf32>
    tpu.vector_store %arg24[%c0_115, %c239], %147 {strides = array<i32>} : memref<32x256xf32, #tpu.memory_space<vmem>>, vector<32x17xf32>,
    %c0_116 = arith.constant 0 : index
    %c0_117 = arith.constant 0 : index
    %149 = vector.load %arg24[%c0_116, %c0_117] : memref<32x256xf32, #tpu.memory_space<vmem>>, vector<32x256xf32>
    %c8 = arith.constant 8 : index
    %c0_118 = arith.constant 0 : index
    %150 = vector.load %arg2[%c8, %c0_118] : memref<9x256xf32, #tpu.memory_space<vmem>>, vector<1x256xf32>
    %151 = vector.broadcast %150 : vector<1x256xf32> to vector<32x256xf32>
    %152 = arith.mulf %149, %151 : vector<32x256xf32>
    %153 = arith.truncf %152 : vector<32x256xf32> to vector<32x256xbf16>
    %c8_119 = arith.constant 8 : index
    %c0_120 = arith.constant 0 : index
    %c0_121 = arith.constant 0 : index
    %154 = vector.load %arg13[%c8_119, %c0_120, %c0_121] : memref<9x32x32xbf16, #tpu.memory_space<vmem>>, vector<1x32x32xbf16>
    %155 = vector.shape_cast %154 : vector<1x32x32xbf16> to vector<32x32xbf16>
    %cst_122 = arith.constant dense<0.000000e+00> : vector<32x256xf32>
    %156 = tpu.matmul %155, %153, %cst_122 {dimension_numbers = #tpu.dot_dimension_numbers<[1], [0], [0], [1], [0, 0, 1, 1], [], []>} : vector<32x32xbf16>, vector<32x256xbf16>, vector<32x256xf32> -> vector<32x256xf32>
    %157 = arith.addf %144, %156 : vector<32x256xf32>
    %c0_123 = arith.constant 0 : index
    %c0_124 = arith.constant 0 : index
    %158 = vector.load %arg14[%c0_123, %c0_124] : memref<32x1xf32, #tpu.memory_space<vmem>>, vector<32x1xf32>
    %159 = vector.broadcast %158 : vector<32x1xf32> to vector<32x256xf32>
    %160 = arith.addf %157, %159 : vector<32x256xf32>
    %cst_125 = arith.constant 0.000000e+00 : f32
    %161 = vector.broadcast %cst_125 : f32 to vector<32x256xf32>
    %162 = arith.maximumf %160, %161 : vector<32x256xf32>
    %c0_126 = arith.constant 0 : index
    %c0_127 = arith.constant 0 : index
    %163 = vector.load %arg15[%c0_126, %c0_127] : memref<32x32xbf16, #tpu.memory_space<vmem>>, vector<32x32xbf16>
    %164 = arith.truncf %162 : vector<32x256xf32> to vector<32x256xbf16>
    %cst_128 = arith.constant dense<0.000000e+00> : vector<32x256xf32>
    %165 = tpu.matmul %163, %164, %cst_128 {dimension_numbers = #tpu.dot_dimension_numbers<[1], [0], [0], [1], [0, 0, 1, 1], [], []>} : vector<32x32xbf16>, vector<32x256xbf16>, vector<32x256xf32> -> vector<32x256xf32>
    %c0_129 = arith.constant 0 : index
    %c0_130 = arith.constant 0 : index
    %166 = vector.load %arg16[%c0_129, %c0_130] : memref<32x1xf32, #tpu.memory_space<vmem>>, vector<32x1xf32>
    %167 = vector.broadcast %166 : vector<32x1xf32> to vector<32x256xf32>
    %168 = arith.addf %165, %167 : vector<32x256xf32>
    %c1_131 = arith.constant 1 : index
    %169 = memref.load %arg1[%c1_131] : memref<2xf32, #tpu.memory_space<smem>>
    %c0_132 = arith.constant 0 : index
    %c0_133 = arith.constant 0 : index
    %170 = vector.load %arg11[%c0_132, %c0_133] : memref<32x32xbf16, #tpu.memory_space<vmem>>, vector<32x32xbf16>
    %171 = arith.truncf %3 : vector<32x256xf32> to vector<32x256xbf16>
    %cst_134 = arith.constant dense<0.000000e+00> : vector<32x256xf32>
    %172 = tpu.matmul %170, %171, %cst_134 {dimension_numbers = #tpu.dot_dimension_numbers<[1], [0], [0], [1], [0, 0, 1, 1], [], []>} : vector<32x32xbf16>, vector<32x256xbf16>, vector<32x256xf32> -> vector<32x256xf32>
    %c0_135 = arith.constant 0 : index
    %c0_136 = arith.constant 0 : index
    %173 = vector.load %arg12[%c0_135, %c0_136] : memref<32x1xf32, #tpu.memory_space<vmem>>, vector<32x1xf32>
    %174 = vector.broadcast %173 : vector<32x1xf32> to vector<32x256xf32>
    %175 = arith.addf %172, %174 : vector<32x256xf32>
    %176 = arith.truncf %175 : vector<32x256xf32> to vector<32x256xbf16>
    %cst_137 = arith.constant dense<0.000000e+00> : vector<32x256xf32>
    %177 = tpu.matmul %176, %32, %cst_137 {dimension_numbers = #tpu.dot_dimension_numbers<[1], [0], [0], [1], [0, 0, 1, 1], [], []>} : vector<32x256xbf16>, vector<256x256xbf16>, vector<32x256xf32> -> vector<32x256xf32>
    %178 = vector.broadcast %169 : f32 to vector<32x256xf32>
    %179 = arith.mulf %178, %177 : vector<32x256xf32>
    %180 = arith.addf %179, %3 : vector<32x256xf32>
    %181 = vector.extract_strided_slice %180 {offsets = [0, 0], sizes = [32, 239], strides = [1, 1]} : vector<32x256xf32> to vector<32x239xf32>
    %c0_138 = arith.constant 0 : index
    %c17_139 = arith.constant 17 : index
    %182 = vector.load %arg24[%c0_138, %c17_139] : memref<32x256xf32, #tpu.memory_space<vmem>>, vector<32x239xf32>
    tpu.vector_store %arg24[%c0_138, %c17_139], %181 {strides = array<i32>} : memref<32x256xf32, #tpu.memory_space<vmem>>, vector<32x239xf32>,
    %cst_140 = arith.constant 0.000000e+00 : f32
    %183 = vector.broadcast %cst_140 : f32 to vector<32x17xf32>
    %c0_141 = arith.constant 0 : index
    %c0_142 = arith.constant 0 : index
    %184 = vector.load %arg24[%c0_141, %c0_142] : memref<32x256xf32, #tpu.memory_space<vmem>>, vector<32x17xf32>
    tpu.vector_store %arg24[%c0_141, %c0_142], %183 {strides = array<i32>} : memref<32x256xf32, #tpu.memory_space<vmem>>, vector<32x17xf32>,
    %c0_143 = arith.constant 0 : index
    %c0_144 = arith.constant 0 : index
    %185 = vector.load %arg24[%c0_143, %c0_144] : memref<32x256xf32, #tpu.memory_space<vmem>>, vector<32x256xf32>
    %c0_145 = arith.constant 0 : index
    %c0_146 = arith.constant 0 : index
    %186 = vector.load %arg2[%c0_145, %c0_146] : memref<9x256xf32, #tpu.memory_space<vmem>>, vector<1x256xf32>
    %187 = vector.broadcast %186 : vector<1x256xf32> to vector<32x256xf32>
    %188 = arith.mulf %185, %187 : vector<32x256xf32>
    %189 = arith.truncf %188 : vector<32x256xf32> to vector<32x256xbf16>
    %c0_147 = arith.constant 0 : index
    %c0_148 = arith.constant 0 : index
    %c0_149 = arith.constant 0 : index
    %190 = vector.load %arg17[%c0_147, %c0_148, %c0_149] : memref<9x32x32xbf16, #tpu.memory_space<vmem>>, vector<1x32x32xbf16>
    %191 = vector.shape_cast %190 : vector<1x32x32xbf16> to vector<32x32xbf16>
    %cst_150 = arith.constant dense<0.000000e+00> : vector<32x256xf32>
    %192 = tpu.matmul %191, %189, %cst_150 {dimension_numbers = #tpu.dot_dimension_numbers<[1], [0], [0], [1], [0, 0, 1, 1], [], []>} : vector<32x32xbf16>, vector<32x256xbf16>, vector<32x256xf32> -> vector<32x256xf32>
    %193 = vector.extract_strided_slice %180 {offsets = [0, 0], sizes = [32, 240], strides = [1, 1]} : vector<32x256xf32> to vector<32x240xf32>
    %c0_151 = arith.constant 0 : index
    %c16_152 = arith.constant 16 : index
    %194 = vector.load %arg24[%c0_151, %c16_152] : memref<32x256xf32, #tpu.memory_space<vmem>>, vector<32x240xf32>
    tpu.vector_store %arg24[%c0_151, %c16_152], %193 {strides = array<i32>} : memref<32x256xf32, #tpu.memory_space<vmem>>, vector<32x240xf32>,
    %cst_153 = arith.constant 0.000000e+00 : f32
    %195 = vector.broadcast %cst_153 : f32 to vector<32x16xf32>
    %c0_154 = arith.constant 0 : index
    %c0_155 = arith.constant 0 : index
    %196 = vector.load %arg24[%c0_154, %c0_155] : memref<32x256xf32, #tpu.memory_space<vmem>>, vector<32x16xf32>
    tpu.vector_store %arg24[%c0_154, %c0_155], %195 {strides = array<i32>} : memref<32x256xf32, #tpu.memory_space<vmem>>, vector<32x16xf32>,
    %c0_156 = arith.constant 0 : index
    %c0_157 = arith.constant 0 : index
    %197 = vector.load %arg24[%c0_156, %c0_157] : memref<32x256xf32, #tpu.memory_space<vmem>>, vector<32x256xf32>
    %c1_158 = arith.constant 1 : index
    %c0_159 = arith.constant 0 : index
    %198 = vector.load %arg2[%c1_158, %c0_159] : memref<9x256xf32, #tpu.memory_space<vmem>>, vector<1x256xf32>
    %199 = vector.broadcast %198 : vector<1x256xf32> to vector<32x256xf32>
    %200 = arith.mulf %197, %199 : vector<32x256xf32>
    %201 = arith.truncf %200 : vector<32x256xf32> to vector<32x256xbf16>
    %c1_160 = arith.constant 1 : index
    %c0_161 = arith.constant 0 : index
    %c0_162 = arith.constant 0 : index
    %202 = vector.load %arg17[%c1_160, %c0_161, %c0_162] : memref<9x32x32xbf16, #tpu.memory_space<vmem>>, vector<1x32x32xbf16>
    %203 = vector.shape_cast %202 : vector<1x32x32xbf16> to vector<32x32xbf16>
    %cst_163 = arith.constant dense<0.000000e+00> : vector<32x256xf32>
    %204 = tpu.matmul %203, %201, %cst_163 {dimension_numbers = #tpu.dot_dimension_numbers<[1], [0], [0], [1], [0, 0, 1, 1], [], []>} : vector<32x32xbf16>, vector<32x256xbf16>, vector<32x256xf32> -> vector<32x256xf32>
    %205 = arith.addf %192, %204 : vector<32x256xf32>
    %206 = vector.extract_strided_slice %180 {offsets = [0, 0], sizes = [32, 241], strides = [1, 1]} : vector<32x256xf32> to vector<32x241xf32>
    %c0_164 = arith.constant 0 : index
    %c15_165 = arith.constant 15 : index
    %207 = vector.load %arg24[%c0_164, %c15_165] : memref<32x256xf32, #tpu.memory_space<vmem>>, vector<32x241xf32>
    tpu.vector_store %arg24[%c0_164, %c15_165], %206 {strides = array<i32>} : memref<32x256xf32, #tpu.memory_space<vmem>>, vector<32x241xf32>,
    %cst_166 = arith.constant 0.000000e+00 : f32
    %208 = vector.broadcast %cst_166 : f32 to vector<32x15xf32>
    %c0_167 = arith.constant 0 : index
    %c0_168 = arith.constant 0 : index
    %209 = vector.load %arg24[%c0_167, %c0_168] : memref<32x256xf32, #tpu.memory_space<vmem>>, vector<32x15xf32>
    tpu.vector_store %arg24[%c0_167, %c0_168], %208 {strides = array<i32>} : memref<32x256xf32, #tpu.memory_space<vmem>>, vector<32x15xf32>,
    %c0_169 = arith.constant 0 : index
    %c0_170 = arith.constant 0 : index
    %210 = vector.load %arg24[%c0_169, %c0_170] : memref<32x256xf32, #tpu.memory_space<vmem>>, vector<32x256xf32>
    %c2_171 = arith.constant 2 : index
    %c0_172 = arith.constant 0 : index
    %211 = vector.load %arg2[%c2_171, %c0_172] : memref<9x256xf32, #tpu.memory_space<vmem>>, vector<1x256xf32>
    %212 = vector.broadcast %211 : vector<1x256xf32> to vector<32x256xf32>
    %213 = arith.mulf %210, %212 : vector<32x256xf32>
    %214 = arith.truncf %213 : vector<32x256xf32> to vector<32x256xbf16>
    %c2_173 = arith.constant 2 : index
    %c0_174 = arith.constant 0 : index
    %c0_175 = arith.constant 0 : index
    %215 = vector.load %arg17[%c2_173, %c0_174, %c0_175] : memref<9x32x32xbf16, #tpu.memory_space<vmem>>, vector<1x32x32xbf16>
    %216 = vector.shape_cast %215 : vector<1x32x32xbf16> to vector<32x32xbf16>
    %cst_176 = arith.constant dense<0.000000e+00> : vector<32x256xf32>
    %217 = tpu.matmul %216, %214, %cst_176 {dimension_numbers = #tpu.dot_dimension_numbers<[1], [0], [0], [1], [0, 0, 1, 1], [], []>} : vector<32x32xbf16>, vector<32x256xbf16>, vector<32x256xf32> -> vector<32x256xf32>
    %218 = arith.addf %205, %217 : vector<32x256xf32>
    %219 = vector.extract_strided_slice %180 {offsets = [0, 0], sizes = [32, 255], strides = [1, 1]} : vector<32x256xf32> to vector<32x255xf32>
    %c0_177 = arith.constant 0 : index
    %c1_178 = arith.constant 1 : index
    %220 = vector.load %arg24[%c0_177, %c1_178] : memref<32x256xf32, #tpu.memory_space<vmem>>, vector<32x255xf32>
    tpu.vector_store %arg24[%c0_177, %c1_178], %219 {strides = array<i32>} : memref<32x256xf32, #tpu.memory_space<vmem>>, vector<32x255xf32>,
    %cst_179 = arith.constant 0.000000e+00 : f32
    %221 = vector.broadcast %cst_179 : f32 to vector<32x1xf32>
    %c0_180 = arith.constant 0 : index
    %c0_181 = arith.constant 0 : index
    %222 = vector.load %arg24[%c0_180, %c0_181] : memref<32x256xf32, #tpu.memory_space<vmem>>, vector<32x1xf32>
    tpu.vector_store %arg24[%c0_180, %c0_181], %221 {strides = array<i32>} : memref<32x256xf32, #tpu.memory_space<vmem>>, vector<32x1xf32>,
    %c0_182 = arith.constant 0 : index
    %c0_183 = arith.constant 0 : index
    %223 = vector.load %arg24[%c0_182, %c0_183] : memref<32x256xf32, #tpu.memory_space<vmem>>, vector<32x256xf32>
    %c3_184 = arith.constant 3 : index
    %c0_185 = arith.constant 0 : index
    %224 = vector.load %arg2[%c3_184, %c0_185] : memref<9x256xf32, #tpu.memory_space<vmem>>, vector<1x256xf32>
    %225 = vector.broadcast %224 : vector<1x256xf32> to vector<32x256xf32>
    %226 = arith.mulf %223, %225 : vector<32x256xf32>
    %227 = arith.truncf %226 : vector<32x256xf32> to vector<32x256xbf16>
    %c3_186 = arith.constant 3 : index
    %c0_187 = arith.constant 0 : index
    %c0_188 = arith.constant 0 : index
    %228 = vector.load %arg17[%c3_186, %c0_187, %c0_188] : memref<9x32x32xbf16, #tpu.memory_space<vmem>>, vector<1x32x32xbf16>
    %229 = vector.shape_cast %228 : vector<1x32x32xbf16> to vector<32x32xbf16>
    %cst_189 = arith.constant dense<0.000000e+00> : vector<32x256xf32>
    %230 = tpu.matmul %229, %227, %cst_189 {dimension_numbers = #tpu.dot_dimension_numbers<[1], [0], [0], [1], [0, 0, 1, 1], [], []>} : vector<32x32xbf16>, vector<32x256xbf16>, vector<32x256xf32> -> vector<32x256xf32>
    %231 = arith.addf %218, %230 : vector<32x256xf32>
    %c0_190 = arith.constant 0 : index
    %c0_191 = arith.constant 0 : index
    %232 = vector.load %arg24[%c0_190, %c0_191] : memref<32x256xf32, #tpu.memory_space<vmem>>, vector<32x256xf32>
    tpu.vector_store %arg24[%c0_190, %c0_191], %180 {strides = array<i32>} : memref<32x256xf32, #tpu.memory_space<vmem>>, vector<32x256xf32>,
    %c0_192 = arith.constant 0 : index
    %c0_193 = arith.constant 0 : index
    %233 = vector.load %arg24[%c0_192, %c0_193] : memref<32x256xf32, #tpu.memory_space<vmem>>, vector<32x256xf32>
    %c4_194 = arith.constant 4 : index
    %c0_195 = arith.constant 0 : index
    %234 = vector.load %arg2[%c4_194, %c0_195] : memref<9x256xf32, #tpu.memory_space<vmem>>, vector<1x256xf32>
    %235 = vector.broadcast %234 : vector<1x256xf32> to vector<32x256xf32>
    %236 = arith.mulf %233, %235 : vector<32x256xf32>
    %237 = arith.truncf %236 : vector<32x256xf32> to vector<32x256xbf16>
    %c4_196 = arith.constant 4 : index
    %c0_197 = arith.constant 0 : index
    %c0_198 = arith.constant 0 : index
    %238 = vector.load %arg17[%c4_196, %c0_197, %c0_198] : memref<9x32x32xbf16, #tpu.memory_space<vmem>>, vector<1x32x32xbf16>
    %239 = vector.shape_cast %238 : vector<1x32x32xbf16> to vector<32x32xbf16>
    %cst_199 = arith.constant dense<0.000000e+00> : vector<32x256xf32>
    %240 = tpu.matmul %239, %237, %cst_199 {dimension_numbers = #tpu.dot_dimension_numbers<[1], [0], [0], [1], [0, 0, 1, 1], [], []>} : vector<32x32xbf16>, vector<32x256xbf16>, vector<32x256xf32> -> vector<32x256xf32>
    %241 = arith.addf %231, %240 : vector<32x256xf32>
    %242 = vector.extract_strided_slice %180 {offsets = [0, 1], sizes = [32, 255], strides = [1, 1]} : vector<32x256xf32> to vector<32x255xf32>
    %c0_200 = arith.constant 0 : index
    %c0_201 = arith.constant 0 : index
    %243 = vector.load %arg24[%c0_200, %c0_201] : memref<32x256xf32, #tpu.memory_space<vmem>>, vector<32x255xf32>
    tpu.vector_store %arg24[%c0_200, %c0_201], %242 {strides = array<i32>} : memref<32x256xf32, #tpu.memory_space<vmem>>, vector<32x255xf32>,
    %cst_202 = arith.constant 0.000000e+00 : f32
    %244 = vector.broadcast %cst_202 : f32 to vector<32x1xf32>
    %c0_203 = arith.constant 0 : index
    %c255_204 = arith.constant 255 : index
    %245 = vector.load %arg24[%c0_203, %c255_204] : memref<32x256xf32, #tpu.memory_space<vmem>>, vector<32x1xf32>
    tpu.vector_store %arg24[%c0_203, %c255_204], %244 {strides = array<i32>} : memref<32x256xf32, #tpu.memory_space<vmem>>, vector<32x1xf32>,
    %c0_205 = arith.constant 0 : index
    %c0_206 = arith.constant 0 : index
    %246 = vector.load %arg24[%c0_205, %c0_206] : memref<32x256xf32, #tpu.memory_space<vmem>>, vector<32x256xf32>
    %c5_207 = arith.constant 5 : index
    %c0_208 = arith.constant 0 : index
    %247 = vector.load %arg2[%c5_207, %c0_208] : memref<9x256xf32, #tpu.memory_space<vmem>>, vector<1x256xf32>
    %248 = vector.broadcast %247 : vector<1x256xf32> to vector<32x256xf32>
    %249 = arith.mulf %246, %248 : vector<32x256xf32>
    %250 = arith.truncf %249 : vector<32x256xf32> to vector<32x256xbf16>
    %c5_209 = arith.constant 5 : index
    %c0_210 = arith.constant 0 : index
    %c0_211 = arith.constant 0 : index
    %251 = vector.load %arg17[%c5_209, %c0_210, %c0_211] : memref<9x32x32xbf16, #tpu.memory_space<vmem>>, vector<1x32x32xbf16>
    %252 = vector.shape_cast %251 : vector<1x32x32xbf16> to vector<32x32xbf16>
    %cst_212 = arith.constant dense<0.000000e+00> : vector<32x256xf32>
    %253 = tpu.matmul %252, %250, %cst_212 {dimension_numbers = #tpu.dot_dimension_numbers<[1], [0], [0], [1], [0, 0, 1, 1], [], []>} : vector<32x32xbf16>, vector<32x256xbf16>, vector<32x256xf32> -> vector<32x256xf32>
    %254 = arith.addf %241, %253 : vector<32x256xf32>
    %255 = vector.extract_strided_slice %180 {offsets = [0, 15], sizes = [32, 241], strides = [1, 1]} : vector<32x256xf32> to vector<32x241xf32>
    %c0_213 = arith.constant 0 : index
    %c0_214 = arith.constant 0 : index
    %256 = vector.load %arg24[%c0_213, %c0_214] : memref<32x256xf32, #tpu.memory_space<vmem>>, vector<32x241xf32>
    tpu.vector_store %arg24[%c0_213, %c0_214], %255 {strides = array<i32>} : memref<32x256xf32, #tpu.memory_space<vmem>>, vector<32x241xf32>,
    %cst_215 = arith.constant 0.000000e+00 : f32
    %257 = vector.broadcast %cst_215 : f32 to vector<32x15xf32>
    %c0_216 = arith.constant 0 : index
    %c241_217 = arith.constant 241 : index
    %258 = vector.load %arg24[%c0_216, %c241_217] : memref<32x256xf32, #tpu.memory_space<vmem>>, vector<32x15xf32>
    tpu.vector_store %arg24[%c0_216, %c241_217], %257 {strides = array<i32>} : memref<32x256xf32, #tpu.memory_space<vmem>>, vector<32x15xf32>,
    %c0_218 = arith.constant 0 : index
    %c0_219 = arith.constant 0 : index
    %259 = vector.load %arg24[%c0_218, %c0_219] : memref<32x256xf32, #tpu.memory_space<vmem>>, vector<32x256xf32>
    %c6_220 = arith.constant 6 : index
    %c0_221 = arith.constant 0 : index
    %260 = vector.load %arg2[%c6_220, %c0_221] : memref<9x256xf32, #tpu.memory_space<vmem>>, vector<1x256xf32>
    %261 = vector.broadcast %260 : vector<1x256xf32> to vector<32x256xf32>
    %262 = arith.mulf %259, %261 : vector<32x256xf32>
    %263 = arith.truncf %262 : vector<32x256xf32> to vector<32x256xbf16>
    %c6_222 = arith.constant 6 : index
    %c0_223 = arith.constant 0 : index
    %c0_224 = arith.constant 0 : index
    %264 = vector.load %arg17[%c6_222, %c0_223, %c0_224] : memref<9x32x32xbf16, #tpu.memory_space<vmem>>, vector<1x32x32xbf16>
    %265 = vector.shape_cast %264 : vector<1x32x32xbf16> to vector<32x32xbf16>
    %cst_225 = arith.constant dense<0.000000e+00> : vector<32x256xf32>
    %266 = tpu.matmul %265, %263, %cst_225 {dimension_numbers = #tpu.dot_dimension_numbers<[1], [0], [0], [1], [0, 0, 1, 1], [], []>} : vector<32x32xbf16>, vector<32x256xbf16>, vector<32x256xf32> -> vector<32x256xf32>
    %267 = arith.addf %254, %266 : vector<32x256xf32>
    %268 = vector.extract_strided_slice %180 {offsets = [0, 16], sizes = [32, 240], strides = [1, 1]} : vector<32x256xf32> to vector<32x240xf32>
    %c0_226 = arith.constant 0 : index
    %c0_227 = arith.constant 0 : index
    %269 = vector.load %arg24[%c0_226, %c0_227] : memref<32x256xf32, #tpu.memory_space<vmem>>, vector<32x240xf32>
    tpu.vector_store %arg24[%c0_226, %c0_227], %268 {strides = array<i32>} : memref<32x256xf32, #tpu.memory_space<vmem>>, vector<32x240xf32>,
    %cst_228 = arith.constant 0.000000e+00 : f32
    %270 = vector.broadcast %cst_228 : f32 to vector<32x16xf32>
    %c0_229 = arith.constant 0 : index
    %c240_230 = arith.constant 240 : index
    %271 = vector.load %arg24[%c0_229, %c240_230] : memref<32x256xf32, #tpu.memory_space<vmem>>, vector<32x16xf32>
    tpu.vector_store %arg24[%c0_229, %c240_230], %270 {strides = array<i32>} : memref<32x256xf32, #tpu.memory_space<vmem>>, vector<32x16xf32>,
    %c0_231 = arith.constant 0 : index
    %c0_232 = arith.constant 0 : index
    %272 = vector.load %arg24[%c0_231, %c0_232] : memref<32x256xf32, #tpu.memory_space<vmem>>, vector<32x256xf32>
    %c7_233 = arith.constant 7 : index
    %c0_234 = arith.constant 0 : index
    %273 = vector.load %arg2[%c7_233, %c0_234] : memref<9x256xf32, #tpu.memory_space<vmem>>, vector<1x256xf32>
    %274 = vector.broadcast %273 : vector<1x256xf32> to vector<32x256xf32>
    %275 = arith.mulf %272, %274 : vector<32x256xf32>
    %276 = arith.truncf %275 : vector<32x256xf32> to vector<32x256xbf16>
    %c7_235 = arith.constant 7 : index
    %c0_236 = arith.constant 0 : index
    %c0_237 = arith.constant 0 : index
    %277 = vector.load %arg17[%c7_235, %c0_236, %c0_237] : memref<9x32x32xbf16, #tpu.memory_space<vmem>>, vector<1x32x32xbf16>
    %278 = vector.shape_cast %277 : vector<1x32x32xbf16> to vector<32x32xbf16>
    %cst_238 = arith.constant dense<0.000000e+00> : vector<32x256xf32>
    %279 = tpu.matmul %278, %276, %cst_238 {dimension_numbers = #tpu.dot_dimension_numbers<[1], [0], [0], [1], [0, 0, 1, 1], [], []>} : vector<32x32xbf16>, vector<32x256xbf16>, vector<32x256xf32> -> vector<32x256xf32>
    %280 = arith.addf %267, %279 : vector<32x256xf32>
    %281 = vector.extract_strided_slice %180 {offsets = [0, 17], sizes = [32, 239], strides = [1, 1]} : vector<32x256xf32> to vector<32x239xf32>
    %c0_239 = arith.constant 0 : index
    %c0_240 = arith.constant 0 : index
    %282 = vector.load %arg24[%c0_239, %c0_240] : memref<32x256xf32, #tpu.memory_space<vmem>>, vector<32x239xf32>
    tpu.vector_store %arg24[%c0_239, %c0_240], %281 {strides = array<i32>} : memref<32x256xf32, #tpu.memory_space<vmem>>, vector<32x239xf32>,
    %cst_241 = arith.constant 0.000000e+00 : f32
    %283 = vector.broadcast %cst_241 : f32 to vector<32x17xf32>
    %c0_242 = arith.constant 0 : index
    %c239_243 = arith.constant 239 : index
    %284 = vector.load %arg24[%c0_242, %c239_243] : memref<32x256xf32, #tpu.memory_space<vmem>>, vector<32x17xf32>
    tpu.vector_store %arg24[%c0_242, %c239_243], %283 {strides = array<i32>} : memref<32x256xf32, #tpu.memory_space<vmem>>, vector<32x17xf32>,
    %c0_244 = arith.constant 0 : index
    %c0_245 = arith.constant 0 : index
    %285 = vector.load %arg24[%c0_244, %c0_245] : memref<32x256xf32, #tpu.memory_space<vmem>>, vector<32x256xf32>
    %c8_246 = arith.constant 8 : index
    %c0_247 = arith.constant 0 : index
    %286 = vector.load %arg2[%c8_246, %c0_247] : memref<9x256xf32, #tpu.memory_space<vmem>>, vector<1x256xf32>
    %287 = vector.broadcast %286 : vector<1x256xf32> to vector<32x256xf32>
    %288 = arith.mulf %285, %287 : vector<32x256xf32>
    %289 = arith.truncf %288 : vector<32x256xf32> to vector<32x256xbf16>
    %c8_248 = arith.constant 8 : index
    %c0_249 = arith.constant 0 : index
    %c0_250 = arith.constant 0 : index
    %290 = vector.load %arg17[%c8_248, %c0_249, %c0_250] : memref<9x32x32xbf16, #tpu.memory_space<vmem>>, vector<1x32x32xbf16>
    %291 = vector.shape_cast %290 : vector<1x32x32xbf16> to vector<32x32xbf16>
    %cst_251 = arith.constant dense<0.000000e+00> : vector<32x256xf32>
    %292 = tpu.matmul %291, %289, %cst_251 {dimension_numbers = #tpu.dot_dimension_numbers<[1], [0], [0], [1], [0, 0, 1, 1], [], []>} : vector<32x32xbf16>, vector<32x256xbf16>, vector<32x256xf32> -> vector<32x256xf32>
    %293 = arith.addf %280, %292 : vector<32x256xf32>
    %c0_252 = arith.constant 0 : index
    %c0_253 = arith.constant 0 : index
    %294 = vector.load %arg18[%c0_252, %c0_253] : memref<32x1xf32, #tpu.memory_space<vmem>>, vector<32x1xf32>
    %295 = vector.broadcast %294 : vector<32x1xf32> to vector<32x256xf32>
    %296 = arith.addf %293, %295 : vector<32x256xf32>
    %cst_254 = arith.constant 0.000000e+00 : f32
    %297 = vector.broadcast %cst_254 : f32 to vector<32x256xf32>
    %298 = arith.maximumf %296, %297 : vector<32x256xf32>
    %c0_255 = arith.constant 0 : index
    %c0_256 = arith.constant 0 : index
    %299 = vector.load %arg19[%c0_255, %c0_256] : memref<32x32xbf16, #tpu.memory_space<vmem>>, vector<32x32xbf16>
    %300 = arith.truncf %298 : vector<32x256xf32> to vector<32x256xbf16>
    %cst_257 = arith.constant dense<0.000000e+00> : vector<32x256xf32>
    %301 = tpu.matmul %299, %300, %cst_257 {dimension_numbers = #tpu.dot_dimension_numbers<[1], [0], [0], [1], [0, 0, 1, 1], [], []>} : vector<32x32xbf16>, vector<32x256xbf16>, vector<32x256xf32> -> vector<32x256xf32>
    %c0_258 = arith.constant 0 : index
    %c0_259 = arith.constant 0 : index
    %302 = vector.load %arg20[%c0_258, %c0_259] : memref<32x1xf32, #tpu.memory_space<vmem>>, vector<32x1xf32>
    %303 = vector.broadcast %302 : vector<32x1xf32> to vector<32x256xf32>
    %304 = arith.addf %301, %303 : vector<32x256xf32>
    %c0_260 = arith.constant 0 : index
    %c0_261 = arith.constant 0 : index
    %305 = vector.load %arg21[%c0_260, %c0_261] : memref<32x32xbf16, #tpu.memory_space<vmem>>, vector<32x32xbf16>
    %306 = arith.addf %168, %304 : vector<32x256xf32>
    %307 = arith.truncf %306 : vector<32x256xf32> to vector<32x256xbf16>
    %cst_262 = arith.constant dense<0.000000e+00> : vector<32x256xf32>
    %308 = tpu.matmul %305, %307, %cst_262 {dimension_numbers = #tpu.dot_dimension_numbers<[1], [0], [0], [1], [0, 0, 1, 1], [], []>} : vector<32x32xbf16>, vector<32x256xbf16>, vector<32x256xf32> -> vector<32x256xf32>
    %c0_263 = arith.constant 0 : index
    %c0_264 = arith.constant 0 : index
    %309 = vector.load %arg22[%c0_263, %c0_264] : memref<32x1xf32, #tpu.memory_space<vmem>>, vector<32x1xf32>
    %310 = vector.broadcast %309 : vector<32x1xf32> to vector<32x256xf32>
    %311 = arith.addf %308, %310 : vector<32x256xf32>
    %c0_265 = arith.constant 0 : index
    %c0_266 = arith.constant 0 : index
    %c0_267 = arith.constant 0 : index
    %312 = vector.load %arg23[%c0_265, %c0_266, %c0_267] : memref<1x32x256xf32, #tpu.memory_space<vmem>>, vector<1x32x256xf32>
    %313 = vector.shape_cast %312 : vector<1x32x256xf32> to vector<32x256xf32>
    %314 = vector.shape_cast %311 : vector<32x256xf32> to vector<1x32x256xf32>
    tpu.vector_store %arg23[%c0_265, %c0_266, %c0_267], %314 {strides = array<i32>} : memref<1x32x256xf32, #tpu.memory_space<vmem>>, vector<1x32x256xf32>,
    return
  }
  func.func @transform_0(%arg0: i32) -> i32 {
    %c0_i32 = arith.constant 0 : i32
    %c0_i32_0 = arith.constant 0 : i32
    return %c0_i32 : i32
  }
  func.func @transform_1(%arg0: i32) -> (i32, i32) {
    %c0_i32 = arith.constant 0 : i32
    %c0_i32_0 = arith.constant 0 : i32
    %c0_i32_1 = arith.constant 0 : i32
    return %c0_i32, %c0_i32_0 : i32, i32
  }
  func.func @transform_2(%arg0: i32) -> (i32, i32, i32) {
    %c0_i32 = arith.constant 0 : i32
    %c0_i32_0 = arith.constant 0 : i32
    %c0_i32_1 = arith.constant 0 : i32
    return %arg0, %c0_i32, %c0_i32_0 : i32, i32, i32
  }
  func.func @transform_3(%arg0: i32) -> (i32, i32, i32) {
    %c0_i32 = arith.constant 0 : i32
    %c0_i32_0 = arith.constant 0 : i32
    %c0_i32_1 = arith.constant 0 : i32
    return %arg0, %c0_i32, %c0_i32_0 : i32, i32, i32
  }
  func.func @transform_4(%arg0: i32) -> (i32, i32) {
    %c0_i32 = arith.constant 0 : i32
    %c0_i32_0 = arith.constant 0 : i32
    %c0_i32_1 = arith.constant 0 : i32
    return %c0_i32, %c0_i32_0 : i32, i32
  }
  func.func @transform_5(%arg0: i32) -> (i32, i32) {
    %c0_i32 = arith.constant 0 : i32
    %c0_i32_0 = arith.constant 0 : i32
    %c0_i32_1 = arith.constant 0 : i32
    return %c0_i32, %c0_i32_0 : i32, i32
  }
  func.func @transform_6(%arg0: i32) -> (i32, i32) {
    %c0_i32 = arith.constant 0 : i32
    %c0_i32_0 = arith.constant 0 : i32
    %c0_i32_1 = arith.constant 0 : i32
    return %c0_i32, %c0_i32_0 : i32, i32
  }
  func.func @transform_7(%arg0: i32) -> (i32, i32) {
    %c0_i32 = arith.constant 0 : i32
    %c0_i32_0 = arith.constant 0 : i32
    %c0_i32_1 = arith.constant 0 : i32
    return %c0_i32, %c0_i32_0 : i32, i32
  }
  func.func @transform_8(%arg0: i32) -> (i32, i32) {
    %c0_i32 = arith.constant 0 : i32
    %c0_i32_0 = arith.constant 0 : i32
    %c0_i32_1 = arith.constant 0 : i32
    return %c0_i32, %c0_i32_0 : i32, i32
  }
  func.func @transform_9(%arg0: i32) -> (i32, i32) {
    %c0_i32 = arith.constant 0 : i32
    %c0_i32_0 = arith.constant 0 : i32
    %c0_i32_1 = arith.constant 0 : i32
    return %c0_i32, %c0_i32_0 : i32, i32
  }
  func.func @transform_10(%arg0: i32) -> (i32, i32) {
    %c0_i32 = arith.constant 0 : i32
    %c0_i32_0 = arith.constant 0 : i32
    %c0_i32_1 = arith.constant 0 : i32
    return %c0_i32, %c0_i32_0 : i32, i32
  }
  func.func @transform_11(%arg0: i32) -> (i32, i32) {
    %c0_i32 = arith.constant 0 : i32
    %c0_i32_0 = arith.constant 0 : i32
    %c0_i32_1 = arith.constant 0 : i32
    return %c0_i32, %c0_i32_0 : i32, i32
  }
  func.func @transform_12(%arg0: i32) -> (i32, i32, i32) {
    %c0_i32 = arith.constant 0 : i32
    %c0_i32_0 = arith.constant 0 : i32
    %c0_i32_1 = arith.constant 0 : i32
    %c0_i32_2 = arith.constant 0 : i32
    return %c0_i32, %c0_i32_0, %c0_i32_1 : i32, i32, i32
  }
  func.func @transform_13(%arg0: i32) -> (i32, i32) {
    %c0_i32 = arith.constant 0 : i32
    %c0_i32_0 = arith.constant 0 : i32
    %c0_i32_1 = arith.constant 0 : i32
    return %c0_i32, %c0_i32_0 : i32, i32
  }
  func.func @transform_14(%arg0: i32) -> (i32, i32) {
    %c0_i32 = arith.constant 0 : i32
    %c0_i32_0 = arith.constant 0 : i32
    %c0_i32_1 = arith.constant 0 : i32
    return %c0_i32, %c0_i32_0 : i32, i32
  }
  func.func @transform_15(%arg0: i32) -> (i32, i32) {
    %c0_i32 = arith.constant 0 : i32
    %c0_i32_0 = arith.constant 0 : i32
    %c0_i32_1 = arith.constant 0 : i32
    return %c0_i32, %c0_i32_0 : i32, i32
  }
  func.func @transform_16(%arg0: i32) -> (i32, i32, i32) {
    %c0_i32 = arith.constant 0 : i32
    %c0_i32_0 = arith.constant 0 : i32
    %c0_i32_1 = arith.constant 0 : i32
    %c0_i32_2 = arith.constant 0 : i32
    return %c0_i32, %c0_i32_0, %c0_i32_1 : i32, i32, i32
  }
  func.func @transform_17(%arg0: i32) -> (i32, i32) {
    %c0_i32 = arith.constant 0 : i32
    %c0_i32_0 = arith.constant 0 : i32
    %c0_i32_1 = arith.constant 0 : i32
    return %c0_i32, %c0_i32_0 : i32, i32
  }
  func.func @transform_18(%arg0: i32) -> (i32, i32) {
    %c0_i32 = arith.constant 0 : i32
    %c0_i32_0 = arith.constant 0 : i32
    %c0_i32_1 = arith.constant 0 : i32
    return %c0_i32, %c0_i32_0 : i32, i32
  }
  func.func @transform_19(%arg0: i32) -> (i32, i32) {
    %c0_i32 = arith.constant 0 : i32
    %c0_i32_0 = arith.constant 0 : i32
    %c0_i32_1 = arith.constant 0 : i32
    return %c0_i32, %c0_i32_0 : i32, i32
  }
  func.func @transform_20(%arg0: i32) -> (i32, i32) {
    %c0_i32 = arith.constant 0 : i32
    %c0_i32_0 = arith.constant 0 : i32
    %c0_i32_1 = arith.constant 0 : i32
    return %c0_i32, %c0_i32_0 : i32, i32
  }
  func.func @transform_21(%arg0: i32) -> (i32, i32) {
    %c0_i32 = arith.constant 0 : i32
    %c0_i32_0 = arith.constant 0 : i32
    %c0_i32_1 = arith.constant 0 : i32
    return %c0_i32, %c0_i32_0 : i32, i32
  }
  func.func @transform_22(%arg0: i32) -> (i32, i32, i32) {
    %c0_i32 = arith.constant 0 : i32
    %c0_i32_0 = arith.constant 0 : i32
    %c0_i32_1 = arith.constant 0 : i32
    return %arg0, %c0_i32, %c0_i32_0 : i32, i32, i32
  }
}

</mosaic_0001>

<llo_original>
// kernel: ktm_forward.1
$region0: #{ktm_forward.1}
  #allocation0 [shape = 'u32[]', space=smem, size = 0x4, offset = 0x4, fixed_abs, tag = 'smem constant byte address 0x4 - core index']
  #allocation1 [shape = 'u32[144,128]{1,0:T(1,128)}', space=vmem, size = 0x12000, scoped, tag = 'internal scratch']
  #allocation2 [shape = 'f32[32,256]{1,0:T(8,128)}', space=vmem, size = 0x8000, scoped, tag = 'scratch operand']
  %s0 = inlined_call_operand.vmem [shape: f32[2], index: 0, kind: input, shape index: {}]
  %s1 = inlined_call_operand.vmem [shape: f32[9,256], index: 1, kind: input, shape index: {}]
  %s2 = inlined_call_operand.vmem [shape: f32[2,32,256], index: 2, kind: input, shape index: {}]
  %s3 = inlined_call_operand.vmem [shape: f32[2,32,256], index: 3, kind: input, shape index: {}]
  %s4 = inlined_call_operand.vmem [shape: bf16[16,32], index: 4, kind: input, shape index: {}]
  %s5 = inlined_call_operand.vmem [shape: f32[16,1], index: 5, kind: input, shape index: {}]
  %s6 = inlined_call_operand.vmem [shape: bf16[16,32], index: 6, kind: input, shape index: {}]
  %s7 = inlined_call_operand.vmem [shape: f32[16,1], index: 7, kind: input, shape index: {}]
  %s8 = inlined_call_operand.vmem [shape: bf16[32,32], index: 8, kind: input, shape index: {}]
  %s9 = inlined_call_operand.vmem [shape: f32[32,1], index: 9, kind: input, shape index: {}]
  %s10 = inlined_call_operand.vmem [shape: bf16[32,32], index: 10, kind: input, shape index: {}]
  %s11 = inlined_call_operand.vmem [shape: f32[32,1], index: 11, kind: input, shape index: {}]
  %s12 = inlined_call_operand.vmem [shape: bf16[9,32,32], index: 12, kind: input, shape index: {}]
  %s13 = inlined_call_operand.vmem [shape: f32[32,1], index: 13, kind: input, shape index: {}]
  %s14 = inlined_call_operand.vmem [shape: bf16[32,32], index: 14, kind: input, shape index: {}]
  %s15 = inlined_call_operand.vmem [shape: f32[32,1], index: 15, kind: input, shape index: {}]
  %s16 = inlined_call_operand.vmem [shape: bf16[9,32,32], index: 16, kind: input, shape index: {}]
  %s17 = inlined_call_operand.vmem [shape: f32[32,1], index: 17, kind: input, shape index: {}]
  %s18 = inlined_call_operand.vmem [shape: bf16[32,32], index: 18, kind: input, shape index: {}]
  %s19 = inlined_call_operand.vmem [shape: f32[32,1], index: 19, kind: input, shape index: {}]
  %s20 = inlined_call_operand.vmem [shape: bf16[32,32], index: 20, kind: input, shape index: {}]
  %s21 = inlined_call_operand.vmem [shape: f32[32,1], index: 21, kind: input, shape index: {}]
  %s22 = inlined_call_operand.vmem [shape: f32[2,32,256], index: 22, kind: output, shape index: {}]
  %s23 = sld [smem:[#allocation0]]
  $region125: #{ktm_forward.1} parent=0
    _
  %s25 = ssub.s32 1, %s23
  %s26 = scalar_select 0, %s25, %s23
  $region1: #{ktm_forward.1} parent=0
    #allocation3 [shape = 'u8[512]{0}', space=smem, size = 0x200, scoped, tag = 'input window, operand 0, single buffered']
    #allocation4 [shape = 's32[2]{0}', space=sflag, size = 0x8, scoped, tag = 'scoped memory for ktm_forward.1']
    %27 = vsyncpa [#allocation4], 0
    loop: start=0, step=1, limit=4
    $region2: #{ktm_forward.1} parent=1 // loop_pre_header
      _
    $region3: #{ktm_forward.1} parent=1 // loop_header
      %s29 = sphi 0, %s33
      %p30 = scmp.ge.s32.totalorder %s29, 4
      %s37 = sphi 0, %s37
      %s39 = sphi 0, %s37
      %s40 = sphi 0, %s39
      %s54 = sphi 0, %s40
      %s58 = sphi 0, %s58
      %s60 = sphi 0, %s58
      %s61 = sphi 0, %s60
      %s75 = sphi 0, %s61
      %s81 = sphi 0, %s83
      %s84 = sphi 0, %s81
      %s85 = sphi 0, %s84
      %s101 = sphi 0, %s85
      %s107 = sphi 0, %s109
      %s110 = sphi 0, %s107
      %s111 = sphi 0, %s110
      %s127 = sphi 0, %s111
      %s131 = sphi 0, %s131
      %s133 = sphi 0, %s131
      %s134 = sphi 0, %s133
      %s148 = sphi 0, %s134
      %s152 = sphi 0, %s152
      %s154 = sphi 0, %s152
      %s155 = sphi 0, %s154
      %s169 = sphi 0, %s155
      %s173 = sphi 0, %s173
      %s175 = sphi 0, %s173
      %s176 = sphi 0, %s175
      %s190 = sphi 0, %s176
      %s194 = sphi 0, %s194
      %s196 = sphi 0, %s194
      %s197 = sphi 0, %s196
      %s211 = sphi 0, %s197
      %s215 = sphi 0, %s215
      %s217 = sphi 0, %s215
      %s218 = sphi 0, %s217
      %s232 = sphi 0, %s218
      %s236 = sphi 0, %s236
      %s238 = sphi 0, %s236
      %s239 = sphi 0, %s238
      %s253 = sphi 0, %s239
      %s257 = sphi 0, %s257
      %s259 = sphi 0, %s257
      %s260 = sphi 0, %s259
      %s274 = sphi 0, %s260
      %s278 = sphi 0, %s278
      %s280 = sphi 0, %s278
      %s281 = sphi 0, %s280
      %s295 = sphi 0, %s281
      %s299 = sphi 0, %s299
      %s301 = sphi 0, %s299
      %s302 = sphi 0, %s301
      %s316 = sphi 0, %s302
      %s320 = sphi 0, %s320
      %s322 = sphi 0, %s320
      %s323 = sphi 0, %s322
      %s337 = sphi 0, %s323
      %s341 = sphi 0, %s341
      %s343 = sphi 0, %s341
      %s344 = sphi 0, %s343
      %s358 = sphi 0, %s344
      %s362 = sphi 0, %s362
      %s364 = sphi 0, %s362
      %s365 = sphi 0, %s364
      %s379 = sphi 0, %s365
      %s383 = sphi 0, %s383
      %s385 = sphi 0, %s383
      %s386 = sphi 0, %s385
      %s400 = sphi 0, %s386
      %s404 = sphi 0, %s404
      %s406 = sphi 0, %s404
      %s407 = sphi 0, %s406
      %s421 = sphi 0, %s407
      %s425 = sphi 0, %s425
      %s427 = sphi 0, %s425
      %s428 = sphi 0, %s427
      %s442 = sphi 0, %s428
      %s446 = sphi 0, %s446
      %s448 = sphi 0, %s446
      %s449 = sphi 0, %s448
      %s463 = sphi 0, %s449
      %s467 = sphi 0, %s467
      %s469 = sphi 0, %s467
      %s470 = sphi 0, %s469
      %s484 = sphi 0, %s470
      %s488 = sphi 0, %s488
      %s490 = sphi 0, %s488
      %s491 = sphi 0, %s490
      %s505 = sphi 0, %s491
      %s511 = sphi 0, %s513
      %s514 = sphi 0, %s511
      %s515 = sphi 0, %s514
      %s531 = sphi 0, %s515
    $region4: #{ktm_forward.1} parent=1 // loop_header_branch
      %32 = sbr.rel (%p30) target = $region8
    $region5: #{ktm_forward.1} parent=1 // loop_body
      %s34 = ssub.s32 %s29, 1
      %s35 = ssub.s32 %s29, 2
      %s36 = sadd.s32 %s29, 1
      %s38 = sadd.s32 %s37, 1
      %p41 = scmp.eq.s32.totalorder %s29, 1
      %p42 = scmp.ne.s32.totalorder %s37, %s39
      %p43 = scmp.eq.s32.totalorder %s29, 0
      %p44 = por %p42, %p43
      %p45 = scmp.ne.s32.totalorder %s37, %s39
      %p46 = scmp.eq.s32.totalorder %s34, 1
      %p47 = por %p45, %p46
      %p48 = scmp.ne.s32.totalorder %s39, %s40
      %p49 = scmp.eq.s32.totalorder %s34, 0
      %p50 = por %p48, %p49
      %p51 = scmp.ne.s32.totalorder %s39, %s40
      %p52 = scmp.eq.s32.totalorder %s35, 1
      %p53 = por %p51, %p52
      %p55 = scmp.ne.s32.totalorder %s40, %s54
      %p56 = scmp.eq.s32.totalorder %s35, 0
      %p57 = por %p55, %p56
      %s59 = sadd.s32 %s58, 1
      %p62 = scmp.eq.s32.totalorder %s29, 1
      %p63 = scmp.ne.s32.totalorder %s58, %s60
      %p64 = scmp.eq.s32.totalorder %s29, 0
      %p65 = por %p63, %p64
      %p66 = scmp.ne.s32.totalorder %s58, %s60
      %p67 = scmp.eq.s32.totalorder %s34, 1
      %p68 = por %p66, %p67
      %p69 = scmp.ne.s32.totalorder %s60, %s61
      %p70 = scmp.eq.s32.totalorder %s34, 0
      %p71 = por %p69, %p70
      %p72 = scmp.ne.s32.totalorder %s60, %s61
      %p73 = scmp.eq.s32.totalorder %s35, 1
      %p74 = por %p72, %p73
      %p76 = scmp.ne.s32.totalorder %s61, %s75
      %p77 = scmp.eq.s32.totalorder %s35, 0
      %p78 = por %p76, %p77
      %s79 = ssub.s32 %s29, %s36
      %p80 = scmp.eq.s32.totalorder %s79, 0
      %s82 = sadd.s32 %s81, 1
      %s83 = scalar_select %p80, %s81, %s82
      %p86 = pneg %p80
      %p87 = scmp.eq.s32.totalorder %s29, 1
      %p88 = por %p86, %p87
      %p89 = scmp.ne.s32.totalorder %s81, %s84
      %p90 = scmp.eq.s32.totalorder %s29, 0
      %p91 = por %p89, %p90
      %p92 = scmp.ne.s32.totalorder %s81, %s84
      %p93 = scmp.eq.s32.totalorder %s34, 1
      %p94 = por %p92, %p93
      %p95 = scmp.ne.s32.totalorder %s84, %s85
      %p96 = scmp.eq.s32.totalorder %s34, 0
      %p97 = por %p95, %p96
      %p98 = scmp.ne.s32.totalorder %s84, %s85
      %p99 = scmp.eq.s32.totalorder %s35, 1
      %p100 = por %p98, %p99
      %p102 = scmp.ne.s32.totalorder %s85, %s101
      %p103 = scmp.eq.s32.totalorder %s35, 0
      %p104 = por %p102, %p103
      %s105 = ssub.s32 %s29, %s36
      %p106 = scmp.eq.s32.totalorder %s105, 0
      %s108 = sadd.s32 %s107, 1
      %s109 = scalar_select %p106, %s107, %s108
      %p112 = pneg %p106
      %p113 = scmp.eq.s32.totalorder %s29, 1
      %p114 = por %p112, %p113
      %p115 = scmp.ne.s32.totalorder %s107, %s110
      %p116 = scmp.eq.s32.totalorder %s29, 0
      %p117 = por %p115, %p116
      %p118 = scmp.ne.s32.totalorder %s107, %s110
      %p119 = scmp.eq.s32.totalorder %s34, 1
      %p120 = por %p118, %p119
      %p121 = scmp.ne.s32.totalorder %s110, %s111
      %p122 = scmp.eq.s32.totalorder %s34, 0
      %p123 = por %p121, %p122
      %p124 = scmp.ne.s32.totalorder %s110, %s111
      %p125 = scmp.eq.s32.totalorder %s35, 1
      %p126 = por %p124, %p125
      %p128 = scmp.ne.s32.totalorder %s111, %s127
      %p129 = scmp.eq.s32.totalorder %s35, 0
      %p130 = por %p128, %p129
      %s132 = sadd.s32 %s131, 1
      %p135 = scmp.eq.s32.totalorder %s29, 1
      %p136 = scmp.ne.s32.totalorder %s131, %s133
      %p137 = scmp.eq.s32.totalorder %s29, 0
      %p138 = por %p136, %p137
      %p139 = scmp.ne.s32.totalorder %s131, %s133
      %p140 = scmp.eq.s32.totalorder %s34, 1
      %p141 = por %p139, %p140
      %p142 = scmp.ne.s32.totalorder %s133, %s134
      %p143 = scmp.eq.s32.totalorder %s34, 0
      %p144 = por %p142, %p143
      %p145 = scmp.ne.s32.totalorder %s133, %s134
      %p146 = scmp.eq.s32.totalorder %s35, 1
      %p147 = por %p145, %p146
      %p149 = scmp.ne.s32.totalorder %s134, %s148
      %p150 = scmp.eq.s32.totalorder %s35, 0
      %p151 = por %p149, %p150
      %s153 = sadd.s32 %s152, 1
      %p156 = scmp.eq.s32.totalorder %s29, 1
      %p157 = scmp.ne.s32.totalorder %s152, %s154
      %p158 = scmp.eq.s32.totalorder %s29, 0
      %p159 = por %p157, %p158
      %p160 = scmp.ne.s32.totalorder %s152, %s154
      %p161 = scmp.eq.s32.totalorder %s34, 1
      %p162 = por %p160, %p161
      %p163 = scmp.ne.s32.totalorder %s154, %s155
      %p164 = scmp.eq.s32.totalorder %s34, 0
      %p165 = por %p163, %p164
      %p166 = scmp.ne.s32.totalorder %s154, %s155
      %p167 = scmp.eq.s32.totalorder %s35, 1
      %p168 = por %p166, %p167
      %p170 = scmp.ne.s32.totalorder %s155, %s169
      %p171 = scmp.eq.s32.totalorder %s35, 0
      %p172 = por %p170, %p171
      %s174 = sadd.s32 %s173, 1
      %p177 = scmp.eq.s32.totalorder %s29, 1
      %p178 = scmp.ne.s32.totalorder %s173, %s175
      %p179 = scmp.eq.s32.totalorder %s29, 0
      %p180 = por %p178, %p179
      %p181 = scmp.ne.s32.totalorder %s173, %s175
      %p182 = scmp.eq.s32.totalorder %s34, 1
      %p183 = por %p181, %p182
      %p184 = scmp.ne.s32.totalorder %s175, %s176
      %p185 = scmp.eq.s32.totalorder %s34, 0
      %p186 = por %p184, %p185
      %p187 = scmp.ne.s32.totalorder %s175, %s176
      %p188 = scmp.eq.s32.totalorder %s35, 1
      %p189 = por %p187, %p188
      %p191 = scmp.ne.s32.totalorder %s176, %s190
      %p192 = scmp.eq.s32.totalorder %s35, 0
      %p193 = por %p191, %p192
      %s195 = sadd.s32 %s194, 1
      %p198 = scmp.eq.s32.totalorder %s29, 1
      %p199 = scmp.ne.s32.totalorder %s194, %s196
      %p200 = scmp.eq.s32.totalorder %s29, 0
      %p201 = por %p199, %p200
      %p202 = scmp.ne.s32.totalorder %s194, %s196
      %p203 = scmp.eq.s32.totalorder %s34, 1
      %p204 = por %p202, %p203
      %p205 = scmp.ne.s32.totalorder %s196, %s197
      %p206 = scmp.eq.s32.totalorder %s34, 0
      %p207 = por %p205, %p206
      %p208 = scmp.ne.s32.totalorder %s196, %s197
      %p209 = scmp.eq.s32.totalorder %s35, 1
      %p210 = por %p208, %p209
      %p212 = scmp.ne.s32.totalorder %s197, %s211
      %p213 = scmp.eq.s32.totalorder %s35, 0
      %p214 = por %p212, %p213
      %s216 = sadd.s32 %s215, 1
      %p219 = scmp.eq.s32.totalorder %s29, 1
      %p220 = scmp.ne.s32.totalorder %s215, %s217
      %p221 = scmp.eq.s32.totalorder %s29, 0
      %p222 = por %p220, %p221
      %p223 = scmp.ne.s32.totalorder %s215, %s217
      %p224 = scmp.eq.s32.totalorder %s34, 1
      %p225 = por %p223, %p224
      %p226 = scmp.ne.s32.totalorder %s217, %s218
      %p227 = scmp.eq.s32.totalorder %s34, 0
      %p228 = por %p226, %p227
      %p229 = scmp.ne.s32.totalorder %s217, %s218
      %p230 = scmp.eq.s32.totalorder %s35, 1
      %p231 = por %p229, %p230
      %p233 = scmp.ne.s32.totalorder %s218, %s232
      %p234 = scmp.eq.s32.totalorder %s35, 0
      %p235 = por %p233, %p234
      %s237 = sadd.s32 %s236, 1
      %p240 = scmp.eq.s32.totalorder %s29, 1
      %p241 = scmp.ne.s32.totalorder %s236, %s238
      %p242 = scmp.eq.s32.totalorder %s29, 0
      %p243 = por %p241, %p242
      %p244 = scmp.ne.s32.totalorder %s236, %s238
      %p245 = scmp.eq.s32.totalorder %s34, 1
      %p246 = por %p244, %p245
      %p247 = scmp.ne.s32.totalorder %s238, %s239
      %p248 = scmp.eq.s32.totalorder %s34, 0
      %p249 = por %p247, %p248
      %p250 = scmp.ne.s32.totalorder %s238, %s239
      %p251 = scmp.eq.s32.totalorder %s35, 1
      %p252 = por %p250, %p251
      %p254 = scmp.ne.s32.totalorder %s239, %s253
      %p255 = scmp.eq.s32.totalorder %s35, 0
      %p256 = por %p254, %p255
      %s258 = sadd.s32 %s257, 1
      %p261 = scmp.eq.s32.totalorder %s29, 1
      %p262 = scmp.ne.s32.totalorder %s257, %s259
      %p263 = scmp.eq.s32.totalorder %s29, 0
      %p264 = por %p262, %p263
      %p265 = scmp.ne.s32.totalorder %s257, %s259
      %p266 = scmp.eq.s32.totalorder %s34, 1
      %p267 = por %p265, %p266
      %p268 = scmp.ne.s32.totalorder %s259, %s260
      %p269 = scmp.eq.s32.totalorder %s34, 0
      %p270 = por %p268, %p269
      %p271 = scmp.ne.s32.totalorder %s259, %s260
      %p272 = scmp.eq.s32.totalorder %s35, 1
      %p273 = por %p271, %p272
      %p275 = scmp.ne.s32.totalorder %s260, %s274
      %p276 = scmp.eq.s32.totalorder %s35, 0
      %p277 = por %p275, %p276
      %s279 = sadd.s32 %s278, 1
      %p282 = scmp.eq.s32.totalorder %s29, 1
      %p283 = scmp.ne.s32.totalorder %s278, %s280
      %p284 = scmp.eq.s32.totalorder %s29, 0
      %p285 = por %p283, %p284
      %p286 = scmp.ne.s32.totalorder %s278, %s280
      %p287 = scmp.eq.s32.totalorder %s34, 1
      %p288 = por %p286, %p287
      %p289 = scmp.ne.s32.totalorder %s280, %s281
      %p290 = scmp.eq.s32.totalorder %s34, 0
      %p291 = por %p289, %p290
      %p292 = scmp.ne.s32.totalorder %s280, %s281
      %p293 = scmp.eq.s32.totalorder %s35, 1
      %p294 = por %p292, %p293
      %p296 = scmp.ne.s32.totalorder %s281, %s295
      %p297 = scmp.eq.s32.totalorder %s35, 0
      %p298 = por %p296, %p297
      %s300 = sadd.s32 %s299, 1
      %p303 = scmp.eq.s32.totalorder %s29, 1
      %p304 = scmp.ne.s32.totalorder %s299, %s301
      %p305 = scmp.eq.s32.totalorder %s29, 0
      %p306 = por %p304, %p305
      %p307 = scmp.ne.s32.totalorder %s299, %s301
      %p308 = scmp.eq.s32.totalorder %s34, 1
      %p309 = por %p307, %p308
      %p310 = scmp.ne.s32.totalorder %s301, %s302
      %p311 = scmp.eq.s32.totalorder %s34, 0
      %p312 = por %p310, %p311
      %p313 = scmp.ne.s32.totalorder %s301, %s302
      %p314 = scmp.eq.s32.totalorder %s35, 1
      %p315 = por %p313, %p314
      %p317 = scmp.ne.s32.totalorder %s302, %s316
      %p318 = scmp.eq.s32.totalorder %s35, 0
      %p319 = por %p317, %p318
      %s321 = sadd.s32 %s320, 1
      %p324 = scmp.eq.s32.totalorder %s29, 1
      %p325 = scmp.ne.s32.totalorder %s320, %s322
      %p326 = scmp.eq.s32.totalorder %s29, 0
      %p327 = por %p325, %p326
      %p328 = scmp.ne.s32.totalorder %s320, %s322
      %p329 = scmp.eq.s32.totalorder %s34, 1
      %p330 = por %p328, %p329
      %p331 = scmp.ne.s32.totalorder %s322, %s323
      %p332 = scmp.eq.s32.totalorder %s34, 0
      %p333 = por %p331, %p332
      %p334 = scmp.ne.s32.totalorder %s322, %s323
      %p335 = scmp.eq.s32.totalorder %s35, 1
      %p336 = por %p334, %p335
      %p338 = scmp.ne.s32.totalorder %s323, %s337
      %p339 = scmp.eq.s32.totalorder %s35, 0
      %p340 = por %p338, %p339
      %s342 = sadd.s32 %s341, 1
      %p345 = scmp.eq.s32.totalorder %s29, 1
      %p346 = scmp.ne.s32.totalorder %s341, %s343
      %p347 = scmp.eq.s32.totalorder %s29, 0
      %p348 = por %p346, %p347
      %p349 = scmp.ne.s32.totalorder %s341, %s343
      %p350 = scmp.eq.s32.totalorder %s34, 1
      %p351 = por %p349, %p350
      %p352 = scmp.ne.s32.totalorder %s343, %s344
      %p353 = scmp.eq.s32.totalorder %s34, 0
      %p354 = por %p352, %p353
      %p355 = scmp.ne.s32.totalorder %s343, %s344
      %p356 = scmp.eq.s32.totalorder %s35, 1
      %p357 = por %p355, %p356
      %p359 = scmp.ne.s32.totalorder %s344, %s358
      %p360 = scmp.eq.s32.totalorder %s35, 0
      %p361 = por %p359, %p360
      %s363 = sadd.s32 %s362, 1
      %p366 = scmp.eq.s32.totalorder %s29, 1
      %p367 = scmp.ne.s32.totalorder %s362, %s364
      %p368 = scmp.eq.s32.totalorder %s29, 0
      %p369 = por %p367, %p368
      %p370 = scmp.ne.s32.totalorder %s362, %s364
      %p371 = scmp.eq.s32.totalorder %s34, 1
      %p372 = por %p370, %p371
      %p373 = scmp.ne.s32.totalorder %s364, %s365
      %p374 = scmp.eq.s32.totalorder %s34, 0
      %p375 = por %p373, %p374
      %p376 = scmp.ne.s32.totalorder %s364, %s365
      %p377 = scmp.eq.s32.totalorder %s35, 1
      %p378 = por %p376, %p377
      %p380 = scmp.ne.s32.totalorder %s365, %s379
      %p381 = scmp.eq.s32.totalorder %s35, 0
      %p382 = por %p380, %p381
      %s384 = sadd.s32 %s383, 1
      %p387 = scmp.eq.s32.totalorder %s29, 1
      %p388 = scmp.ne.s32.totalorder %s383, %s385
      %p389 = scmp.eq.s32.totalorder %s29, 0
      %p390 = por %p388, %p389
      %p391 = scmp.ne.s32.totalorder %s383, %s385
      %p392 = scmp.eq.s32.totalorder %s34, 1
      %p393 = por %p391, %p392
      %p394 = scmp.ne.s32.totalorder %s385, %s386
      %p395 = scmp.eq.s32.totalorder %s34, 0
      %p396 = por %p394, %p395
      %p397 = scmp.ne.s32.totalorder %s385, %s386
      %p398 = scmp.eq.s32.totalorder %s35, 1
      %p399 = por %p397, %p398
      %p401 = scmp.ne.s32.totalorder %s386, %s400
      %p402 = scmp.eq.s32.totalorder %s35, 0
      %p403 = por %p401, %p402
      %s405 = sadd.s32 %s404, 1
      %p408 = scmp.eq.s32.totalorder %s29, 1
      %p409 = scmp.ne.s32.totalorder %s404, %s406
      %p410 = scmp.eq.s32.totalorder %s29, 0
      %p411 = por %p409, %p410
      %p412 = scmp.ne.s32.totalorder %s404, %s406
      %p413 = scmp.eq.s32.totalorder %s34, 1
      %p414 = por %p412, %p413
      %p415 = scmp.ne.s32.totalorder %s406, %s407
      %p416 = scmp.eq.s32.totalorder %s34, 0
      %p417 = por %p415, %p416
      %p418 = scmp.ne.s32.totalorder %s406, %s407
      %p419 = scmp.eq.s32.totalorder %s35, 1
      %p420 = por %p418, %p419
      %p422 = scmp.ne.s32.totalorder %s407, %s421
      %p423 = scmp.eq.s32.totalorder %s35, 0
      %p424 = por %p422, %p423
      %s426 = sadd.s32 %s425, 1
      %p429 = scmp.eq.s32.totalorder %s29, 1
      %p430 = scmp.ne.s32.totalorder %s425, %s427
      %p431 = scmp.eq.s32.totalorder %s29, 0
      %p432 = por %p430, %p431
      %p433 = scmp.ne.s32.totalorder %s425, %s427
      %p434 = scmp.eq.s32.totalorder %s34, 1
      %p435 = por %p433, %p434
      %p436 = scmp.ne.s32.totalorder %s427, %s428
      %p437 = scmp.eq.s32.totalorder %s34, 0
      %p438 = por %p436, %p437
      %p439 = scmp.ne.s32.totalorder %s427, %s428
      %p440 = scmp.eq.s32.totalorder %s35, 1
      %p441 = por %p439, %p440
      %p443 = scmp.ne.s32.totalorder %s428, %s442
      %p444 = scmp.eq.s32.totalorder %s35, 0
      %p445 = por %p443, %p444
      %s447 = sadd.s32 %s446, 1
      %p450 = scmp.eq.s32.totalorder %s29, 1
      %p451 = scmp.ne.s32.totalorder %s446, %s448
      %p452 = scmp.eq.s32.totalorder %s29, 0
      %p453 = por %p451, %p452
      %p454 = scmp.ne.s32.totalorder %s446, %s448
      %p455 = scmp.eq.s32.totalorder %s34, 1
      %p456 = por %p454, %p455
      %p457 = scmp.ne.s32.totalorder %s448, %s449
      %p458 = scmp.eq.s32.totalorder %s34, 0
      %p459 = por %p457, %p458
      %p460 = scmp.ne.s32.totalorder %s448, %s449
      %p461 = scmp.eq.s32.totalorder %s35, 1
      %p462 = por %p460, %p461
      %p464 = scmp.ne.s32.totalorder %s449, %s463
      %p465 = scmp.eq.s32.totalorder %s35, 0
      %p466 = por %p464, %p465
      %s468 = sadd.s32 %s467, 1
      %p471 = scmp.eq.s32.totalorder %s29, 1
      %p472 = scmp.ne.s32.totalorder %s467, %s469
      %p473 = scmp.eq.s32.totalorder %s29, 0
      %p474 = por %p472, %p473
      %p475 = scmp.ne.s32.totalorder %s467, %s469
      %p476 = scmp.eq.s32.totalorder %s34, 1
      %p477 = por %p475, %p476
      %p478 = scmp.ne.s32.totalorder %s469, %s470
      %p479 = scmp.eq.s32.totalorder %s34, 0
      %p480 = por %p478, %p479
      %p481 = scmp.ne.s32.totalorder %s469, %s470
      %p482 = scmp.eq.s32.totalorder %s35, 1
      %p483 = por %p481, %p482
      %p485 = scmp.ne.s32.totalorder %s470, %s484
      %p486 = scmp.eq.s32.totalorder %s35, 0
      %p487 = por %p485, %p486
      %s489 = sadd.s32 %s488, 1
      %p492 = scmp.eq.s32.totalorder %s29, 1
      %p493 = scmp.ne.s32.totalorder %s488, %s490
      %p494 = scmp.eq.s32.totalorder %s29, 0
      %p495 = por %p493, %p494
      %p496 = scmp.ne.s32.totalorder %s488, %s490
      %p497 = scmp.eq.s32.totalorder %s34, 1
      %p498 = por %p496, %p497
      %p499 = scmp.ne.s32.totalorder %s490, %s491
      %p500 = scmp.eq.s32.totalorder %s34, 0
      %p501 = por %p499, %p500
      %p502 = scmp.ne.s32.totalorder %s490, %s491
      %p503 = scmp.eq.s32.totalorder %s35, 1
      %p504 = por %p502, %p503
      %p506 = scmp.ne.s32.totalorder %s491, %s505
      %p507 = scmp.eq.s32.totalorder %s35, 0
      %p508 = por %p506, %p507
      %s509 = ssub.s32 %s29, %s36
      %p510 = scmp.eq.s32.totalorder %s509, 0
      %s512 = sadd.s32 %s511, 1
      %s513 = scalar_select %p510, %s511, %s512
      %p516 = pneg %p510
      %p517 = scmp.eq.s32.totalorder %s29, 1
      %p518 = por %p516, %p517
      %p519 = scmp.ne.s32.totalorder %s511, %s514
      %p520 = scmp.eq.s32.totalorder %s29, 0
      %p521 = por %p519, %p520
      %p522 = scmp.ne.s32.totalorder %s511, %s514
      %p523 = scmp.eq.s32.totalorder %s34, 1
      %p524 = por %p522, %p523
      %p525 = scmp.ne.s32.totalorder %s514, %s515
      %p526 = scmp.eq.s32.totalorder %s34, 0
      %p527 = por %p525, %p526
      %p528 = scmp.ne.s32.totalorder %s514, %s515
      %p529 = scmp.eq.s32.totalorder %s35, 1
      %p530 = por %p528, %p529
      %p532 = scmp.ne.s32.totalorder %s515, %s531
      %p533 = scmp.eq.s32.totalorder %s35, 0
      %p534 = por %p532, %p533
      %p535 = scmp.le.s32.totalorder 1, %s29
      %p536 = scmp.lt.s32.totalorder %s29, 3
      %p537 = pnand %p535, %p536
      %p538 = pneg %p537
      // Predicated region
      $region9: #{ktm_forward.1} parent=5 // pred_check
        _
      $region10: #{ktm_forward.1} parent=5 // pred_check_branch
        %540 = sbr.rel (%p537) target = $region12
      $region11: #{ktm_forward.1} parent=5 // pred_region
        %s541 = ssub.s32 %s29, 1
        // Predicated region
        $region13: #{ktm_forward.1} parent=11 // pred_check
          %p542 = pneg %p50
        $region14: #{ktm_forward.1} parent=11 // pred_check_branch
          %544 = sbr.rel (%p542) target = $region16
        $region15: #{ktm_forward.1} parent=11 // pred_region
          %s546 = ssub.s32 16, 16
          %547 = vsyncadd [#allocation4], %s546
          %s549 = sshll.u32 %s0, 4
          %s550 = int_to_ptr.vmem [resolvable:$true] %s549
          %552 = dma.vmem_to_smem %s550, 16, [#allocation3], [#allocation4]
        $region16: #{ktm_forward.1} parent=11 // pred_fallthru
          _
        // Predicated region
        $region17: #{ktm_forward.1} parent=11 // pred_check
          %p553 = pneg %p71
        $region18: #{ktm_forward.1} parent=11 // pred_check_branch
          %555 = sbr.rel (%p553) target = $region20
        $region19: #{ktm_forward.1} parent=11 // pred_region
          _
        $region20: #{ktm_forward.1} parent=11 // pred_fallthru
          _
        // Predicated region
        $region21: #{ktm_forward.1} parent=11 // pred_check
          %p556 = pneg %p144
        $region22: #{ktm_forward.1} parent=11 // pred_check_branch
          %558 = sbr.rel (%p556) target = $region24
        $region23: #{ktm_forward.1} parent=11 // pred_region
          _
        $region24: #{ktm_forward.1} parent=11 // pred_fallthru
          _
        // Predicated region
        $region25: #{ktm_forward.1} parent=11 // pred_check
          %p559 = pneg %p165
        $region26: #{ktm_forward.1} parent=11 // pred_check_branch
          %561 = sbr.rel (%p559) target = $region28
        $region27: #{ktm_forward.1} parent=11 // pred_region
          _
        $region28: #{ktm_forward.1} parent=11 // pred_fallthru
          _
        // Predicated region
        $region29: #{ktm_forward.1} parent=11 // pred_check
          %p562 = pneg %p186
        $region30: #{ktm_forward.1} parent=11 // pred_check_branch
          %564 = sbr.rel (%p562) target = $region32
        $region31: #{ktm_forward.1} parent=11 // pred_region
          _
        $region32: #{ktm_forward.1} parent=11 // pred_fallthru
          _
        // Predicated region
        $region33: #{ktm_forward.1} parent=11 // pred_check
          %p565 = pneg %p207
        $region34: #{ktm_forward.1} parent=11 // pred_check_branch
          %567 = sbr.rel (%p565) target = $region36
        $region35: #{ktm_forward.1} parent=11 // pred_region
          _
        $region36: #{ktm_forward.1} parent=11 // pred_fallthru
          _
        // Predicated region
        $region37: #{ktm_forward.1} parent=11 // pred_check
          %p568 = pneg %p228
        $region38: #{ktm_forward.1} parent=11 // pred_check_branch
          %570 = sbr.rel (%p568) target = $region40
        $region39: #{ktm_forward.1} parent=11 // pred_region
          _
        $region40: #{ktm_forward.1} parent=11 // pred_fallthru
          _
        // Predicated region
        $region41: #{ktm_forward.1} parent=11 // pred_check
          %p571 = pneg %p249
        $region42: #{ktm_forward.1} parent=11 // pred_check_branch
          %573 = sbr.rel (%p571) target = $region44
        $region43: #{ktm_forward.1} parent=11 // pred_region
          _
        $region44: #{ktm_forward.1} parent=11 // pred_fallthru
          _
        // Predicated region
        $region45: #{ktm_forward.1} parent=11 // pred_check
          %p574 = pneg %p270
        $region46: #{ktm_forward.1} parent=11 // pred_check_branch
          %576 = sbr.rel (%p574) target = $region48
        $region47: #{ktm_forward.1} parent=11 // pred_region
          _
        $region48: #{ktm_forward.1} parent=11 // pred_fallthru
          _
        // Predicated region
        $region49: #{ktm_forward.1} parent=11 // pred_check
          %p577 = pneg %p291
        $region50: #{ktm_forward.1} parent=11 // pred_check_branch
          %579 = sbr.rel (%p577) target = $region52
        $region51: #{ktm_forward.1} parent=11 // pred_region
          _
        $region52: #{ktm_forward.1} parent=11 // pred_fallthru
          _
        // Predicated region
        $region53: #{ktm_forward.1} parent=11 // pred_check
          %p580 = pneg %p312
        $region54: #{ktm_forward.1} parent=11 // pred_check_branch
          %582 = sbr.rel (%p580) target = $region56
        $region55: #{ktm_forward.1} parent=11 // pred_region
          _
        $region56: #{ktm_forward.1} parent=11 // pred_fallthru
          _
        // Predicated region
        $region57: #{ktm_forward.1} parent=11 // pred_check
          %p583 = pneg %p333
        $region58: #{ktm_forward.1} parent=11 // pred_check_branch
          %585 = sbr.rel (%p583) target = $region60
        $region59: #{ktm_forward.1} parent=11 // pred_region
          _
        $region60: #{ktm_forward.1} parent=11 // pred_fallthru
          _
        // Predicated region
        $region61: #{ktm_forward.1} parent=11 // pred_check
          %p586 = pneg %p354
        $region62: #{ktm_forward.1} parent=11 // pred_check_branch
          %588 = sbr.rel (%p586) target = $region64
        $region63: #{ktm_forward.1} parent=11 // pred_region
          _
        $region64: #{ktm_forward.1} parent=11 // pred_fallthru
          _
        // Predicated region
        $region65: #{ktm_forward.1} parent=11 // pred_check
          %p589 = pneg %p375
        $region66: #{ktm_forward.1} parent=11 // pred_check_branch
          %591 = sbr.rel (%p589) target = $region68
        $region67: #{ktm_forward.1} parent=11 // pred_region
          _
        $region68: #{ktm_forward.1} parent=11 // pred_fallthru
          _
        // Predicated region
        $region69: #{ktm_forward.1} parent=11 // pred_check
          %p592 = pneg %p396
        $region70: #{ktm_forward.1} parent=11 // pred_check_branch
          %594 = sbr.rel (%p592) target = $region72
        $region71: #{ktm_forward.1} parent=11 // pred_region
          _
        $region72: #{ktm_forward.1} parent=11 // pred_fallthru
          _
        // Predicated region
        $region73: #{ktm_forward.1} parent=11 // pred_check
          %p595 = pneg %p417
        $region74: #{ktm_forward.1} parent=11 // pred_check_branch
          %597 = sbr.rel (%p595) target = $region76
        $region75: #{ktm_forward.1} parent=11 // pred_region
          _
        $region76: #{ktm_forward.1} parent=11 // pred_fallthru
          _
        // Predicated region
        $region77: #{ktm_forward.1} parent=11 // pred_check
          %p598 = pneg %p438
        $region78: #{ktm_forward.1} parent=11 // pred_check_branch
          %600 = sbr.rel (%p598) target = $region80
        $region79: #{ktm_forward.1} parent=11 // pred_region
          _
        $region80: #{ktm_forward.1} parent=11 // pred_fallthru
          _
        // Predicated region
        $region81: #{ktm_forward.1} parent=11 // pred_check
          %p601 = pneg %p459
        $region82: #{ktm_forward.1} parent=11 // pred_check_branch
          %603 = sbr.rel (%p601) target = $region84
        $region83: #{ktm_forward.1} parent=11 // pred_region
          _
        $region84: #{ktm_forward.1} parent=11 // pred_fallthru
          _
        // Predicated region
        $region85: #{ktm_forward.1} parent=11 // pred_check
          %p604 = pneg %p480
        $region86: #{ktm_forward.1} parent=11 // pred_check_branch
          %606 = sbr.rel (%p604) target = $region88
        $region87: #{ktm_forward.1} parent=11 // pred_region
          _
        $region88: #{ktm_forward.1} parent=11 // pred_fallthru
          _
        // Predicated region
        $region89: #{ktm_forward.1} parent=11 // pred_check
          %p607 = pneg %p501
        $region90: #{ktm_forward.1} parent=11 // pred_check_branch
          %609 = sbr.rel (%p607) target = $region92
        $region91: #{ktm_forward.1} parent=11 // pred_region
          _
        $region92: #{ktm_forward.1} parent=11 // pred_fallthru
          _
      $region12: #{ktm_forward.1} parent=5 // pred_fallthru
        _
      %p610 = scmp.lt.s32.totalorder %s29, 2
      // Predicated region
      $region93: #{ktm_forward.1} parent=5 // pred_check
        %p611 = pneg %p610
      $region94: #{ktm_forward.1} parent=5 // pred_check_branch
        %613 = sbr.rel (%p611) target = $region96
      $region95: #{ktm_forward.1} parent=5 // pred_region
        // Predicated region
        $region97: #{ktm_forward.1} parent=95 // pred_check
          %p614 = pneg %p91
        $region98: #{ktm_forward.1} parent=95 // pred_check_branch
          %616 = sbr.rel (%p614) target = $region100
        $region99: #{ktm_forward.1} parent=95 // pred_region
          %p617 = scmp.lt.s32.totalorder %s29, 1
          %s618 = scalar_select %p617, %s29, 1
          %s619 = smul.addr %s618, 8
          %s620 = smul.addr %s619, 8
          %s621 = scalar_lea.vmem %s2, %s620
        $region100: #{ktm_forward.1} parent=95 // pred_fallthru
          _
        // Predicated region
        $region101: #{ktm_forward.1} parent=95 // pred_check
          %p622 = pneg %p117
        $region102: #{ktm_forward.1} parent=95 // pred_check_branch
          %624 = sbr.rel (%p622) target = $region104
        $region103: #{ktm_forward.1} parent=95 // pred_region
          %p625 = scmp.lt.s32.totalorder %s29, 1
          %s626 = scalar_select %p625, %s29, 1
          %s627 = smul.addr %s626, 8
          %s628 = smul.addr %s627, 8
          %s629 = scalar_lea.vmem %s3, %s628
        $region104: #{ktm_forward.1} parent=95 // pred_fallthru
          _
      $region96: #{ktm_forward.1} parent=5 // pred_fallthru
        _
      %p630 = scmp.le.s32.totalorder 1, %s29
      %p631 = scmp.lt.s32.totalorder %s29, 3
      %p632 = pnand %p630, %p631
      %p633 = pneg %p632
      // Predicated region
      $region105: #{ktm_forward.1} parent=5 // pred_check
        _
      $region106: #{ktm_forward.1} parent=5 // pred_check_branch
        %635 = sbr.rel (%p632) target = $region108
      $region107: #{ktm_forward.1} parent=5 // pred_region
        %s636 = ssub.s32 %s29, 1
        // Predicated region
        $region109: #{ktm_forward.1} parent=107 // pred_check
          %p637 = pneg %p50
        $region110: #{ktm_forward.1} parent=107 // pred_check_branch
          %639 = sbr.rel (%p637) target = $region112
        $region111: #{ktm_forward.1} parent=107 // pred_region
          %640 = dma.done [#allocation4], 16
        $region112: #{ktm_forward.1} parent=107 // pred_fallthru
          _
        %641 = sfence
        %p642 = pneg %p50
        %p643 = pneg %p47
        %p644 = pneg %p71
        %p645 = pneg %p68
        %p646 = scmp.lt.s32.totalorder %s34, 1
        %s647 = scalar_select %p646, %s34, 1
        %s648 = smul.addr %s647, 8
        %s649 = smul.addr %s648, 8
        %s650 = scalar_lea.vmem %s2, %s649
        %p651 = pneg %p97
        %p652 = pneg %p94
        %p653 = scmp.lt.s32.totalorder %s34, 1
        %s654 = scalar_select %p653, %s34, 1
        %s655 = smul.addr %s654, 8
        %s656 = smul.addr %s655, 8
        %s657 = scalar_lea.vmem %s3, %s656
        %p658 = pneg %p123
        %p659 = pneg %p120
        %p660 = pneg %p144
        %p661 = pneg %p141
        %p662 = pneg %p165
        %p663 = pneg %p162
        %p664 = pneg %p186
        %p665 = pneg %p183
        %p666 = pneg %p207
        %p667 = pneg %p204
        %p668 = pneg %p228
        %p669 = pneg %p225
        %p670 = pneg %p249
        %p671 = pneg %p246
        %p672 = pneg %p270
        %p673 = pneg %p267
        %p674 = pneg %p291
        %p675 = pneg %p288
        %p676 = pneg %p312
        %p677 = pneg %p309
        %p678 = pneg %p333
        %p679 = pneg %p330
        %p680 = pneg %p354
        %p681 = pneg %p351
        %p682 = pneg %p375
        %p683 = pneg %p372
        %p684 = pneg %p396
        %p685 = pneg %p393
        %p686 = pneg %p417
        %p687 = pneg %p414
        %p688 = pneg %p438
        %p689 = pneg %p435
        %p690 = pneg %p459
        %p691 = pneg %p456
        %p692 = pneg %p480
        %p693 = pneg %p477
        %p694 = pneg %p501
        %p695 = pneg %p498
        %p696 = pneg %p527
        %p697 = pneg %p524
        %p698 = scmp.lt.s32.totalorder %s34, 1
        %s699 = scalar_select %p698, %s34, 1
        %s700 = smul.addr %s699, 8
        %s701 = smul.addr %s700, 8
        %s702 = scalar_lea.vmem %s22, %s701
        %p703 = scmp.lt.s32.totalorder %s34, 1
        %s704 = scalar_select %p703, %s34, 1
        %s705 = smul.addr %s704, 8
        %s706 = smul.addr %s705, 8
        %s707 = scalar_lea.vmem %s2, %s706
        %p708 = scmp.lt.s32.totalorder %s34, 1
        %s709 = scalar_select %p708, %s34, 1
        %s710 = smul.addr %s709, 8
        %s711 = smul.addr %s710, 8
        %s712 = scalar_lea.vmem %s3, %s711
        %p713 = scmp.lt.s32.totalorder %s34, 1
        %s714 = scalar_select %p713, %s34, 1
        %s715 = smul.addr %s714, 8
        %s716 = smul.addr %s715, 8
        %s717 = scalar_lea.vmem %s22, %s716
        %v719 = vld [vmem:[%s707] sm:$0xff]
        %v720 = vld [vmem:[%s707 + $0x8] sm:$0xff]
        %v721 = vld [vmem:[%s707 + $0x10] sm:$0xff]
        %v722 = vld [vmem:[%s707 + $0x18] sm:$0xff]
        %v723 = vld [vmem:[%s707 + $0x20] sm:$0xff]
        %v724 = vld [vmem:[%s707 + $0x28] sm:$0xff]
        %v725 = vld [vmem:[%s707 + $0x30] sm:$0xff]
        %v726 = vld [vmem:[%s707 + $0x38] sm:$0xff]
        %v727 = vld [vmem:[%s712] sm:$0xff]
        %v728 = vld [vmem:[%s712 + $0x8] sm:$0xff]
        %v729 = vld [vmem:[%s712 + $0x10] sm:$0xff]
        %v730 = vld [vmem:[%s712 + $0x18] sm:$0xff]
        %v731 = vld [vmem:[%s712 + $0x20] sm:$0xff]
        %v732 = vld [vmem:[%s712 + $0x28] sm:$0xff]
        %v733 = vld [vmem:[%s712 + $0x30] sm:$0xff]
        %v734 = vld [vmem:[%s712 + $0x38] sm:$0xff]
        %v735 = vadd.f32 %v719, %v727
        %v736 = vadd.f32 %v720, %v728
        %v737 = vadd.f32 %v721, %v729
        %v738 = vadd.f32 %v722, %v730
        %v739 = vadd.f32 %v723, %v731
        %v740 = vadd.f32 %v724, %v732
        %v741 = vadd.f32 %v725, %v733
        %v742 = vadd.f32 %v726, %v734
        %v743 = vpack.c.bf16 %v737, %v735
        %v744 = vpack.c.bf16 %v738, %v736
        %v745 = vpack.c.bf16 %v741, %v739
        %v746 = vpack.c.bf16 %v742, %v740
        %v747 = vmul.f32 %v719, %v727
        %v748 = vmul.f32 %v720, %v728
        %v749 = vmul.f32 %v721, %v729
        %v750 = vmul.f32 %v722, %v730
        %v751 = vmul.f32 %v723, %v731
        %v752 = vmul.f32 %v724, %v732
        %v753 = vmul.f32 %v725, %v733
        %v754 = vmul.f32 %v726, %v734
        %v755 = vpack.c.bf16 %v749, %v747
        %v756 = vpack.c.bf16 %v750, %v748
        %v757 = vpack.c.bf16 %v753, %v751
        %v758 = vpack.c.bf16 %v754, %v752
        %v759 = vld [vmem:[%s4] sm:$0xf]
        %v760 = vld [vmem:[%s4 + $0x4] sm:$0xf]
        %v761 = vld [vmem:[%s5] sm:$0xff]
        %v762 = vld [vmem:[%s5 + $0x8] sm:$0xff]
        %764 = vset.pattern.permute.xlu0 0
        %765 = vperm.xlu0 %764, %v761
        %v766 = vpop.permute.xlu0 %765
        %769 = vset.pattern.permute.xlu0 0
        %770 = vperm.xlu0 %769, %v762
        %v771 = vpop.permute.xlu0 %770
        %v775 = vunpack.c.l.b16 %v759
        %v776 = vunpack.c.l.b16 %v760
        %v777 = vpack.c.b16 %v776, %v775
        %vm778 = vcmask 261120
        %v780 = vsel %vm778, %v777, 0
        %782 = vmatprep.subr.bf16.mxu0 %v744
        %783 = vmatpush1.bf16.msra.mxu0 %v743
        %784 = vmatprep.subr.bf16.mxu0 %v746
        %785 = vmatpush1.bf16.msra.mxu0 %v745
        %786 = vmatprep.subr.bf16.mxu0 0
        %787 = vmatpush1.bf16.msra.mxu0 0
        %788 = vmatprep.subr.bf16.mxu0 0
        %789 = vmatpush1.bf16.msra.mxu0 0
        %790 = vmatprep.subr.bf16.mxu0 0
        %791 = vmatpush1.bf16.msra.mxu0 0
        %792 = vmatprep.subr.bf16.mxu0 0
        %793 = vmatpush1.bf16.msra.mxu0 0
        %794 = vmatprep.subr.bf16.mxu0 0
        %795 = vmatpush1.bf16.msra.mxu0 0
        %796 = vmatprep.subr.bf16.mxu0 0
        %797 = vmatpush1.bf16.msra.mxu0 0
        %798 = vmatprep.subr.bf16.mxu0 0
        %799 = vmatpush1.bf16.msra.mxu0 0
        %800 = vmatprep.subr.bf16.mxu0 0
        %801 = vmatpush1.bf16.msra.mxu0 0
        %802 = vmatprep.subr.bf16.mxu0 0
        %803 = vmatpush1.bf16.msra.mxu0 0
        %804 = vmatprep.subr.bf16.mxu0 0
        %805 = vmatpush1.bf16.msra.mxu0 0
        %806 = vmatprep.subr.bf16.mxu0 0
        %807 = vmatpush1.bf16.msra.mxu0 0
        %808 = vmatprep.subr.bf16.mxu0 0
        %809 = vmatpush1.bf16.msra.mxu0 0
        %810 = vmatprep.subr.bf16.mxu0 0
        %811 = vmatpush1.bf16.msra.mxu0 0
        %812 = vmatprep.subr.bf16.mxu0 0
        %813 = vmatpush1.bf16.msra.mxu0 0
        %814 = vmatprep.mubr.bf16.mxu0 0
        %815 = vmatmul.mubr.bf16.gmra.mrb[0].mxu0 %v780
        %v816 = vpop.f32.mrb[0].mxu0
        %v817 = vadd.f32 %v766, %v816
        %v818 = vpop.f32.mrb[0].mxu0
        %v819 = vadd.f32 %v766, %v818
        %v820 = vpop.f32.mrb[0].mxu0
        %v821 = vadd.f32 %v771, %v820
        %v822 = vpop.f32.mrb[0].mxu0
        %v823 = vadd.f32 %v771, %v822
        %824 = vdwg.mxu0
        %v825 = vld [vmem:[%s6] sm:$0xf]
        %v826 = vld [vmem:[%s6 + $0x4] sm:$0xf]
        %v827 = vld [vmem:[%s7] sm:$0xff]
        %v828 = vld [vmem:[%s7 + $0x8] sm:$0xff]
        %830 = vset.pattern.permute.xlu0 0
        %831 = vperm.xlu0 %830, %v827
        %v832 = vpop.permute.xlu0 %831
        %835 = vset.pattern.permute.xlu0 0
        %836 = vperm.xlu0 %835, %v828
        %v837 = vpop.permute.xlu0 %836
        %v841 = vunpack.c.l.b16 %v825
        %v842 = vunpack.c.l.b16 %v826
        %v843 = vpack.c.b16 %v842, %v841
        %v845 = vsel %vm778, %v843, 0
        %847 = vmatprep.subr.bf16.mxu0 %v756
        %848 = vmatpush1.bf16.msra.mxu0 %v755
        %849 = vmatprep.subr.bf16.mxu0 %v758
        %850 = vmatpush1.bf16.msra.mxu0 %v757
        %851 = vmatprep.subr.bf16.mxu0 0
        %852 = vmatpush1.bf16.msra.mxu0 0
        %853 = vmatprep.subr.bf16.mxu0 0
        %854 = vmatpush1.bf16.msra.mxu0 0
        %855 = vmatprep.subr.bf16.mxu0 0
        %856 = vmatpush1.bf16.msra.mxu0 0
        %857 = vmatprep.subr.bf16.mxu0 0
        %858 = vmatpush1.bf16.msra.mxu0 0
        %859 = vmatprep.subr.bf16.mxu0 0
        %860 = vmatpush1.bf16.msra.mxu0 0
        %861 = vmatprep.subr.bf16.mxu0 0
        %862 = vmatpush1.bf16.msra.mxu0 0
        %863 = vmatprep.subr.bf16.mxu0 0
        %864 = vmatpush1.bf16.msra.mxu0 0
        %865 = vmatprep.subr.bf16.mxu0 0
        %866 = vmatpush1.bf16.msra.mxu0 0
        %867 = vmatprep.subr.bf16.mxu0 0
        %868 = vmatpush1.bf16.msra.mxu0 0
        %869 = vmatprep.subr.bf16.mxu0 0
        %870 = vmatpush1.bf16.msra.mxu0 0
        %871 = vmatprep.subr.bf16.mxu0 0
        %872 = vmatpush1.bf16.msra.mxu0 0
        %873 = vmatprep.subr.bf16.mxu0 0
        %874 = vmatpush1.bf16.msra.mxu0 0
        %875 = vmatprep.subr.bf16.mxu0 0
        %876 = vmatpush1.bf16.msra.mxu0 0
        %877 = vmatprep.subr.bf16.mxu0 0
        %878 = vmatpush1.bf16.msra.mxu0 0
        %879 = vmatprep.mubr.bf16.mxu0 0
        %880 = vmatmul.mubr.bf16.gmra.mrb[0].mxu0 %v845
        %v881 = vpop.f32.mrb[0].mxu0
        %v882 = vadd.f32 %v832, %v881
        %v883 = vpop.f32.mrb[0].mxu0
        %v884 = vadd.f32 %v832, %v883
        %v885 = vpop.f32.mrb[0].mxu0
        %v886 = vadd.f32 %v837, %v885
        %v887 = vpop.f32.mrb[0].mxu0
        %v888 = vadd.f32 %v837, %v887
        %889 = vdwg.mxu0
        %890 = vxpose.xlu0.b32.start [1/16] %v882, 128
        %891 = vxpose.xlu0.b32.cont [2/16] %v886, 128
        %892 = vxpose.xlu0.b32.cont [3/16] 0.0, 128
        %893 = vxpose.xlu0.b32.cont [4/16] 0.0, 128
        %894 = vxpose.xlu0.b32.cont [5/16] 0.0, 128
        %895 = vxpose.xlu0.b32.cont [6/16] 0.0, 128
        %896 = vxpose.xlu0.b32.cont [7/16] 0.0, 128
        %897 = vxpose.xlu0.b32.cont [8/16] 0.0, 128
        %898 = vxpose.xlu0.b32.cont [9/16] 0.0, 128
        %899 = vxpose.xlu0.b32.cont [10/16] 0.0, 128
        %900 = vxpose.xlu0.b32.cont [11/16] 0.0, 128
        %901 = vxpose.xlu0.b32.cont [12/16] 0.0, 128
        %902 = vxpose.xlu0.b32.cont [13/16] 0.0, 128
        %903 = vxpose.xlu0.b32.cont [14/16] 0.0, 128
        %904 = vxpose.xlu0.b32.cont [15/16] 0.0, 128
        %905 = vxpose.xlu0.b32.end [16/16] 0.0, 128
        %v906 = vpop.trf.xlu0
        %v907 = vpop.trf.xlu0
        %v908 = vpop.trf.xlu0
        %v909 = vpop.trf.xlu0
        %v910 = vpop.trf.xlu0
        %v911 = vpop.trf.xlu0
        %v912 = vpop.trf.xlu0
        %v913 = vpop.trf.xlu0
        %v914 = vpop.trf.xlu0
        %v915 = vpop.trf.xlu0
        %v916 = vpop.trf.xlu0
        %v917 = vpop.trf.xlu0
        %v918 = vpop.trf.xlu0
        %v919 = vpop.trf.xlu0
        %v920 = vpop.trf.xlu0
        %v921 = vpop.trf.xlu0
        %922 = vxpose.xlu0.b32.start [1/16] %v884, 128
        %923 = vxpose.xlu0.b32.cont [2/16] %v888, 128
        %924 = vxpose.xlu0.b32.cont [3/16] 0.0, 128
        %925 = vxpose.xlu0.b32.cont [4/16] 0.0, 128
        %926 = vxpose.xlu0.b32.cont [5/16] 0.0, 128
        %927 = vxpose.xlu0.b32.cont [6/16] 0.0, 128
        %928 = vxpose.xlu0.b32.cont [7/16] 0.0, 128
        %929 = vxpose.xlu0.b32.cont [8/16] 0.0, 128
        %930 = vxpose.xlu0.b32.cont [9/16] 0.0, 128
        %931 = vxpose.xlu0.b32.cont [10/16] 0.0, 128
        %932 = vxpose.xlu0.b32.cont [11/16] 0.0, 128
        %933 = vxpose.xlu0.b32.cont [12/16] 0.0, 128
        %934 = vxpose.xlu0.b32.cont [13/16] 0.0, 128
        %935 = vxpose.xlu0.b32.cont [14/16] 0.0, 128
        %936 = vxpose.xlu0.b32.cont [15/16] 0.0, 128
        %937 = vxpose.xlu0.b32.end [16/16] 0.0, 128
        %v938 = vpop.trf.xlu0
        %v939 = vpop.trf.xlu0
        %v940 = vpop.trf.xlu0
        %v941 = vpop.trf.xlu0
        %v942 = vpop.trf.xlu0
        %v943 = vpop.trf.xlu0
        %v944 = vpop.trf.xlu0
        %v945 = vpop.trf.xlu0
        %v946 = vpop.trf.xlu0
        %v947 = vpop.trf.xlu0
        %v948 = vpop.trf.xlu0
        %v949 = vpop.trf.xlu0
        %v950 = vpop.trf.xlu0
        %v951 = vpop.trf.xlu0
        %v952 = vpop.trf.xlu0
        %v953 = vpop.trf.xlu0
        %v954 = vpack.c.bf16 %v907, %v906
        %v955 = vpack.c.bf16 %v909, %v908
        %v956 = vpack.c.bf16 %v911, %v910
        %v957 = vpack.c.bf16 %v913, %v912
        %v958 = vpack.c.bf16 %v915, %v914
        %v959 = vpack.c.bf16 %v917, %v916
        %v960 = vpack.c.bf16 %v919, %v918
        %v961 = vpack.c.bf16 %v921, %v920
        %v962 = vpack.c.bf16 %v939, %v938
        %v963 = vpack.c.bf16 %v941, %v940
        %v964 = vpack.c.bf16 %v943, %v942
        %v965 = vpack.c.bf16 %v945, %v944
        %v966 = vpack.c.bf16 %v947, %v946
        %v967 = vpack.c.bf16 %v949, %v948
        %v968 = vpack.c.bf16 %v951, %v950
        %v969 = vpack.c.bf16 %v953, %v952
        %v970 = vpack.c.bf16 %v821, %v817
        %v971 = vpack.c.bf16 %v823, %v819
        %vm972 = vcmask 130048
        %v974 = vsel %vm972, %v954, 0
        %v977 = vsel %vm972, %v955, 0
        %v980 = vsel %vm972, %v956, 0
        %v983 = vsel %vm972, %v957, 0
        %v986 = vsel %vm972, %v958, 0
        %v989 = vsel %vm972, %v959, 0
        %v992 = vsel %vm972, %v960, 0
        %v995 = vsel %vm972, %v961, 0
        %v998 = vsel %vm972, %v962, 0
        %v1001 = vsel %vm972, %v963, 0
        %v1004 = vsel %vm972, %v964, 0
        %v1007 = vsel %vm972, %v965, 0
        %v1010 = vsel %vm972, %v966, 0
        %v1013 = vsel %vm972, %v967, 0
        %v1016 = vsel %vm972, %v968, 0
        %v1019 = vsel %vm972, %v969, 0
        %1021 = vmatprep.subr.bf16.mxu0 %v971
        %1022 = vmatpush1.bf16.msra.mxu0 %v970
        %1023 = vmatprep.subr.bf16.mxu0 0
        %1024 = vmatpush1.bf16.msra.mxu0 0
        %1025 = vmatprep.subr.bf16.mxu0 0
        %1026 = vmatpush1.bf16.msra.mxu0 0
        %1027 = vmatprep.subr.bf16.mxu0 0
        %1028 = vmatpush1.bf16.msra.mxu0 0
        %1029 = vmatprep.subr.bf16.mxu0 0
        %1030 = vmatpush1.bf16.msra.mxu0 0
        %1031 = vmatprep.subr.bf16.mxu0 0
        %1032 = vmatpush1.bf16.msra.mxu0 0
        %1033 = vmatprep.subr.bf16.mxu0 0
        %1034 = vmatpush1.bf16.msra.mxu0 0
        %1035 = vmatprep.subr.bf16.mxu0 0
        %1036 = vmatpush1.bf16.msra.mxu0 0
        %1037 = vmatprep.subr.bf16.mxu0 0
        %1038 = vmatpush1.bf16.msra.mxu0 0
        %1039 = vmatprep.subr.bf16.mxu0 0
        %1040 = vmatpush1.bf16.msra.mxu0 0
        %1041 = vmatprep.subr.bf16.mxu0 0
        %1042 = vmatpush1.bf16.msra.mxu0 0
        %1043 = vmatprep.subr.bf16.mxu0 0
        %1044 = vmatpush1.bf16.msra.mxu0 0
        %1045 = vmatprep.subr.bf16.mxu0 0
        %1046 = vmatpush1.bf16.msra.mxu0 0
        %1047 = vmatprep.subr.bf16.mxu0 0
        %1048 = vmatpush1.bf16.msra.mxu0 0
        %1049 = vmatprep.subr.bf16.mxu0 0
        %1050 = vmatpush1.bf16.msra.mxu0 0
        %1051 = vmatprep.subr.bf16.mxu0 0
        %1052 = vmatpush1.bf16.msra.mxu0 0
        %1053 = vmatprep.mubr.bf16.mxu0 0
        %1054 = vmatmul.mubr.bf16.gmra.mrb[0].mxu0 %v974
        %v1055 = vpop.f32.mrb[0].mxu0
        %v1056 = vadd.f32 0.0, %v1055
        %v1057 = vpop.f32.mrb[0].mxu0
        %v1058 = vadd.f32 0.0, %v1057
        %v1059 = vpop.f32.mrb[0].mxu0
        %v1060 = vadd.f32 0.0, %v1059
        %v1061 = vpop.f32.mrb[0].mxu0
        %v1062 = vadd.f32 0.0, %v1061
        %1063 = vmatprep.mubr.bf16.mxu0 0
        %1064 = vmatmul.mubr.bf16.gmra.mrb[0].mxu0 %v977
        %v1065 = vpop.f32.mrb[0].mxu0
        %v1066 = vadd.f32 0.0, %v1065
        %v1067 = vpop.f32.mrb[0].mxu0
        %v1068 = vadd.f32 0.0, %v1067
        %v1069 = vpop.f32.mrb[0].mxu0
        %v1070 = vadd.f32 0.0, %v1069
        %v1071 = vpop.f32.mrb[0].mxu0
        %v1072 = vadd.f32 0.0, %v1071
        %1073 = vmatprep.mubr.bf16.mxu0 0
        %1074 = vmatmul.mubr.bf16.gmra.mrb[0].mxu0 %v980
        %v1075 = vpop.f32.mrb[0].mxu0
        %v1076 = vadd.f32 0.0, %v1075
        %v1077 = vpop.f32.mrb[0].mxu0
        %v1078 = vadd.f32 0.0, %v1077
        %v1079 = vpop.f32.mrb[0].mxu0
        %v1080 = vadd.f32 0.0, %v1079
        %v1081 = vpop.f32.mrb[0].mxu0
        %v1082 = vadd.f32 0.0, %v1081
        %1083 = vmatprep.mubr.bf16.mxu0 0
        %1084 = vmatmul.mubr.bf16.gmra.mrb[0].mxu0 %v983
        %v1085 = vpop.f32.mrb[0].mxu0
        %v1086 = vadd.f32 0.0, %v1085
        %v1087 = vpop.f32.mrb[0].mxu0
        %v1088 = vadd.f32 0.0, %v1087
        %v1089 = vpop.f32.mrb[0].mxu0
        %v1090 = vadd.f32 0.0, %v1089
        %v1091 = vpop.f32.mrb[0].mxu0
        %v1092 = vadd.f32 0.0, %v1091
        %1093 = vmatprep.mubr.bf16.mxu0 0
        %1094 = vmatmul.mubr.bf16.gmra.mrb[0].mxu0 %v986
        %v1095 = vpop.f32.mrb[0].mxu0
        %v1096 = vadd.f32 0.0, %v1095
        %v1097 = vpop.f32.mrb[0].mxu0
        %v1098 = vadd.f32 0.0, %v1097
        %v1099 = vpop.f32.mrb[0].mxu0
        %v1100 = vadd.f32 0.0, %v1099
        %v1101 = vpop.f32.mrb[0].mxu0
        %v1102 = vadd.f32 0.0, %v1101
        %1103 = vmatprep.mubr.bf16.mxu0 0
        %1104 = vmatmul.mubr.bf16.gmra.mrb[0].mxu0 %v989
        %v1105 = vpop.f32.mrb[0].mxu0
        %v1106 = vadd.f32 0.0, %v1105
        %v1107 = vpop.f32.mrb[0].mxu0
        %v1108 = vadd.f32 0.0, %v1107
        %v1109 = vpop.f32.mrb[0].mxu0
        %v1110 = vadd.f32 0.0, %v1109
        %v1111 = vpop.f32.mrb[0].mxu0
        %v1112 = vadd.f32 0.0, %v1111
        %1113 = vmatprep.mubr.bf16.mxu0 0
        %1114 = vmatmul.mubr.bf16.gmra.mrb[0].mxu0 %v992
        %v1115 = vpop.f32.mrb[0].mxu0
        %v1116 = vadd.f32 0.0, %v1115
        %v1117 = vpop.f32.mrb[0].mxu0
        %v1118 = vadd.f32 0.0, %v1117
        %v1119 = vpop.f32.mrb[0].mxu0
        %v1120 = vadd.f32 0.0, %v1119
        %v1121 = vpop.f32.mrb[0].mxu0
        %v1122 = vadd.f32 0.0, %v1121
        %1123 = vmatprep.mubr.bf16.mxu0 0
        %1124 = vmatmul.mubr.bf16.gmra.mrb[0].mxu0 %v995
        %v1125 = vpop.f32.mrb[0].mxu0
        %v1126 = vadd.f32 0.0, %v1125
        %v1127 = vpop.f32.mrb[0].mxu0
        %v1128 = vadd.f32 0.0, %v1127
        %v1129 = vpop.f32.mrb[0].mxu0
        %v1130 = vadd.f32 0.0, %v1129
        %v1131 = vpop.f32.mrb[0].mxu0
        %v1132 = vadd.f32 0.0, %v1131
        %1133 = vmatprep.mubr.bf16.mxu0 0
        %1134 = vmatmul.mubr.bf16.gmra.mrb[0].mxu0 %v998
        %v1135 = vpop.f32.mrb[0].mxu0
        %v1136 = vadd.f32 0.0, %v1135
        %v1137 = vpop.f32.mrb[0].mxu0
        %v1138 = vadd.f32 0.0, %v1137
        %v1139 = vpop.f32.mrb[0].mxu0
        %v1140 = vadd.f32 0.0, %v1139
        %v1141 = vpop.f32.mrb[0].mxu0
        %v1142 = vadd.f32 0.0, %v1141
        %1143 = vmatprep.mubr.bf16.mxu0 0
        %1144 = vmatmul.mubr.bf16.gmra.mrb[0].mxu0 %v1001
        %v1145 = vpop.f32.mrb[0].mxu0
        %v1146 = vadd.f32 0.0, %v1145
        %v1147 = vpop.f32.mrb[0].mxu0
        %v1148 = vadd.f32 0.0, %v1147
        %v1149 = vpop.f32.mrb[0].mxu0
        %v1150 = vadd.f32 0.0, %v1149
        %v1151 = vpop.f32.mrb[0].mxu0
        %v1152 = vadd.f32 0.0, %v1151
        %1153 = vmatprep.mubr.bf16.mxu0 0
        %1154 = vmatmul.mubr.bf16.gmra.mrb[0].mxu0 %v1004
        %v1155 = vpop.f32.mrb[0].mxu0
        %v1156 = vadd.f32 0.0, %v1155
        %v1157 = vpop.f32.mrb[0].mxu0
        %v1158 = vadd.f32 0.0, %v1157
        %v1159 = vpop.f32.mrb[0].mxu0
        %v1160 = vadd.f32 0.0, %v1159
        %v1161 = vpop.f32.mrb[0].mxu0
        %v1162 = vadd.f32 0.0, %v1161
        %1163 = vmatprep.mubr.bf16.mxu0 0
        %1164 = vmatmul.mubr.bf16.gmra.mrb[0].mxu0 %v1007
        %v1165 = vpop.f32.mrb[0].mxu0
        %v1166 = vadd.f32 0.0, %v1165
        %v1167 = vpop.f32.mrb[0].mxu0
        %v1168 = vadd.f32 0.0, %v1167
        %v1169 = vpop.f32.mrb[0].mxu0
        %v1170 = vadd.f32 0.0, %v1169
        %v1171 = vpop.f32.mrb[0].mxu0
        %v1172 = vadd.f32 0.0, %v1171
        %1173 = vmatprep.mubr.bf16.mxu0 0
        %1174 = vmatmul.mubr.bf16.gmra.mrb[0].mxu0 %v1010
        %v1175 = vpop.f32.mrb[0].mxu0
        %v1176 = vadd.f32 0.0, %v1175
        %v1177 = vpop.f32.mrb[0].mxu0
        %v1178 = vadd.f32 0.0, %v1177
        %v1179 = vpop.f32.mrb[0].mxu0
        %v1180 = vadd.f32 0.0, %v1179
        %v1181 = vpop.f32.mrb[0].mxu0
        %v1182 = vadd.f32 0.0, %v1181
        %1183 = vmatprep.mubr.bf16.mxu0 0
        %1184 = vmatmul.mubr.bf16.gmra.mrb[0].mxu0 %v1013
        %v1185 = vpop.f32.mrb[0].mxu0
        %v1186 = vadd.f32 0.0, %v1185
        %v1187 = vpop.f32.mrb[0].mxu0
        %v1188 = vadd.f32 0.0, %v1187
        %v1189 = vpop.f32.mrb[0].mxu0
        %v1190 = vadd.f32 0.0, %v1189
        %v1191 = vpop.f32.mrb[0].mxu0
        %v1192 = vadd.f32 0.0, %v1191
        %1193 = vmatprep.mubr.bf16.mxu0 0
        %1194 = vmatmul.mubr.bf16.gmra.mrb[0].mxu0 %v1016
        %v1195 = vpop.f32.mrb[0].mxu0
        %v1196 = vadd.f32 0.0, %v1195
        %v1197 = vpop.f32.mrb[0].mxu0
        %v1198 = vadd.f32 0.0, %v1197
        %v1199 = vpop.f32.mrb[0].mxu0
        %v1200 = vadd.f32 0.0, %v1199
        %v1201 = vpop.f32.mrb[0].mxu0
        %v1202 = vadd.f32 0.0, %v1201
        %1203 = vmatprep.mubr.bf16.mxu0 0
        %1204 = vmatmul.mubr.bf16.gmra.mrb[0].mxu0 %v1019
        %v1205 = vpop.f32.mrb[0].mxu0
        %v1206 = vadd.f32 0.0, %v1205
        %v1207 = vpop.f32.mrb[0].mxu0
        %v1208 = vadd.f32 0.0, %v1207
        %v1209 = vpop.f32.mrb[0].mxu0
        %v1210 = vadd.f32 0.0, %v1209
        %v1211 = vpop.f32.mrb[0].mxu0
        %v1212 = vadd.f32 0.0, %v1211
        %1213 = vdwg.mxu0
        %v1214 = vmax.f32 %v1056, %v1066
        %v1215 = vmax.f32 %v1060, %v1070
        %v1216 = vmax.f32 %v1214, %v1076
        %v1217 = vmax.f32 %v1215, %v1080
        %v1218 = vmax.f32 %v1216, %v1086
        %v1219 = vmax.f32 %v1217, %v1090
        %v1220 = vmax.f32 %v1218, %v1096
        %v1221 = vmax.f32 %v1219, %v1100
        %v1222 = vmax.f32 %v1220, %v1106
        %v1223 = vmax.f32 %v1221, %v1110
        %v1224 = vmax.f32 %v1222, %v1116
        %v1225 = vmax.f32 %v1223, %v1120
        %v1226 = vmax.f32 %v1224, %v1126
        %v1227 = vmax.f32 %v1225, %v1130
        %v1228 = vmax.f32 %v1226, %v1136
        %v1229 = vmax.f32 %v1227, %v1140
        %v1230 = vmax.f32 %v1228, %v1146
        %v1231 = vmax.f32 %v1229, %v1150
        %v1232 = vmax.f32 %v1230, %v1156
        %v1233 = vmax.f32 %v1231, %v1160
        %v1234 = vmax.f32 %v1232, %v1166
        %v1235 = vmax.f32 %v1233, %v1170
        %v1236 = vmax.f32 %v1234, %v1176
        %v1237 = vmax.f32 %v1235, %v1180
        %v1238 = vmax.f32 %v1236, %v1186
        %v1239 = vmax.f32 %v1237, %v1190
        %v1240 = vmax.f32 %v1238, %v1196
        %v1241 = vmax.f32 %v1239, %v1200
        %v1242 = vmax.f32 %v1240, %v1206
        %v1243 = vmax.f32 %v1241, %v1210
        %v1244 = vmax.f32 %v1242, %v1243
        %v1245 = vrot.slane %v1244, 4
        %v1246 = vmax.f32 %v1244, %v1245
        %v1247 = vrot.slane %v1246, 2
        %v1248 = vmax.f32 %v1246, %v1247
        %v1249 = vrot.slane %v1248, 1
        %v1250 = vmax.f32 %v1248, %v1249
        %v1251 = vmax.f32 %v1058, %v1068
        %v1252 = vmax.f32 %v1062, %v1072
        %v1253 = vmax.f32 %v1251, %v1078
        %v1254 = vmax.f32 %v1252, %v1082
        %v1255 = vmax.f32 %v1253, %v1088
        %v1256 = vmax.f32 %v1254, %v1092
        %v1257 = vmax.f32 %v1255, %v1098
        %v1258 = vmax.f32 %v1256, %v1102
        %v1259 = vmax.f32 %v1257, %v1108
        %v1260 = vmax.f32 %v1258, %v1112
        %v1261 = vmax.f32 %v1259, %v1118
        %v1262 = vmax.f32 %v1260, %v1122
        %v1263 = vmax.f32 %v1261, %v1128
        %v1264 = vmax.f32 %v1262, %v1132
        %v1265 = vmax.f32 %v1263, %v1138
        %v1266 = vmax.f32 %v1264, %v1142
        %v1267 = vmax.f32 %v1265, %v1148
        %v1268 = vmax.f32 %v1266, %v1152
        %v1269 = vmax.f32 %v1267, %v1158
        %v1270 = vmax.f32 %v1268, %v1162
        %v1271 = vmax.f32 %v1269, %v1168
        %v1272 = vmax.f32 %v1270, %v1172
        %v1273 = vmax.f32 %v1271, %v1178
        %v1274 = vmax.f32 %v1272, %v1182
        %v1275 = vmax.f32 %v1273, %v1188
        %v1276 = vmax.f32 %v1274, %v1192
        %v1277 = vmax.f32 %v1275, %v1198
        %v1278 = vmax.f32 %v1276, %v1202
        %v1279 = vmax.f32 %v1277, %v1208
        %v1280 = vmax.f32 %v1278, %v1212
        %v1281 = vmax.f32 %v1279, %v1280
        %v1282 = vrot.slane %v1281, 4
        %v1283 = vmax.f32 %v1281, %v1282
        %v1284 = vrot.slane %v1283, 2
        %v1285 = vmax.f32 %v1283, %v1284
        %v1286 = vrot.slane %v1285, 1
        %v1287 = vmax.f32 %v1285, %v1286
        %v1288 = vsub.f32 %v1056, %v1250
        %v1289 = vsub.f32 %v1058, %v1287
        %v1290 = vsub.f32 %v1060, %v1250
        %v1291 = vsub.f32 %v1062, %v1287
        %v1292 = vsub.f32 %v1066, %v1250
        %v1293 = vsub.f32 %v1068, %v1287
        %v1294 = vsub.f32 %v1070, %v1250
        %v1295 = vsub.f32 %v1072, %v1287
        %v1296 = vsub.f32 %v1076, %v1250
        %v1297 = vsub.f32 %v1078, %v1287
        %v1298 = vsub.f32 %v1080, %v1250
        %v1299 = vsub.f32 %v1082, %v1287
        %v1300 = vsub.f32 %v1086, %v1250
        %v1301 = vsub.f32 %v1088, %v1287
        %v1302 = vsub.f32 %v1090, %v1250
        %v1303 = vsub.f32 %v1092, %v1287
        %v1304 = vsub.f32 %v1096, %v1250
        %v1305 = vsub.f32 %v1098, %v1287
        %v1306 = vsub.f32 %v1100, %v1250
        %v1307 = vsub.f32 %v1102, %v1287
        %v1308 = vsub.f32 %v1106, %v1250
        %v1309 = vsub.f32 %v1108, %v1287
        %v1310 = vsub.f32 %v1110, %v1250
        %v1311 = vsub.f32 %v1112, %v1287
        %v1312 = vsub.f32 %v1116, %v1250
        %v1313 = vsub.f32 %v1118, %v1287
        %v1314 = vsub.f32 %v1120, %v1250
        %v1315 = vsub.f32 %v1122, %v1287
        %v1316 = vsub.f32 %v1126, %v1250
        %v1317 = vsub.f32 %v1128, %v1287
        %v1318 = vsub.f32 %v1130, %v1250
        %v1319 = vsub.f32 %v1132, %v1287
        %v1320 = vsub.f32 %v1136, %v1250
        %v1321 = vsub.f32 %v1138, %v1287
        %v1322 = vsub.f32 %v1140, %v1250
        %v1323 = vsub.f32 %v1142, %v1287
        %v1324 = vsub.f32 %v1146, %v1250
        %v1325 = vsub.f32 %v1148, %v1287
        %v1326 = vsub.f32 %v1150, %v1250
        %v1327 = vsub.f32 %v1152, %v1287
        %v1328 = vsub.f32 %v1156, %v1250
        %v1329 = vsub.f32 %v1158, %v1287
        %v1330 = vsub.f32 %v1160, %v1250
        %v1331 = vsub.f32 %v1162, %v1287
        %v1332 = vsub.f32 %v1166, %v1250
        %v1333 = vsub.f32 %v1168, %v1287
        %v1334 = vsub.f32 %v1170, %v1250
        %v1335 = vsub.f32 %v1172, %v1287
        %v1336 = vsub.f32 %v1176, %v1250
        %v1337 = vsub.f32 %v1178, %v1287
        %v1338 = vsub.f32 %v1180, %v1250
        %v1339 = vsub.f32 %v1182, %v1287
        %v1340 = vsub.f32 %v1186, %v1250
        %v1341 = vsub.f32 %v1188, %v1287
        %v1342 = vsub.f32 %v1190, %v1250
        %v1343 = vsub.f32 %v1192, %v1287
        %v1344 = vsub.f32 %v1196, %v1250
        %v1345 = vsub.f32 %v1198, %v1287
        %v1346 = vsub.f32 %v1200, %v1250
        %v1347 = vsub.f32 %v1202, %v1287
        %v1348 = vsub.f32 %v1206, %v1250
        %v1349 = vsub.f32 %v1208, %v1287
        %v1350 = vsub.f32 %v1210, %v1250
        %v1351 = vsub.f32 %v1212, %v1287
        %v1352 = vmul.f32 %v1288, 1.442695
        %v1353 = vpow.pop %v1352
        %v1354 = vmul.f32 %v1289, 1.442695
        %v1355 = vpow.pop %v1354
        %v1356 = vmul.f32 %v1290, 1.442695
        %v1357 = vpow.pop %v1356
        %v1358 = vmul.f32 %v1291, 1.442695
        %v1359 = vpow.pop %v1358
        %v1360 = vmul.f32 %v1292, 1.442695
        %v1361 = vpow.pop %v1360
        %v1362 = vmul.f32 %v1293, 1.442695
        %v1363 = vpow.pop %v1362
        %v1364 = vmul.f32 %v1294, 1.442695
        %v1365 = vpow.pop %v1364
        %v1366 = vmul.f32 %v1295, 1.442695
        %v1367 = vpow.pop %v1366
        %v1368 = vmul.f32 %v1296, 1.442695
        %v1369 = vpow.pop %v1368
        %v1370 = vmul.f32 %v1297, 1.442695
        %v1371 = vpow.pop %v1370
        %v1372 = vmul.f32 %v1298, 1.442695
        %v1373 = vpow.pop %v1372
        %v1374 = vmul.f32 %v1299, 1.442695
        %v1375 = vpow.pop %v1374
        %v1376 = vmul.f32 %v1300, 1.442695
        %v1377 = vpow.pop %v1376
        %v1378 = vmul.f32 %v1301, 1.442695
        %v1379 = vpow.pop %v1378
        %v1380 = vmul.f32 %v1302, 1.442695
        %v1381 = vpow.pop %v1380
        %v1382 = vmul.f32 %v1303, 1.442695
        %v1383 = vpow.pop %v1382
        %v1384 = vmul.f32 %v1304, 1.442695
        %v1385 = vpow.pop %v1384
        %v1386 = vmul.f32 %v1305, 1.442695
        %v1387 = vpow.pop %v1386
        %v1388 = vmul.f32 %v1306, 1.442695
        %v1389 = vpow.pop %v1388
        %v1390 = vmul.f32 %v1307, 1.442695
        %v1391 = vpow.pop %v1390
        %v1392 = vmul.f32 %v1308, 1.442695
        %v1393 = vpow.pop %v1392
        %v1394 = vmul.f32 %v1309, 1.442695
        %v1395 = vpow.pop %v1394
        %v1396 = vmul.f32 %v1310, 1.442695
        %v1397 = vpow.pop %v1396
        %v1398 = vmul.f32 %v1311, 1.442695
        %v1399 = vpow.pop %v1398
        %v1400 = vmul.f32 %v1312, 1.442695
        %v1401 = vpow.pop %v1400
        %v1402 = vmul.f32 %v1313, 1.442695
        %v1403 = vpow.pop %v1402
        %v1404 = vmul.f32 %v1314, 1.442695
        %v1405 = vpow.pop %v1404
        %v1406 = vmul.f32 %v1315, 1.442695
        %v1407 = vpow.pop %v1406
        %v1408 = vmul.f32 %v1316, 1.442695
        %v1409 = vpow.pop %v1408
        %v1410 = vmul.f32 %v1317, 1.442695
        %v1411 = vpow.pop %v1410
        %v1412 = vmul.f32 %v1318, 1.442695
        %v1413 = vpow.pop %v1412
        %v1414 = vmul.f32 %v1319, 1.442695
        %v1415 = vpow.pop %v1414
        %v1416 = vmul.f32 %v1320, 1.442695
        %v1417 = vpow.pop %v1416
        %v1418 = vmul.f32 %v1321, 1.442695
        %v1419 = vpow.pop %v1418
        %v1420 = vmul.f32 %v1322, 1.442695
        %v1421 = vpow.pop %v1420
        %v1422 = vmul.f32 %v1323, 1.442695
        %v1423 = vpow.pop %v1422
        %v1424 = vmul.f32 %v1324, 1.442695
        %v1425 = vpow.pop %v1424
        %v1426 = vmul.f32 %v1325, 1.442695
        %v1427 = vpow.pop %v1426
        %v1428 = vmul.f32 %v1326, 1.442695
        %v1429 = vpow.pop %v1428
        %v1430 = vmul.f32 %v1327, 1.442695
        %v1431 = vpow.pop %v1430
        %v1432 = vmul.f32 %v1328, 1.442695
        %v1433 = vpow.pop %v1432
        %v1434 = vmul.f32 %v1329, 1.442695
        %v1435 = vpow.pop %v1434
        %v1436 = vmul.f32 %v1330, 1.442695
        %v1437 = vpow.pop %v1436
        %v1438 = vmul.f32 %v1331, 1.442695
        %v1439 = vpow.pop %v1438
        %v1440 = vmul.f32 %v1332, 1.442695
        %v1441 = vpow.pop %v1440
        %v1442 = vmul.f32 %v1333, 1.442695
        %v1443 = vpow.pop %v1442
        %v1444 = vmul.f32 %v1334, 1.442695
        %v1445 = vpow.pop %v1444
        %v1446 = vmul.f32 %v1335, 1.442695
        %v1447 = vpow.pop %v1446
        %v1448 = vmul.f32 %v1336, 1.442695
        %v1449 = vpow.pop %v1448
        %v1450 = vmul.f32 %v1337, 1.442695
        %v1451 = vpow.pop %v1450
        %v1452 = vmul.f32 %v1338, 1.442695
        %v1453 = vpow.pop %v1452
        %v1454 = vmul.f32 %v1339, 1.442695
        %v1455 = vpow.pop %v1454
        %v1456 = vmul.f32 %v1340, 1.442695
        %v1457 = vpow.pop %v1456
        %v1458 = vmul.f32 %v1341, 1.442695
        %v1459 = vpow.pop %v1458
        %v1460 = vmul.f32 %v1342, 1.442695
        %v1461 = vpow.pop %v1460
        %v1462 = vmul.f32 %v1343, 1.442695
        %v1463 = vpow.pop %v1462
        %v1464 = vmul.f32 %v1344, 1.442695
        %v1465 = vpow.pop %v1464
        %v1466 = vmul.f32 %v1345, 1.442695
        %v1467 = vpow.pop %v1466
        %v1468 = vmul.f32 %v1346, 1.442695
        %v1469 = vpow.pop %v1468
        %v1470 = vmul.f32 %v1347, 1.442695
        %v1471 = vpow.pop %v1470
        %v1472 = vmul.f32 %v1348, 1.442695
        %v1473 = vpow.pop %v1472
        %v1474 = vmul.f32 %v1349, 1.442695
        %v1475 = vpow.pop %v1474
        %v1476 = vmul.f32 %v1350, 1.442695
        %v1477 = vpow.pop %v1476
        %v1478 = vmul.f32 %v1351, 1.442695
        %v1479 = vpow.pop %v1478
        %v1480 = vadd.f32 %v1353, %v1357
        %v1481 = vadd.f32 %v1480, %v1361
        %v1482 = vadd.f32 %v1481, %v1365
        %v1483 = vadd.f32 %v1482, %v1369
        %v1484 = vadd.f32 %v1483, %v1373
        %v1485 = vadd.f32 %v1484, %v1377
        %v1486 = vadd.f32 %v1485, %v1381
        %v1487 = vadd.f32 %v1486, %v1385
        %v1488 = vadd.f32 %v1487, %v1389
        %v1489 = vadd.f32 %v1488, %v1393
        %v1490 = vadd.f32 %v1489, %v1397
        %v1491 = vadd.f32 %v1490, %v1401
        %v1492 = vadd.f32 %v1491, %v1405
        %v1493 = vadd.f32 %v1492, %v1409
        %v1494 = vadd.f32 %v1493, %v1413
        %v1495 = vadd.f32 %v1494, %v1417
        %v1496 = vadd.f32 %v1495, %v1421
        %v1497 = vadd.f32 %v1496, %v1425
        %v1498 = vadd.f32 %v1497, %v1429
        %v1499 = vadd.f32 %v1498, %v1433
        %v1500 = vadd.f32 %v1499, %v1437
        %v1501 = vadd.f32 %v1500, %v1441
        %v1502 = vadd.f32 %v1501, %v1445
        %v1503 = vadd.f32 %v1502, %v1449
        %v1504 = vadd.f32 %v1503, %v1453
        %v1505 = vadd.f32 %v1504, %v1457
        %v1506 = vadd.f32 %v1505, %v1461
        %v1507 = vadd.f32 %v1506, %v1465
        %v1508 = vadd.f32 %v1507, %v1469
        %v1509 = vadd.f32 %v1508, %v1473
        %v1510 = vadd.f32 %v1509, %v1477
        %v1511 = vrot.slane %v1510, 4
        %v1512 = vadd.f32 %v1510, %v1511
        %v1513 = vrot.slane %v1512, 2
        %v1514 = vadd.f32 %v1512, %v1513
        %v1515 = vrot.slane %v1514, 1
        %v1516 = vadd.f32 %v1514, %v1515
        %v1517 = vadd.f32 %v1355, %v1359
        %v1518 = vadd.f32 %v1517, %v1363
        %v1519 = vadd.f32 %v1518, %v1367
        %v1520 = vadd.f32 %v1519, %v1371
        %v1521 = vadd.f32 %v1520, %v1375
        %v1522 = vadd.f32 %v1521, %v1379
        %v1523 = vadd.f32 %v1522, %v1383
        %v1524 = vadd.f32 %v1523, %v1387
        %v1525 = vadd.f32 %v1524, %v1391
        %v1526 = vadd.f32 %v1525, %v1395
        %v1527 = vadd.f32 %v1526, %v1399
        %v1528 = vadd.f32 %v1527, %v1403
        %v1529 = vadd.f32 %v1528, %v1407
        %v1530 = vadd.f32 %v1529, %v1411
        %v1531 = vadd.f32 %v1530, %v1415
        %v1532 = vadd.f32 %v1531, %v1419
        %v1533 = vadd.f32 %v1532, %v1423
        %v1534 = vadd.f32 %v1533, %v1427
        %v1535 = vadd.f32 %v1534, %v1431
        %v1536 = vadd.f32 %v1535, %v1435
        %v1537 = vadd.f32 %v1536, %v1439
        %v1538 = vadd.f32 %v1537, %v1443
        %v1539 = vadd.f32 %v1538, %v1447
        %v1540 = vadd.f32 %v1539, %v1451
        %v1541 = vadd.f32 %v1540, %v1455
        %v1542 = vadd.f32 %v1541, %v1459
        %v1543 = vadd.f32 %v1542, %v1463
        %v1544 = vadd.f32 %v1543, %v1467
        %v1545 = vadd.f32 %v1544, %v1471
        %v1546 = vadd.f32 %v1545, %v1475
        %v1547 = vadd.f32 %v1546, %v1479
        %v1548 = vrot.slane %v1547, 4
        %v1549 = vadd.f32 %v1547, %v1548
        %v1550 = vrot.slane %v1549, 2
        %v1551 = vadd.f32 %v1549, %v1550
        %v1552 = vrot.slane %v1551, 1
        %v1553 = vadd.f32 %v1551, %v1552
        %v1554 = vrcp.pop %v1516
        %v1555 = vrcp.pop %v1553
        %v1556 = vmul.f32 %v1353, %v1554
        %v1557 = vmul.f32 %v1355, %v1555
        %v1558 = vmul.f32 %v1357, %v1554
        %v1559 = vmul.f32 %v1359, %v1555
        %v1560 = vmul.f32 %v1361, %v1554
        %v1561 = vmul.f32 %v1363, %v1555
        %v1562 = vmul.f32 %v1365, %v1554
        %v1563 = vmul.f32 %v1367, %v1555
        %v1564 = vmul.f32 %v1369, %v1554
        %v1565 = vmul.f32 %v1371, %v1555
        %v1566 = vmul.f32 %v1373, %v1554
        %v1567 = vmul.f32 %v1375, %v1555
        %v1568 = vmul.f32 %v1377, %v1554
        %v1569 = vmul.f32 %v1379, %v1555
        %v1570 = vmul.f32 %v1381, %v1554
        %v1571 = vmul.f32 %v1383, %v1555
        %v1572 = vmul.f32 %v1385, %v1554
        %v1573 = vmul.f32 %v1387, %v1555
        %v1574 = vmul.f32 %v1389, %v1554
        %v1575 = vmul.f32 %v1391, %v1555
        %v1576 = vmul.f32 %v1393, %v1554
        %v1577 = vmul.f32 %v1395, %v1555
        %v1578 = vmul.f32 %v1397, %v1554
        %v1579 = vmul.f32 %v1399, %v1555
        %v1580 = vmul.f32 %v1401, %v1554
        %v1581 = vmul.f32 %v1403, %v1555
        %v1582 = vmul.f32 %v1405, %v1554
        %v1583 = vmul.f32 %v1407, %v1555
        %v1584 = vmul.f32 %v1409, %v1554
        %v1585 = vmul.f32 %v1411, %v1555
        %v1586 = vmul.f32 %v1413, %v1554
        %v1587 = vmul.f32 %v1415, %v1555
        %v1588 = vmul.f32 %v1417, %v1554
        %v1589 = vmul.f32 %v1419, %v1555
        %v1590 = vmul.f32 %v1421, %v1554
        %v1591 = vmul.f32 %v1423, %v1555
        %v1592 = vmul.f32 %v1425, %v1554
        %v1593 = vmul.f32 %v1427, %v1555
        %v1594 = vmul.f32 %v1429, %v1554
        %v1595 = vmul.f32 %v1431, %v1555
        %v1596 = vmul.f32 %v1433, %v1554
        %v1597 = vmul.f32 %v1435, %v1555
        %v1598 = vmul.f32 %v1437, %v1554
        %v1599 = vmul.f32 %v1439, %v1555
        %v1600 = vmul.f32 %v1441, %v1554
        %v1601 = vmul.f32 %v1443, %v1555
        %v1602 = vmul.f32 %v1445, %v1554
        %v1603 = vmul.f32 %v1447, %v1555
        %v1604 = vmul.f32 %v1449, %v1554
        %v1605 = vmul.f32 %v1451, %v1555
        %v1606 = vmul.f32 %v1453, %v1554
        %v1607 = vmul.f32 %v1455, %v1555
        %v1608 = vmul.f32 %v1457, %v1554
        %v1609 = vmul.f32 %v1459, %v1555
        %v1610 = vmul.f32 %v1461, %v1554
        %v1611 = vmul.f32 %v1463, %v1555
        %v1612 = vmul.f32 %v1465, %v1554
        %v1613 = vmul.f32 %v1467, %v1555
        %v1614 = vmul.f32 %v1469, %v1554
        %v1615 = vmul.f32 %v1471, %v1555
        %v1616 = vmul.f32 %v1473, %v1554
        %v1617 = vmul.f32 %v1475, %v1555
        %v1618 = vmul.f32 %v1477, %v1554
        %v1619 = vmul.f32 %v1479, %v1555
        %v1620 = vpack.c.bf16 %v1558, %v1556
        %v1621 = vpack.c.bf16 %v1559, %v1557
        %v1622 = vpack.c.bf16 %v1562, %v1560
        %v1623 = vpack.c.bf16 %v1563, %v1561
        %v1624 = vpack.c.bf16 %v1566, %v1564
        %v1625 = vpack.c.bf16 %v1567, %v1565
        %v1626 = vpack.c.bf16 %v1570, %v1568
        %v1627 = vpack.c.bf16 %v1571, %v1569
        %v1628 = vpack.c.bf16 %v1574, %v1572
        %v1629 = vpack.c.bf16 %v1575, %v1573
        %v1630 = vpack.c.bf16 %v1578, %v1576
        %v1631 = vpack.c.bf16 %v1579, %v1577
        %v1632 = vpack.c.bf16 %v1582, %v1580
        %v1633 = vpack.c.bf16 %v1583, %v1581
        %v1634 = vpack.c.bf16 %v1586, %v1584
        %v1635 = vpack.c.bf16 %v1587, %v1585
        %v1636 = vpack.c.bf16 %v1590, %v1588
        %v1637 = vpack.c.bf16 %v1591, %v1589
        %v1638 = vpack.c.bf16 %v1594, %v1592
        %v1639 = vpack.c.bf16 %v1595, %v1593
        %v1640 = vpack.c.bf16 %v1598, %v1596
        %v1641 = vpack.c.bf16 %v1599, %v1597
        %v1642 = vpack.c.bf16 %v1602, %v1600
        %v1643 = vpack.c.bf16 %v1603, %v1601
        %v1644 = vpack.c.bf16 %v1606, %v1604
        %v1645 = vpack.c.bf16 %v1607, %v1605
        %v1646 = vpack.c.bf16 %v1610, %v1608
        %v1647 = vpack.c.bf16 %v1611, %v1609
        %v1648 = vpack.c.bf16 %v1614, %v1612
        %v1649 = vpack.c.bf16 %v1615, %v1613
        %v1650 = vpack.c.bf16 %v1618, %v1616
        %v1651 = vpack.c.bf16 %v1619, %v1617
        %s1652 = sld [smem:[#allocation3]]
        %v1653 = vld [vmem:[%s8] sm:$0xf]
        %v1654 = vld [vmem:[%s8 + $0x4] sm:$0xf]
        %v1655 = vld [vmem:[%s8 + $0x8] sm:$0xf]
        %v1656 = vld [vmem:[%s8 + $0xc] sm:$0xf]
        %v1657 = vpack.c.bf16 %v721, %v719
        %v1658 = vpack.c.bf16 %v722, %v720
        %v1659 = vpack.c.bf16 %v725, %v723
        %v1660 = vpack.c.bf16 %v726, %v724
        %v1661 = vld [vmem:[%s9] sm:$0xff]
        %v1662 = vld [vmem:[%s9 + $0x8] sm:$0xff]
        %v1663 = vld [vmem:[%s9 + $0x10] sm:$0xff]
        %v1664 = vld [vmem:[%s9 + $0x18] sm:$0xff]
        %1666 = vset.pattern.permute.xlu0 0
        %1667 = vperm.xlu0 %1666, %v1661
        %v1668 = vpop.permute.xlu0 %1667
        %1671 = vset.pattern.permute.xlu0 0
        %1672 = vperm.xlu0 %1671, %v1662
        %v1673 = vpop.permute.xlu0 %1672
        %1676 = vset.pattern.permute.xlu0 0
        %1677 = vperm.xlu0 %1676, %v1663
        %v1678 = vpop.permute.xlu0 %1677
        %1681 = vset.pattern.permute.xlu0 0
        %1682 = vperm.xlu0 %1681, %v1664
        %v1683 = vpop.permute.xlu0 %1682
        %v1689 = vunpack.c.l.b16 %v1653
        %v1690 = vunpack.c.l.b16 %v1654
        %v1691 = vunpack.c.l.b16 %v1655
        %v1692 = vunpack.c.l.b16 %v1656
        %v1693 = vpack.c.b16 %v1690, %v1689
        %v1694 = vpack.c.b16 %v1692, %v1691
        %v1696 = vsel %vm778, %v1693, 0
        %v1699 = vsel %vm778, %v1694, 0
        %1701 = vmatprep.subr.bf16.mxu0 %v1658
        %1702 = vmatpush1.bf16.msra.mxu0 %v1657
        %1703 = vmatprep.subr.bf16.mxu0 %v1660
        %1704 = vmatpush1.bf16.msra.mxu0 %v1659
        %1705 = vmatprep.subr.bf16.mxu0 0
        %1706 = vmatpush1.bf16.msra.mxu0 0
        %1707 = vmatprep.subr.bf16.mxu0 0
        %1708 = vmatpush1.bf16.msra.mxu0 0
        %1709 = vmatprep.subr.bf16.mxu0 0
        %1710 = vmatpush1.bf16.msra.mxu0 0
        %1711 = vmatprep.subr.bf16.mxu0 0
        %1712 = vmatpush1.bf16.msra.mxu0 0
        %1713 = vmatprep.subr.bf16.mxu0 0
        %1714 = vmatpush1.bf16.msra.mxu0 0
        %1715 = vmatprep.subr.bf16.mxu0 0
        %1716 = vmatpush1.bf16.msra.mxu0 0
        %1717 = vmatprep.subr.bf16.mxu0 0
        %1718 = vmatpush1.bf16.msra.mxu0 0
        %1719 = vmatprep.subr.bf16.mxu0 0
        %1720 = vmatpush1.bf16.msra.mxu0 0
        %1721 = vmatprep.subr.bf16.mxu0 0
        %1722 = vmatpush1.bf16.msra.mxu0 0
        %1723 = vmatprep.subr.bf16.mxu0 0
        %1724 = vmatpush1.bf16.msra.mxu0 0
        %1725 = vmatprep.subr.bf16.mxu0 0
        %1726 = vmatpush1.bf16.msra.mxu0 0
        %1727 = vmatprep.subr.bf16.mxu0 0
        %1728 = vmatpush1.bf16.msra.mxu0 0
        %1729 = vmatprep.subr.bf16.mxu0 0
        %1730 = vmatpush1.bf16.msra.mxu0 0
        %1731 = vmatprep.subr.bf16.mxu0 0
        %1732 = vmatpush1.bf16.msra.mxu0 0
        %1733 = vmatprep.mubr.bf16.mxu0 0
        %1734 = vmatmul.mubr.bf16.gmra.mrb[0].mxu0 %v1696
        %v1735 = vpop.f32.mrb[0].mxu0
        %v1736 = vadd.f32 %v1668, %v1735
        %v1737 = vpop.f32.mrb[0].mxu0
        %v1738 = vadd.f32 %v1668, %v1737
        %v1739 = vpop.f32.mrb[0].mxu0
        %v1740 = vadd.f32 %v1673, %v1739
        %v1741 = vpop.f32.mrb[0].mxu0
        %v1742 = vadd.f32 %v1673, %v1741
        %1743 = vmatprep.mubr.bf16.mxu0 0
        %1744 = vmatmul.mubr.bf16.gmra.mrb[0].mxu0 %v1699
        %v1745 = vpop.f32.mrb[0].mxu0
        %v1746 = vadd.f32 %v1678, %v1745
        %v1747 = vpop.f32.mrb[0].mxu0
        %v1748 = vadd.f32 %v1678, %v1747
        %v1749 = vpop.f32.mrb[0].mxu0
        %v1750 = vadd.f32 %v1683, %v1749
        %v1751 = vpop.f32.mrb[0].mxu0
        %v1752 = vadd.f32 %v1683, %v1751
        %1753 = vdwg.mxu0
        %v1754 = vpack.c.bf16 %v1740, %v1736
        %v1755 = vpack.c.bf16 %v1742, %v1738
        %v1756 = vpack.c.bf16 %v1750, %v1746
        %v1757 = vpack.c.bf16 %v1752, %v1748
        %1758 = vmatprep.subr.bf16.mxu0 %v1621
        %1759 = vmatpush1.bf16.msra.mxu0 %v1620
        %1760 = vmatprep.subr.bf16.mxu0 %v1623
        %1761 = vmatpush1.bf16.msra.mxu0 %v1622
        %1762 = vmatprep.subr.bf16.mxu0 %v1625
        %1763 = vmatpush1.bf16.msra.mxu0 %v1624
        %1764 = vmatprep.subr.bf16.mxu0 %v1627
        %1765 = vmatpush1.bf16.msra.mxu0 %v1626
        %1766 = vmatprep.subr.bf16.mxu0 %v1629
        %1767 = vmatpush1.bf16.msra.mxu0 %v1628
        %1768 = vmatprep.subr.bf16.mxu0 %v1631
        %1769 = vmatpush1.bf16.msra.mxu0 %v1630
        %1770 = vmatprep.subr.bf16.mxu0 %v1633
        %1771 = vmatpush1.bf16.msra.mxu0 %v1632
        %1772 = vmatprep.subr.bf16.mxu0 %v1635
        %1773 = vmatpush1.bf16.msra.mxu0 %v1634
        %1774 = vmatprep.subr.bf16.mxu0 %v1637
        %1775 = vmatpush1.bf16.msra.mxu0 %v1636
        %1776 = vmatprep.subr.bf16.mxu0 %v1639
        %1777 = vmatpush1.bf16.msra.mxu0 %v1638
        %1778 = vmatprep.subr.bf16.mxu0 %v1641
        %1779 = vmatpush1.bf16.msra.mxu0 %v1640
        %1780 = vmatprep.subr.bf16.mxu0 %v1643
        %1781 = vmatpush1.bf16.msra.mxu0 %v1642
        %1782 = vmatprep.subr.bf16.mxu0 %v1645
        %1783 = vmatpush1.bf16.msra.mxu0 %v1644
        %1784 = vmatprep.subr.bf16.mxu0 %v1647
        %1785 = vmatpush1.bf16.msra.mxu0 %v1646
        %1786 = vmatprep.subr.bf16.mxu0 %v1649
        %1787 = vmatpush1.bf16.msra.mxu0 %v1648
        %1788 = vmatprep.subr.bf16.mxu0 %v1651
        %1789 = vmatpush1.bf16.msra.mxu0 %v1650
        %1790 = vmatprep.mubr.bf16.mxu0 %v1755
        %1791 = vmatmul.mubr.bf16.gmra.mrb[0].mxu0 %v1754
        %v1792 = vpop.f32.mrb[0].mxu0
        %v1793 = vadd.f32 0.0, %v1792
        %v1794 = vpop.f32.mrb[0].mxu0
        %v1795 = vadd.f32 0.0, %v1794
        %v1796 = vpop.f32.mrb[0].mxu0
        %v1797 = vadd.f32 0.0, %v1796
        %v1798 = vpop.f32.mrb[0].mxu0
        %v1799 = vadd.f32 0.0, %v1798
        %1800 = vmatprep.mubr.bf16.mxu0 %v1757
        %1801 = vmatmul.mubr.bf16.gmra.mrb[0].mxu0 %v1756
        %v1802 = vpop.f32.mrb[0].mxu0
        %v1803 = vadd.f32 0.0, %v1802
        %v1804 = vpop.f32.mrb[0].mxu0
        %v1805 = vadd.f32 0.0, %v1804
        %v1806 = vpop.f32.mrb[0].mxu0
        %v1807 = vadd.f32 0.0, %v1806
        %v1808 = vpop.f32.mrb[0].mxu0
        %v1809 = vadd.f32 0.0, %v1808
        %1810 = vdwg.mxu0
        %v1811 = vstv %s1652
        %v1812 = vmul.f32 %v1811, %v1793
        %v1813 = vmul.f32 %v1811, %v1795
        %v1814 = vmul.f32 %v1811, %v1797
        %v1815 = vmul.f32 %v1811, %v1799
        %v1816 = vmul.f32 %v1811, %v1803
        %v1817 = vmul.f32 %v1811, %v1805
        %v1818 = vmul.f32 %v1811, %v1807
        %v1819 = vmul.f32 %v1811, %v1809
        %v1820 = vadd.f32 %v1812, %v719
        %v1821 = vadd.f32 %v1813, %v720
        %v1822 = vadd.f32 %v1814, %v721
        %v1823 = vadd.f32 %v1815, %v722
        %v1824 = vadd.f32 %v1816, %v723
        %v1825 = vadd.f32 %v1817, %v724
        %v1826 = vadd.f32 %v1818, %v725
        %v1827 = vadd.f32 %v1819, %v726
        %1836 = vrot.lane.b32.xlu0 %v1820, 17
        %v1837 = vpop.permute.xlu0 %1836
        %1838 = vrot.lane.b32.xlu0 %v1821, 17
        %v1839 = vpop.permute.xlu0 %1838
        %1840 = vrot.lane.b32.xlu0 %v1822, 17
        %v1841 = vpop.permute.xlu0 %1840
        %1842 = vrot.lane.b32.xlu0 %v1823, 17
        %v1843 = vpop.permute.xlu0 %1842
        %1844 = vrot.lane.b32.xlu0 %v1824, 17
        %v1845 = vpop.permute.xlu0 %1844
        %1846 = vrot.lane.b32.xlu0 %v1825, 17
        %v1847 = vpop.permute.xlu0 %1846
        %1848 = vrot.lane.b32.xlu0 %v1826, 17
        %v1849 = vpop.permute.xlu0 %1848
        %1850 = vrot.lane.b32.xlu0 %v1827, 17
        %v1851 = vpop.permute.xlu0 %1850
        %vm1852 = vcmask 138240
        %v1853 = vsel %vm1852, %v1837, %v1839
        %v1854 = vsel %vm1852, %v1841, %v1843
        %v1855 = vsel %vm1852, %v1845, %v1847
        %v1856 = vsel %vm1852, %v1849, %v1851
        %vm1865 = vcmask 1047688
        %1866 = vst.msk [vmem:[#allocation2] sm:$0xff] %vm1865, %v1837
        %1867 = vst [vmem:[#allocation2 + $0x8] sm:$0xff] %v1853
        %1868 = vst.msk [vmem:[#allocation2 + $0x10] sm:$0xff] %vm1865, %v1841
        %1869 = vst [vmem:[#allocation2 + $0x18] sm:$0xff] %v1854
        %1870 = vst.msk [vmem:[#allocation2 + $0x20] sm:$0xff] %vm1865, %v1845
        %1871 = vst [vmem:[#allocation2 + $0x28] sm:$0xff] %v1855
        %1872 = vst.msk [vmem:[#allocation2 + $0x30] sm:$0xff] %vm1865, %v1849
        %1873 = vst [vmem:[#allocation2 + $0x38] sm:$0xff] %v1856
        %1874 = vst.msk [vmem:[#allocation2] sm:$0xff] %vm1852, 0.0
        %1875 = vst.msk [vmem:[#allocation2 + $0x10] sm:$0xff] %vm1852, 0.0
        %1876 = vst.msk [vmem:[#allocation2 + $0x20] sm:$0xff] %vm1852, 0.0
        %1877 = vst.msk [vmem:[#allocation2 + $0x30] sm:$0xff] %vm1852, 0.0
        %v1878 = vld [vmem:[#allocation2] sm:$0xff]
        %v1879 = vld [vmem:[#allocation2 + $0x8] sm:$0xff]
        %v1880 = vld [vmem:[#allocation2 + $0x10] sm:$0xff]
        %v1881 = vld [vmem:[#allocation2 + $0x18] sm:$0xff]
        %v1882 = vld [vmem:[#allocation2 + $0x20] sm:$0xff]
        %v1883 = vld [vmem:[#allocation2 + $0x28] sm:$0xff]
        %v1884 = vld [vmem:[#allocation2 + $0x30] sm:$0xff]
        %v1885 = vld [vmem:[#allocation2 + $0x38] sm:$0xff]
        %v1886 = vld [vmem:[%s1] ss:$8 sm:$0x3]
        %v1888 = vlaneseq
        %v1889 = vshrl.u32 %v1888, 7
        %v1890 = vsub.s32 0, %v1889
        %v1891 = vrot.slane %v1886, %v1890
        %v1892 = vlaneseq
        %v1893 = vshrl.u32 %v1892, 7
        %v1894 = vsub.s32 1, %v1893
        %v1895 = vrot.slane %v1886, %v1894
        %v1898 = vmul.f32 %v1878, %v1891
        %v1899 = vmul.f32 %v1879, %v1895
        %v1900 = vmul.f32 %v1880, %v1891
        %v1901 = vmul.f32 %v1881, %v1895
        %v1902 = vmul.f32 %v1882, %v1891
        %v1903 = vmul.f32 %v1883, %v1895
        %v1904 = vmul.f32 %v1884, %v1891
        %v1905 = vmul.f32 %v1885, %v1895
        %v1906 = vpack.c.bf16 %v1900, %v1898
        %v1907 = vpack.c.bf16 %v1901, %v1899
        %v1908 = vpack.c.bf16 %v1904, %v1902
        %v1909 = vpack.c.bf16 %v1905, %v1903
        %v1910 = vld [vmem:[%s12] sm:$0xf]
        %v1911 = vld [vmem:[%s12 + $0x4] sm:$0xf]
        %v1912 = vld [vmem:[%s12 + $0x8] sm:$0xf]
        %v1913 = vld [vmem:[%s12 + $0xc] sm:$0xf]
        %1914 = vrot.lane.b32.xlu0 %v1820, 16
        %v1915 = vpop.permute.xlu0 %1914
        %1916 = vrot.lane.b32.xlu0 %v1821, 16
        %v1917 = vpop.permute.xlu0 %1916
        %1918 = vrot.lane.b32.xlu0 %v1822, 16
        %v1919 = vpop.permute.xlu0 %1918
        %1920 = vrot.lane.b32.xlu0 %v1823, 16
        %v1921 = vpop.permute.xlu0 %1920
        %1922 = vrot.lane.b32.xlu0 %v1824, 16
        %v1923 = vpop.permute.xlu0 %1922
        %1924 = vrot.lane.b32.xlu0 %v1825, 16
        %v1925 = vpop.permute.xlu0 %1924
        %1926 = vrot.lane.b32.xlu0 %v1826, 16
        %v1927 = vpop.permute.xlu0 %1926
        %1928 = vrot.lane.b32.xlu0 %v1827, 16
        %v1929 = vpop.permute.xlu0 %1928
        %v1930 = vsel %vm972, %v1915, %v1917
        %v1931 = vsel %vm972, %v1919, %v1921
        %v1932 = vsel %vm972, %v1923, %v1925
        %v1933 = vsel %vm972, %v1927, %v1929
        %vm1942 = vcmask 1047680
        %1943 = vst.msk [vmem:[#allocation2] sm:$0xff] %vm1942, %v1915
        %1944 = vst [vmem:[#allocation2 + $0x8] sm:$0xff] %v1930
        %1945 = vst.msk [vmem:[#allocation2 + $0x10] sm:$0xff] %vm1942, %v1919
        %1946 = vst [vmem:[#allocation2 + $0x18] sm:$0xff] %v1931
        %1947 = vst.msk [vmem:[#allocation2 + $0x20] sm:$0xff] %vm1942, %v1923
        %1948 = vst [vmem:[#allocation2 + $0x28] sm:$0xff] %v1932
        %1949 = vst.msk [vmem:[#allocation2 + $0x30] sm:$0xff] %vm1942, %v1927
        %1950 = vst [vmem:[#allocation2 + $0x38] sm:$0xff] %v1933
        %1951 = vst.msk [vmem:[#allocation2] sm:$0xff] %vm972, 0.0
        %1952 = vst.msk [vmem:[#allocation2 + $0x10] sm:$0xff] %vm972, 0.0
        %1953 = vst.msk [vmem:[#allocation2 + $0x20] sm:$0xff] %vm972, 0.0
        %1954 = vst.msk [vmem:[#allocation2 + $0x30] sm:$0xff] %vm972, 0.0
        %v1955 = vld [vmem:[#allocation2] sm:$0xff]
        %v1956 = vld [vmem:[#allocation2 + $0x8] sm:$0xff]
        %v1957 = vld [vmem:[#allocation2 + $0x10] sm:$0xff]
        %v1958 = vld [vmem:[#allocation2 + $0x18] sm:$0xff]
        %v1959 = vld [vmem:[#allocation2 + $0x20] sm:$0xff]
        %v1960 = vld [vmem:[#allocation2 + $0x28] sm:$0xff]
        %v1961 = vld [vmem:[#allocation2 + $0x30] sm:$0xff]
        %v1962 = vld [vmem:[#allocation2 + $0x38] sm:$0xff]
        %s1963 = scalar_lea.vmem %s1, 1
        %v1964 = vld [vmem:[%s1963] ss:$8 sm:$0x3]
        %v1966 = vlaneseq
        %v1967 = vshrl.u32 %v1966, 7
        %v1968 = vsub.s32 0, %v1967
        %v1969 = vrot.slane %v1964, %v1968
        %v1970 = vlaneseq
        %v1971 = vshrl.u32 %v1970, 7
        %v1972 = vsub.s32 1, %v1971
        %v1973 = vrot.slane %v1964, %v1972
        %v1976 = vmul.f32 %v1955, %v1969
        %v1977 = vmul.f32 %v1956, %v1973
        %v1978 = vmul.f32 %v1957, %v1969
        %v1979 = vmul.f32 %v1958, %v1973
        %v1980 = vmul.f32 %v1959, %v1969
        %v1981 = vmul.f32 %v1960, %v1973
        %v1982 = vmul.f32 %v1961, %v1969
        %v1983 = vmul.f32 %v1962, %v1973
        %v1984 = vpack.c.bf16 %v1978, %v1976
        %v1985 = vpack.c.bf16 %v1979, %v1977
        %v1986 = vpack.c.bf16 %v1982, %v1980
        %v1987 = vpack.c.bf16 %v1983, %v1981
        %s1988 = scalar_lea.vmem %s12, 16
        %v1989 = vld [vmem:[%s1988] sm:$0xf]
        %v1990 = vld [vmem:[%s1988 + $0x4] sm:$0xf]
        %v1991 = vld [vmem:[%s1988 + $0x8] sm:$0xf]
        %v1992 = vld [vmem:[%s1988 + $0xc] sm:$0xf]
        %v1997 = vunpack.c.l.b16 %v1989
        %v1998 = vunpack.c.l.b16 %v1990
        %v1999 = vunpack.c.l.b16 %v1991
        %v2000 = vunpack.c.l.b16 %v1992
        %v2001 = vpack.c.b16 %v1998, %v1997
        %v2002 = vpack.c.b16 %v2000, %v1999
        %v2004 = vsel %vm778, %v2001, 0
        %v2007 = vsel %vm778, %v2002, 0
        %2009 = vmatprep.subr.bf16.mxu0 %v1985
        %2010 = vmatpush1.bf16.msra.mxu0 %v1984
        %2011 = vmatprep.subr.bf16.mxu0 %v1987
        %2012 = vmatpush1.bf16.msra.mxu0 %v1986
        %2013 = vmatprep.subr.bf16.mxu0 0
        %2014 = vmatpush1.bf16.msra.mxu0 0
        %2015 = vmatprep.subr.bf16.mxu0 0
        %2016 = vmatpush1.bf16.msra.mxu0 0
        %2017 = vmatprep.subr.bf16.mxu0 0
        %2018 = vmatpush1.bf16.msra.mxu0 0
        %2019 = vmatprep.subr.bf16.mxu0 0
        %2020 = vmatpush1.bf16.msra.mxu0 0
        %2021 = vmatprep.subr.bf16.mxu0 0
        %2022 = vmatpush1.bf16.msra.mxu0 0
        %2023 = vmatprep.subr.bf16.mxu0 0
        %2024 = vmatpush1.bf16.msra.mxu0 0
        %2025 = vmatprep.subr.bf16.mxu0 0
        %2026 = vmatpush1.bf16.msra.mxu0 0
        %2027 = vmatprep.subr.bf16.mxu0 0
        %2028 = vmatpush1.bf16.msra.mxu0 0
        %2029 = vmatprep.subr.bf16.mxu0 0
        %2030 = vmatpush1.bf16.msra.mxu0 0
        %2031 = vmatprep.subr.bf16.mxu0 0
        %2032 = vmatpush1.bf16.msra.mxu0 0
        %2033 = vmatprep.subr.bf16.mxu0 0
        %2034 = vmatpush1.bf16.msra.mxu0 0
        %2035 = vmatprep.subr.bf16.mxu0 0
        %2036 = vmatpush1.bf16.msra.mxu0 0
        %2037 = vmatprep.subr.bf16.mxu0 0
        %2038 = vmatpush1.bf16.msra.mxu0 0
        %2039 = vmatprep.subr.bf16.mxu0 0
        %2040 = vmatpush1.bf16.msra.mxu0 0
        %2041 = vmatprep.mubr.bf16.mxu0 0
        %2042 = vmatmul.mubr.bf16.gmra.mrb[0].mxu0 %v2004
        %v2043 = vpop.f32.mrb[0].mxu0
        %v2044 = vadd.f32 0.0, %v2043
        %v2045 = vpop.f32.mrb[0].mxu0
        %v2046 = vadd.f32 0.0, %v2045
        %v2047 = vpop.f32.mrb[0].mxu0
        %v2048 = vadd.f32 0.0, %v2047
        %v2049 = vpop.f32.mrb[0].mxu0
        %v2050 = vadd.f32 0.0, %v2049
        %2051 = vmatprep.mubr.bf16.mxu0 0
        %2052 = vmatmul.mubr.bf16.gmra.mrb[0].mxu0 %v2007
        %v2053 = vpop.f32.mrb[0].mxu0
        %v2054 = vadd.f32 0.0, %v2053
        %v2055 = vpop.f32.mrb[0].mxu0
        %v2056 = vadd.f32 0.0, %v2055
        %v2057 = vpop.f32.mrb[0].mxu0
        %v2058 = vadd.f32 0.0, %v2057
        %v2059 = vpop.f32.mrb[0].mxu0
        %v2060 = vadd.f32 0.0, %v2059
        %2061 = vdwg.mxu0
        %v2066 = vunpack.c.l.b16 %v1910
        %v2067 = vunpack.c.l.b16 %v1911
        %v2068 = vunpack.c.l.b16 %v1912
        %v2069 = vunpack.c.l.b16 %v1913
        %v2070 = vpack.c.b16 %v2067, %v2066
        %v2071 = vpack.c.b16 %v2069, %v2068
        %v2073 = vsel %vm778, %v2070, 0
        %v2076 = vsel %vm778, %v2071, 0
        %2078 = vmatprep.subr.bf16.mxu0 %v1907
        %2079 = vmatpush1.bf16.msra.mxu0 %v1906
        %2080 = vmatprep.subr.bf16.mxu0 %v1909
        %2081 = vmatpush1.bf16.msra.mxu0 %v1908
        %2082 = vmatprep.subr.bf16.mxu0 0
        %2083 = vmatpush1.bf16.msra.mxu0 0
        %2084 = vmatprep.subr.bf16.mxu0 0
        %2085 = vmatpush1.bf16.msra.mxu0 0
        %2086 = vmatprep.subr.bf16.mxu0 0
        %2087 = vmatpush1.bf16.msra.mxu0 0
        %2088 = vmatprep.subr.bf16.mxu0 0
        %2089 = vmatpush1.bf16.msra.mxu0 0
        %2090 = vmatprep.subr.bf16.mxu0 0
        %2091 = vmatpush1.bf16.msra.mxu0 0
        %2092 = vmatprep.subr.bf16.mxu0 0
        %2093 = vmatpush1.bf16.msra.mxu0 0
        %2094 = vmatprep.subr.bf16.mxu0 0
        %2095 = vmatpush1.bf16.msra.mxu0 0
        %2096 = vmatprep.subr.bf16.mxu0 0
        %2097 = vmatpush1.bf16.msra.mxu0 0
        %2098 = vmatprep.subr.bf16.mxu0 0
        %2099 = vmatpush1.bf16.msra.mxu0 0
        %2100 = vmatprep.subr.bf16.mxu0 0
        %2101 = vmatpush1.bf16.msra.mxu0 0
        %2102 = vmatprep.subr.bf16.mxu0 0
        %2103 = vmatpush1.bf16.msra.mxu0 0
        %2104 = vmatprep.subr.bf16.mxu0 0
        %2105 = vmatpush1.bf16.msra.mxu0 0
        %2106 = vmatprep.subr.bf16.mxu0 0
        %2107 = vmatpush1.bf16.msra.mxu0 0
        %2108 = vmatprep.subr.bf16.mxu0 0
        %2109 = vmatpush1.bf16.msra.mxu0 0
        %2110 = vmatprep.mubr.bf16.mxu0 0
        %2111 = vmatmul.mubr.bf16.gmra.mrb[0].mxu0 %v2073
        %v2112 = vpop.f32.mrb[0].mxu0
        %v2113 = vadd.f32 %v2044, %v2112
        %v2114 = vpop.f32.mrb[0].mxu0
        %v2115 = vadd.f32 %v2046, %v2114
        %v2116 = vpop.f32.mrb[0].mxu0
        %v2117 = vadd.f32 %v2048, %v2116
        %v2118 = vpop.f32.mrb[0].mxu0
        %v2119 = vadd.f32 %v2050, %v2118
        %2120 = vmatprep.mubr.bf16.mxu0 0
        %2121 = vmatmul.mubr.bf16.gmra.mrb[0].mxu0 %v2076
        %v2122 = vpop.f32.mrb[0].mxu0
        %v2123 = vadd.f32 %v2054, %v2122
        %v2124 = vpop.f32.mrb[0].mxu0
        %v2125 = vadd.f32 %v2056, %v2124
        %v2126 = vpop.f32.mrb[0].mxu0
        %v2127 = vadd.f32 %v2058, %v2126
        %v2128 = vpop.f32.mrb[0].mxu0
        %v2129 = vadd.f32 %v2060, %v2128
        %2130 = vdwg.mxu0
        %2131 = vrot.lane.b32.xlu0 %v1820, 15
        %v2132 = vpop.permute.xlu0 %2131
        %2133 = vrot.lane.b32.xlu0 %v1821, 15
        %v2134 = vpop.permute.xlu0 %2133
        %2135 = vrot.lane.b32.xlu0 %v1822, 15
        %v2136 = vpop.permute.xlu0 %2135
        %2137 = vrot.lane.b32.xlu0 %v1823, 15
        %v2138 = vpop.permute.xlu0 %2137
        %2139 = vrot.lane.b32.xlu0 %v1824, 15
        %v2140 = vpop.permute.xlu0 %2139
        %2141 = vrot.lane.b32.xlu0 %v1825, 15
        %v2142 = vpop.permute.xlu0 %2141
        %2143 = vrot.lane.b32.xlu0 %v1826, 15
        %v2144 = vpop.permute.xlu0 %2143
        %2145 = vrot.lane.b32.xlu0 %v1827, 15
        %v2146 = vpop.permute.xlu0 %2145
        %vm2147 = vcmask 121856
        %v2148 = vsel %vm2147, %v2132, %v2134
        %v2149 = vsel %vm2147, %v2136, %v2138
        %v2150 = vsel %vm2147, %v2140, %v2142
        %v2151 = vsel %vm2147, %v2144, %v2146
        %vm2160 = vcmask 1047672
        %2161 = vst.msk [vmem:[#allocation2] sm:$0xff] %vm2160, %v2132
        %2162 = vst [vmem:[#allocation2 + $0x8] sm:$0xff] %v2148
        %2163 = vst.msk [vmem:[#allocation2 + $0x10] sm:$0xff] %vm2160, %v2136
        %2164 = vst [vmem:[#allocation2 + $0x18] sm:$0xff] %v2149
        %2165 = vst.msk [vmem:[#allocation2 + $0x20] sm:$0xff] %vm2160, %v2140
        %2166 = vst [vmem:[#allocation2 + $0x28] sm:$0xff] %v2150
        %2167 = vst.msk [vmem:[#allocation2 + $0x30] sm:$0xff] %vm2160, %v2144
        %2168 = vst [vmem:[#allocation2 + $0x38] sm:$0xff] %v2151
        %2169 = vst.msk [vmem:[#allocation2] sm:$0xff] %vm2147, 0.0
        %2170 = vst.msk [vmem:[#allocation2 + $0x10] sm:$0xff] %vm2147, 0.0
        %2171 = vst.msk [vmem:[#allocation2 + $0x20] sm:$0xff] %vm2147, 0.0
        %2172 = vst.msk [vmem:[#allocation2 + $0x30] sm:$0xff] %vm2147, 0.0
        %v2173 = vld [vmem:[#allocation2] sm:$0xff]
        %v2174 = vld [vmem:[#allocation2 + $0x8] sm:$0xff]
        %v2175 = vld [vmem:[#allocation2 + $0x10] sm:$0xff]
        %v2176 = vld [vmem:[#allocation2 + $0x18] sm:$0xff]
        %v2177 = vld [vmem:[#allocation2 + $0x20] sm:$0xff]
        %v2178 = vld [vmem:[#allocation2 + $0x28] sm:$0xff]
        %v2179 = vld [vmem:[#allocation2 + $0x30] sm:$0xff]
        %v2180 = vld [vmem:[#allocation2 + $0x38] sm:$0xff]
        %s2181 = scalar_lea.vmem %s1, 2
        %v2182 = vld [vmem:[%s2181] ss:$8 sm:$0x3]
        %v2184 = vlaneseq
        %v2185 = vshrl.u32 %v2184, 7
        %v2186 = vsub.s32 0, %v2185
        %v2187 = vrot.slane %v2182, %v2186
        %v2188 = vlaneseq
        %v2189 = vshrl.u32 %v2188, 7
        %v2190 = vsub.s32 1, %v2189
        %v2191 = vrot.slane %v2182, %v2190
        %v2194 = vmul.f32 %v2173, %v2187
        %v2195 = vmul.f32 %v2174, %v2191
        %v2196 = vmul.f32 %v2175, %v2187
        %v2197 = vmul.f32 %v2176, %v2191
        %v2198 = vmul.f32 %v2177, %v2187
        %v2199 = vmul.f32 %v2178, %v2191
        %v2200 = vmul.f32 %v2179, %v2187
        %v2201 = vmul.f32 %v2180, %v2191
        %v2202 = vpack.c.bf16 %v2196, %v2194
        %v2203 = vpack.c.bf16 %v2197, %v2195
        %v2204 = vpack.c.bf16 %v2200, %v2198
        %v2205 = vpack.c.bf16 %v2201, %v2199
        %s2206 = scalar_lea.vmem %s12, 32
        %v2207 = vld [vmem:[%s2206] sm:$0xf]
        %v2208 = vld [vmem:[%s2206 + $0x4] sm:$0xf]
        %v2209 = vld [vmem:[%s2206 + $0x8] sm:$0xf]
        %v2210 = vld [vmem:[%s2206 + $0xc] sm:$0xf]
        %v2215 = vunpack.c.l.b16 %v2207
        %v2216 = vunpack.c.l.b16 %v2208
        %v2217 = vunpack.c.l.b16 %v2209
        %v2218 = vunpack.c.l.b16 %v2210
        %v2219 = vpack.c.b16 %v2216, %v2215
        %v2220 = vpack.c.b16 %v2218, %v2217
        %v2222 = vsel %vm778, %v2219, 0
        %v2225 = vsel %vm778, %v2220, 0
        %2227 = vmatprep.subr.bf16.mxu0 %v2203
        %2228 = vmatpush1.bf16.msra.mxu0 %v2202
        %2229 = vmatprep.subr.bf16.mxu0 %v2205
        %2230 = vmatpush1.bf16.msra.mxu0 %v2204
        %2231 = vmatprep.subr.bf16.mxu0 0
        %2232 = vmatpush1.bf16.msra.mxu0 0
        %2233 = vmatprep.subr.bf16.mxu0 0
        %2234 = vmatpush1.bf16.msra.mxu0 0
        %2235 = vmatprep.subr.bf16.mxu0 0
        %2236 = vmatpush1.bf16.msra.mxu0 0
        %2237 = vmatprep.subr.bf16.mxu0 0
        %2238 = vmatpush1.bf16.msra.mxu0 0
        %2239 = vmatprep.subr.bf16.mxu0 0
        %2240 = vmatpush1.bf16.msra.mxu0 0
        %2241 = vmatprep.subr.bf16.mxu0 0
        %2242 = vmatpush1.bf16.msra.mxu0 0
        %2243 = vmatprep.subr.bf16.mxu0 0
        %2244 = vmatpush1.bf16.msra.mxu0 0
        %2245 = vmatprep.subr.bf16.mxu0 0
        %2246 = vmatpush1.bf16.msra.mxu0 0
        %2247 = vmatprep.subr.bf16.mxu0 0
        %2248 = vmatpush1.bf16.msra.mxu0 0
        %2249 = vmatprep.subr.bf16.mxu0 0
        %2250 = vmatpush1.bf16.msra.mxu0 0
        %2251 = vmatprep.subr.bf16.mxu0 0
        %2252 = vmatpush1.bf16.msra.mxu0 0
        %2253 = vmatprep.subr.bf16.mxu0 0
        %2254 = vmatpush1.bf16.msra.mxu0 0
        %2255 = vmatprep.subr.bf16.mxu0 0
        %2256 = vmatpush1.bf16.msra.mxu0 0
        %2257 = vmatprep.subr.bf16.mxu0 0
        %2258 = vmatpush1.bf16.msra.mxu0 0
        %2259 = vmatprep.mubr.bf16.mxu0 0
        %2260 = vmatmul.mubr.bf16.gmra.mrb[0].mxu0 %v2222
        %v2261 = vpop.f32.mrb[0].mxu0
        %v2262 = vadd.f32 0.0, %v2261
        %v2263 = vpop.f32.mrb[0].mxu0
        %v2264 = vadd.f32 0.0, %v2263
        %v2265 = vpop.f32.mrb[0].mxu0
        %v2266 = vadd.f32 0.0, %v2265
        %v2267 = vpop.f32.mrb[0].mxu0
        %v2268 = vadd.f32 0.0, %v2267
        %2269 = vmatprep.mubr.bf16.mxu0 0
        %2270 = vmatmul.mubr.bf16.gmra.mrb[0].mxu0 %v2225
        %v2271 = vpop.f32.mrb[0].mxu0
        %v2272 = vadd.f32 0.0, %v2271
        %v2273 = vpop.f32.mrb[0].mxu0
        %v2274 = vadd.f32 0.0, %v2273
        %v2275 = vpop.f32.mrb[0].mxu0
        %v2276 = vadd.f32 0.0, %v2275
        %v2277 = vpop.f32.mrb[0].mxu0
        %v2278 = vadd.f32 0.0, %v2277
        %2279 = vdwg.mxu0
        %v2280 = vadd.f32 %v2113, %v2262
        %v2281 = vadd.f32 %v2115, %v2264
        %v2282 = vadd.f32 %v2117, %v2266
        %v2283 = vadd.f32 %v2119, %v2268
        %v2284 = vadd.f32 %v2123, %v2272
        %v2285 = vadd.f32 %v2125, %v2274
        %v2286 = vadd.f32 %v2127, %v2276
        %v2287 = vadd.f32 %v2129, %v2278
        %2288 = vrot.lane.b32.xlu0 %v1820, 1
        %v2289 = vpop.permute.xlu0 %2288
        %2290 = vrot.lane.b32.xlu0 %v1821, 1
        %v2291 = vpop.permute.xlu0 %2290
        %2292 = vrot.lane.b32.xlu0 %v1822, 1
        %v2293 = vpop.permute.xlu0 %2292
        %2294 = vrot.lane.b32.xlu0 %v1823, 1
        %v2295 = vpop.permute.xlu0 %2294
        %2296 = vrot.lane.b32.xlu0 %v1824, 1
        %v2297 = vpop.permute.xlu0 %2296
        %2298 = vrot.lane.b32.xlu0 %v1825, 1
        %v2299 = vpop.permute.xlu0 %2298
        %2300 = vrot.lane.b32.xlu0 %v1826, 1
        %v2301 = vpop.permute.xlu0 %2300
        %2302 = vrot.lane.b32.xlu0 %v1827, 1
        %v2303 = vpop.permute.xlu0 %2302
        %vm2304 = vcmask 7168
        %v2305 = vsel %vm2304, %v2289, %v2291
        %v2306 = vsel %vm2304, %v2293, %v2295
        %v2307 = vsel %vm2304, %v2297, %v2299
        %v2308 = vsel %vm2304, %v2301, %v2303
        %vm2317 = vcmask 1047560
        %2318 = vst.msk [vmem:[#allocation2] sm:$0xff] %vm2317, %v2289
        %2319 = vst [vmem:[#allocation2 + $0x8] sm:$0xff] %v2305
        %2320 = vst.msk [vmem:[#allocation2 + $0x10] sm:$0xff] %vm2317, %v2293
        %2321 = vst [vmem:[#allocation2 + $0x18] sm:$0xff] %v2306
        %2322 = vst.msk [vmem:[#allocation2 + $0x20] sm:$0xff] %vm2317, %v2297
        %2323 = vst [vmem:[#allocation2 + $0x28] sm:$0xff] %v2307
        %2324 = vst.msk [vmem:[#allocation2 + $0x30] sm:$0xff] %vm2317, %v2301
        %2325 = vst [vmem:[#allocation2 + $0x38] sm:$0xff] %v2308
        %2326 = vst.msk [vmem:[#allocation2] sm:$0xff] %vm2304, 0.0
        %2327 = vst.msk [vmem:[#allocation2 + $0x10] sm:$0xff] %vm2304, 0.0
        %2328 = vst.msk [vmem:[#allocation2 + $0x20] sm:$0xff] %vm2304, 0.0
        %2329 = vst.msk [vmem:[#allocation2 + $0x30] sm:$0xff] %vm2304, 0.0
        %v2330 = vld [vmem:[#allocation2] sm:$0xff]
        %v2331 = vld [vmem:[#allocation2 + $0x8] sm:$0xff]
        %v2332 = vld [vmem:[#allocation2 + $0x10] sm:$0xff]
        %v2333 = vld [vmem:[#allocation2 + $0x18] sm:$0xff]
        %v2334 = vld [vmem:[#allocation2 + $0x20] sm:$0xff]
        %v2335 = vld [vmem:[#allocation2 + $0x28] sm:$0xff]
        %v2336 = vld [vmem:[#allocation2 + $0x30] sm:$0xff]
        %v2337 = vld [vmem:[#allocation2 + $0x38] sm:$0xff]
        %s2338 = scalar_lea.vmem %s1, 3
        %v2339 = vld [vmem:[%s2338] ss:$8 sm:$0x3]
        %v2341 = vlaneseq
        %v2342 = vshrl.u32 %v2341, 7
        %v2343 = vsub.s32 0, %v2342
        %v2344 = vrot.slane %v2339, %v2343
        %v2345 = vlaneseq
        %v2346 = vshrl.u32 %v2345, 7
        %v2347 = vsub.s32 1, %v2346
        %v2348 = vrot.slane %v2339, %v2347
        %v2351 = vmul.f32 %v2330, %v2344
        %v2352 = vmul.f32 %v2331, %v2348
        %v2353 = vmul.f32 %v2332, %v2344
        %v2354 = vmul.f32 %v2333, %v2348
        %v2355 = vmul.f32 %v2334, %v2344
        %v2356 = vmul.f32 %v2335, %v2348
        %v2357 = vmul.f32 %v2336, %v2344
        %v2358 = vmul.f32 %v2337, %v2348
        %v2359 = vpack.c.bf16 %v2353, %v2351
        %v2360 = vpack.c.bf16 %v2354, %v2352
        %v2361 = vpack.c.bf16 %v2357, %v2355
        %v2362 = vpack.c.bf16 %v2358, %v2356
        %s2363 = scalar_lea.vmem %s12, 48
        %v2364 = vld [vmem:[%s2363] sm:$0xf]
        %v2365 = vld [vmem:[%s2363 + $0x4] sm:$0xf]
        %v2366 = vld [vmem:[%s2363 + $0x8] sm:$0xf]
        %v2367 = vld [vmem:[%s2363 + $0xc] sm:$0xf]
        %v2372 = vunpack.c.l.b16 %v2364
        %v2373 = vunpack.c.l.b16 %v2365
        %v2374 = vunpack.c.l.b16 %v2366
        %v2375 = vunpack.c.l.b16 %v2367
        %v2376 = vpack.c.b16 %v2373, %v2372
        %v2377 = vpack.c.b16 %v2375, %v2374
        %v2379 = vsel %vm778, %v2376, 0
        %v2382 = vsel %vm778, %v2377, 0
        %2384 = vmatprep.subr.bf16.mxu0 %v2360
        %2385 = vmatpush1.bf16.msra.mxu0 %v2359
        %2386 = vmatprep.subr.bf16.mxu0 %v2362
        %2387 = vmatpush1.bf16.msra.mxu0 %v2361
        %2388 = vmatprep.subr.bf16.mxu0 0
        %2389 = vmatpush1.bf16.msra.mxu0 0
        %2390 = vmatprep.subr.bf16.mxu0 0
        %2391 = vmatpush1.bf16.msra.mxu0 0
        %2392 = vmatprep.subr.bf16.mxu0 0
        %2393 = vmatpush1.bf16.msra.mxu0 0
        %2394 = vmatprep.subr.bf16.mxu0 0
        %2395 = vmatpush1.bf16.msra.mxu0 0
        %2396 = vmatprep.subr.bf16.mxu0 0
        %2397 = vmatpush1.bf16.msra.mxu0 0
        %2398 = vmatprep.subr.bf16.mxu0 0
        %2399 = vmatpush1.bf16.msra.mxu0 0
        %2400 = vmatprep.subr.bf16.mxu0 0
        %2401 = vmatpush1.bf16.msra.mxu0 0
        %2402 = vmatprep.subr.bf16.mxu0 0
        %2403 = vmatpush1.bf16.msra.mxu0 0
        %2404 = vmatprep.subr.bf16.mxu0 0
        %2405 = vmatpush1.bf16.msra.mxu0 0
        %2406 = vmatprep.subr.bf16.mxu0 0
        %2407 = vmatpush1.bf16.msra.mxu0 0
        %2408 = vmatprep.subr.bf16.mxu0 0
        %2409 = vmatpush1.bf16.msra.mxu0 0
        %2410 = vmatprep.subr.bf16.mxu0 0
        %2411 = vmatpush1.bf16.msra.mxu0 0
        %2412 = vmatprep.subr.bf16.mxu0 0
        %2413 = vmatpush1.bf16.msra.mxu0 0
        %2414 = vmatprep.subr.bf16.mxu0 0
        %2415 = vmatpush1.bf16.msra.mxu0 0
        %2416 = vmatprep.mubr.bf16.mxu0 0
        %2417 = vmatmul.mubr.bf16.gmra.mrb[0].mxu0 %v2379
        %v2418 = vpop.f32.mrb[0].mxu0
        %v2419 = vadd.f32 0.0, %v2418
        %v2420 = vpop.f32.mrb[0].mxu0
        %v2421 = vadd.f32 0.0, %v2420
        %v2422 = vpop.f32.mrb[0].mxu0
        %v2423 = vadd.f32 0.0, %v2422
        %v2424 = vpop.f32.mrb[0].mxu0
        %v2425 = vadd.f32 0.0, %v2424
        %2426 = vmatprep.mubr.bf16.mxu0 0
        %2427 = vmatmul.mubr.bf16.gmra.mrb[0].mxu0 %v2382
        %v2428 = vpop.f32.mrb[0].mxu0
        %v2429 = vadd.f32 0.0, %v2428
        %v2430 = vpop.f32.mrb[0].mxu0
        %v2431 = vadd.f32 0.0, %v2430
        %v2432 = vpop.f32.mrb[0].mxu0
        %v2433 = vadd.f32 0.0, %v2432
        %v2434 = vpop.f32.mrb[0].mxu0
        %v2435 = vadd.f32 0.0, %v2434
        %2436 = vdwg.mxu0
        %v2437 = vadd.f32 %v2280, %v2419
        %v2438 = vadd.f32 %v2281, %v2421
        %v2439 = vadd.f32 %v2282, %v2423
        %v2440 = vadd.f32 %v2283, %v2425
        %v2441 = vadd.f32 %v2284, %v2429
        %v2442 = vadd.f32 %v2285, %v2431
        %v2443 = vadd.f32 %v2286, %v2433
        %v2444 = vadd.f32 %v2287, %v2435
        %2445 = vst [vmem:[#allocation2] sm:$0xff] %v1820
        %2446 = vst [vmem:[#allocation2 + $0x8] sm:$0xff] %v1821
        %2447 = vst [vmem:[#allocation2 + $0x10] sm:$0xff] %v1822
        %2448 = vst [vmem:[#allocation2 + $0x18] sm:$0xff] %v1823
        %2449 = vst [vmem:[#allocation2 + $0x20] sm:$0xff] %v1824
        %2450 = vst [vmem:[#allocation2 + $0x28] sm:$0xff] %v1825
        %2451 = vst [vmem:[#allocation2 + $0x30] sm:$0xff] %v1826
        %2452 = vst [vmem:[#allocation2 + $0x38] sm:$0xff] %v1827
        %v2453 = vld [vmem:[#allocation2] sm:$0xff]
        %v2454 = vld [vmem:[#allocation2 + $0x8] sm:$0xff]
        %v2455 = vld [vmem:[#allocation2 + $0x10] sm:$0xff]
        %v2456 = vld [vmem:[#allocation2 + $0x18] sm:$0xff]
        %v2457 = vld [vmem:[#allocation2 + $0x20] sm:$0xff]
        %v2458 = vld [vmem:[#allocation2 + $0x28] sm:$0xff]
        %v2459 = vld [vmem:[#allocation2 + $0x30] sm:$0xff]
        %v2460 = vld [vmem:[#allocation2 + $0x38] sm:$0xff]
        %s2461 = scalar_lea.vmem %s1, 4
        %v2462 = vld [vmem:[%s2461] ss:$8 sm:$0x3]
        %v2464 = vlaneseq
        %v2465 = vshrl.u32 %v2464, 7
        %v2466 = vsub.s32 0, %v2465
        %v2467 = vrot.slane %v2462, %v2466
        %v2468 = vlaneseq
        %v2469 = vshrl.u32 %v2468, 7
        %v2470 = vsub.s32 1, %v2469
        %v2471 = vrot.slane %v2462, %v2470
        %v2474 = vmul.f32 %v2453, %v2467
        %v2475 = vmul.f32 %v2454, %v2471
        %v2476 = vmul.f32 %v2455, %v2467
        %v2477 = vmul.f32 %v2456, %v2471
        %v2478 = vmul.f32 %v2457, %v2467
        %v2479 = vmul.f32 %v2458, %v2471
        %v2480 = vmul.f32 %v2459, %v2467
        %v2481 = vmul.f32 %v2460, %v2471
        %v2482 = vpack.c.bf16 %v2476, %v2474
        %v2483 = vpack.c.bf16 %v2477, %v2475
        %v2484 = vpack.c.bf16 %v2480, %v2478
        %v2485 = vpack.c.bf16 %v2481, %v2479
        %s2486 = scalar_lea.vmem %s12, 64
        %v2487 = vld [vmem:[%s2486] sm:$0xf]
        %v2488 = vld [vmem:[%s2486 + $0x4] sm:$0xf]
        %v2489 = vld [vmem:[%s2486 + $0x8] sm:$0xf]
        %v2490 = vld [vmem:[%s2486 + $0xc] sm:$0xf]
        %v2495 = vunpack.c.l.b16 %v2487
        %v2496 = vunpack.c.l.b16 %v2488
        %v2497 = vunpack.c.l.b16 %v2489
        %v2498 = vunpack.c.l.b16 %v2490
        %v2499 = vpack.c.b16 %v2496, %v2495
        %v2500 = vpack.c.b16 %v2498, %v2497
        %v2502 = vsel %vm778, %v2499, 0
        %v2505 = vsel %vm778, %v2500, 0
        %2507 = vmatprep.subr.bf16.mxu0 %v2483
        %2508 = vmatpush1.bf16.msra.mxu0 %v2482
        %2509 = vmatprep.subr.bf16.mxu0 %v2485
        %2510 = vmatpush1.bf16.msra.mxu0 %v2484
        %2511 = vmatprep.subr.bf16.mxu0 0
        %2512 = vmatpush1.bf16.msra.mxu0 0
        %2513 = vmatprep.subr.bf16.mxu0 0
        %2514 = vmatpush1.bf16.msra.mxu0 0
        %2515 = vmatprep.subr.bf16.mxu0 0
        %2516 = vmatpush1.bf16.msra.mxu0 0
        %2517 = vmatprep.subr.bf16.mxu0 0
        %2518 = vmatpush1.bf16.msra.mxu0 0
        %2519 = vmatprep.subr.bf16.mxu0 0
        %2520 = vmatpush1.bf16.msra.mxu0 0
        %2521 = vmatprep.subr.bf16.mxu0 0
        %2522 = vmatpush1.bf16.msra.mxu0 0
        %2523 = vmatprep.subr.bf16.mxu0 0
        %2524 = vmatpush1.bf16.msra.mxu0 0
        %2525 = vmatprep.subr.bf16.mxu0 0
        %2526 = vmatpush1.bf16.msra.mxu0 0
        %2527 = vmatprep.subr.bf16.mxu0 0
        %2528 = vmatpush1.bf16.msra.mxu0 0
        %2529 = vmatprep.subr.bf16.mxu0 0
        %2530 = vmatpush1.bf16.msra.mxu0 0
        %2531 = vmatprep.subr.bf16.mxu0 0
        %2532 = vmatpush1.bf16.msra.mxu0 0
        %2533 = vmatprep.subr.bf16.mxu0 0
        %2534 = vmatpush1.bf16.msra.mxu0 0
        %2535 = vmatprep.subr.bf16.mxu0 0
        %2536 = vmatpush1.bf16.msra.mxu0 0
        %2537 = vmatprep.subr.bf16.mxu0 0
        %2538 = vmatpush1.bf16.msra.mxu0 0
        %2539 = vmatprep.mubr.bf16.mxu0 0
        %2540 = vmatmul.mubr.bf16.gmra.mrb[0].mxu0 %v2502
        %v2541 = vpop.f32.mrb[0].mxu0
        %v2542 = vadd.f32 0.0, %v2541
        %v2543 = vpop.f32.mrb[0].mxu0
        %v2544 = vadd.f32 0.0, %v2543
        %v2545 = vpop.f32.mrb[0].mxu0
        %v2546 = vadd.f32 0.0, %v2545
        %v2547 = vpop.f32.mrb[0].mxu0
        %v2548 = vadd.f32 0.0, %v2547
        %2549 = vmatprep.mubr.bf16.mxu0 0
        %2550 = vmatmul.mubr.bf16.gmra.mrb[0].mxu0 %v2505
        %v2551 = vpop.f32.mrb[0].mxu0
        %v2552 = vadd.f32 0.0, %v2551
        %v2553 = vpop.f32.mrb[0].mxu0
        %v2554 = vadd.f32 0.0, %v2553
        %v2555 = vpop.f32.mrb[0].mxu0
        %v2556 = vadd.f32 0.0, %v2555
        %v2557 = vpop.f32.mrb[0].mxu0
        %v2558 = vadd.f32 0.0, %v2557
        %2559 = vdwg.mxu0
        %v2560 = vadd.f32 %v2437, %v2542
        %v2561 = vadd.f32 %v2438, %v2544
        %v2562 = vadd.f32 %v2439, %v2546
        %v2563 = vadd.f32 %v2440, %v2548
        %v2564 = vadd.f32 %v2441, %v2552
        %v2565 = vadd.f32 %v2442, %v2554
        %v2566 = vadd.f32 %v2443, %v2556
        %v2567 = vadd.f32 %v2444, %v2558
        %2568 = vrot.lane.b32.xlu0 %v1820, 127
        %v2569 = vpop.permute.xlu0 %2568
        %2570 = vrot.lane.b32.xlu0 %v1821, 127
        %v2571 = vpop.permute.xlu0 %2570
        %2572 = vrot.lane.b32.xlu0 %v1822, 127
        %v2573 = vpop.permute.xlu0 %2572
        %2574 = vrot.lane.b32.xlu0 %v1823, 127
        %v2575 = vpop.permute.xlu0 %2574
        %2576 = vrot.lane.b32.xlu0 %v1824, 127
        %v2577 = vpop.permute.xlu0 %2576
        %2578 = vrot.lane.b32.xlu0 %v1825, 127
        %v2579 = vpop.permute.xlu0 %2578
        %2580 = vrot.lane.b32.xlu0 %v1826, 127
        %v2581 = vpop.permute.xlu0 %2580
        %2582 = vrot.lane.b32.xlu0 %v1827, 127
        %v2583 = vpop.permute.xlu0 %2582
        %vm2584 = vcmask 1039360
        %v2585 = vsel %vm2584, %v2569, %v2571
        %v2586 = vsel %vm2584, %v2573, %v2575
        %v2587 = vsel %vm2584, %v2577, %v2579
        %v2588 = vsel %vm2584, %v2581, %v2583
        %2597 = vst [vmem:[#allocation2] sm:$0xff] %v2585
        %2598 = vst.msk [vmem:[#allocation2 + $0x8] sm:$0xff] %vm2584, %v2571
        %2599 = vst [vmem:[#allocation2 + $0x10] sm:$0xff] %v2586
        %2600 = vst.msk [vmem:[#allocation2 + $0x18] sm:$0xff] %vm2584, %v2575
        %2601 = vst [vmem:[#allocation2 + $0x20] sm:$0xff] %v2587
        %2602 = vst.msk [vmem:[#allocation2 + $0x28] sm:$0xff] %vm2584, %v2579
        %2603 = vst [vmem:[#allocation2 + $0x30] sm:$0xff] %v2588
        %2604 = vst.msk [vmem:[#allocation2 + $0x38] sm:$0xff] %vm2584, %v2583
        %vm2605 = vcmask 1048568
        %2606 = vst.msk [vmem:[#allocation2 + $0x8] sm:$0xff] %vm2605, 0.0
        %2607 = vst.msk [vmem:[#allocation2 + $0x18] sm:$0xff] %vm2605, 0.0
        %2608 = vst.msk [vmem:[#allocation2 + $0x28] sm:$0xff] %vm2605, 0.0
        %2609 = vst.msk [vmem:[#allocation2 + $0x38] sm:$0xff] %vm2605, 0.0
        %v2610 = vld [vmem:[#allocation2] sm:$0xff]
        %v2611 = vld [vmem:[#allocation2 + $0x8] sm:$0xff]
        %v2612 = vld [vmem:[#allocation2 + $0x10] sm:$0xff]
        %v2613 = vld [vmem:[#allocation2 + $0x18] sm:$0xff]
        %v2614 = vld [vmem:[#allocation2 + $0x20] sm:$0xff]
        %v2615 = vld [vmem:[#allocation2 + $0x28] sm:$0xff]
        %v2616 = vld [vmem:[#allocation2 + $0x30] sm:$0xff]
        %v2617 = vld [vmem:[#allocation2 + $0x38] sm:$0xff]
        %s2618 = scalar_lea.vmem %s1, 5
        %v2619 = vld [vmem:[%s2618] ss:$8 sm:$0x3]
        %v2621 = vlaneseq
        %v2622 = vshrl.u32 %v2621, 7
        %v2623 = vsub.s32 0, %v2622
        %v2624 = vrot.slane %v2619, %v2623
        %v2625 = vlaneseq
        %v2626 = vshrl.u32 %v2625, 7
        %v2627 = vsub.s32 1, %v2626
        %v2628 = vrot.slane %v2619, %v2627
        %v2631 = vmul.f32 %v2610, %v2624
        %v2632 = vmul.f32 %v2611, %v2628
        %v2633 = vmul.f32 %v2612, %v2624
        %v2634 = vmul.f32 %v2613, %v2628
        %v2635 = vmul.f32 %v2614, %v2624
        %v2636 = vmul.f32 %v2615, %v2628
        %v2637 = vmul.f32 %v2616, %v2624
        %v2638 = vmul.f32 %v2617, %v2628
        %v2639 = vpack.c.bf16 %v2633, %v2631
        %v2640 = vpack.c.bf16 %v2634, %v2632
        %v2641 = vpack.c.bf16 %v2637, %v2635
        %v2642 = vpack.c.bf16 %v2638, %v2636
        %s2643 = scalar_lea.vmem %s12, 80
        %v2644 = vld [vmem:[%s2643] sm:$0xf]
        %v2645 = vld [vmem:[%s2643 + $0x4] sm:$0xf]
        %v2646 = vld [vmem:[%s2643 + $0x8] sm:$0xf]
        %v2647 = vld [vmem:[%s2643 + $0xc] sm:$0xf]
        %v2652 = vunpack.c.l.b16 %v2644
        %v2653 = vunpack.c.l.b16 %v2645
        %v2654 = vunpack.c.l.b16 %v2646
        %v2655 = vunpack.c.l.b16 %v2647
        %v2656 = vpack.c.b16 %v2653, %v2652
        %v2657 = vpack.c.b16 %v2655, %v2654
        %v2659 = vsel %vm778, %v2656, 0
        %v2662 = vsel %vm778, %v2657, 0
        %2664 = vmatprep.subr.bf16.mxu0 %v2640
        %2665 = vmatpush1.bf16.msra.mxu0 %v2639
        %2666 = vmatprep.subr.bf16.mxu0 %v2642
        %2667 = vmatpush1.bf16.msra.mxu0 %v2641
        %2668 = vmatprep.subr.bf16.mxu0 0
        %2669 = vmatpush1.bf16.msra.mxu0 0
        %2670 = vmatprep.subr.bf16.mxu0 0
        %2671 = vmatpush1.bf16.msra.mxu0 0
        %2672 = vmatprep.subr.bf16.mxu0 0
        %2673 = vmatpush1.bf16.msra.mxu0 0
        %2674 = vmatprep.subr.bf16.mxu0 0
        %2675 = vmatpush1.bf16.msra.mxu0 0
        %2676 = vmatprep.subr.bf16.mxu0 0
        %2677 = vmatpush1.bf16.msra.mxu0 0
        %2678 = vmatprep.subr.bf16.mxu0 0
        %2679 = vmatpush1.bf16.msra.mxu0 0
        %2680 = vmatprep.subr.bf16.mxu0 0
        %2681 = vmatpush1.bf16.msra.mxu0 0
        %2682 = vmatprep.subr.bf16.mxu0 0
        %2683 = vmatpush1.bf16.msra.mxu0 0
        %2684 = vmatprep.subr.bf16.mxu0 0
        %2685 = vmatpush1.bf16.msra.mxu0 0
        %2686 = vmatprep.subr.bf16.mxu0 0
        %2687 = vmatpush1.bf16.msra.mxu0 0
        %2688 = vmatprep.subr.bf16.mxu0 0
        %2689 = vmatpush1.bf16.msra.mxu0 0
        %2690 = vmatprep.subr.bf16.mxu0 0
        %2691 = vmatpush1.bf16.msra.mxu0 0
        %2692 = vmatprep.subr.bf16.mxu0 0
        %2693 = vmatpush1.bf16.msra.mxu0 0
        %2694 = vmatprep.subr.bf16.mxu0 0
        %2695 = vmatpush1.bf16.msra.mxu0 0
        %2696 = vmatprep.mubr.bf16.mxu0 0
        %2697 = vmatmul.mubr.bf16.gmra.mrb[0].mxu0 %v2659
        %v2698 = vpop.f32.mrb[0].mxu0
        %v2699 = vadd.f32 0.0, %v2698
        %v2700 = vpop.f32.mrb[0].mxu0
        %v2701 = vadd.f32 0.0, %v2700
        %v2702 = vpop.f32.mrb[0].mxu0
        %v2703 = vadd.f32 0.0, %v2702
        %v2704 = vpop.f32.mrb[0].mxu0
        %v2705 = vadd.f32 0.0, %v2704
        %2706 = vmatprep.mubr.bf16.mxu0 0
        %2707 = vmatmul.mubr.bf16.gmra.mrb[0].mxu0 %v2662
        %v2708 = vpop.f32.mrb[0].mxu0
        %v2709 = vadd.f32 0.0, %v2708
        %v2710 = vpop.f32.mrb[0].mxu0
        %v2711 = vadd.f32 0.0, %v2710
        %v2712 = vpop.f32.mrb[0].mxu0
        %v2713 = vadd.f32 0.0, %v2712
        %v2714 = vpop.f32.mrb[0].mxu0
        %v2715 = vadd.f32 0.0, %v2714
        %2716 = vdwg.mxu0
        %v2717 = vadd.f32 %v2560, %v2699
        %v2718 = vadd.f32 %v2561, %v2701
        %v2719 = vadd.f32 %v2562, %v2703
        %v2720 = vadd.f32 %v2563, %v2705
        %v2721 = vadd.f32 %v2564, %v2709
        %v2722 = vadd.f32 %v2565, %v2711
        %v2723 = vadd.f32 %v2566, %v2713
        %v2724 = vadd.f32 %v2567, %v2715
        %2725 = vrot.lane.b32.xlu0 %v1820, 113
        %v2726 = vpop.permute.xlu0 %2725
        %2727 = vrot.lane.b32.xlu0 %v1821, 113
        %v2728 = vpop.permute.xlu0 %2727
        %2729 = vrot.lane.b32.xlu0 %v1822, 113
        %v2730 = vpop.permute.xlu0 %2729
        %2731 = vrot.lane.b32.xlu0 %v1823, 113
        %v2732 = vpop.permute.xlu0 %2731
        %2733 = vrot.lane.b32.xlu0 %v1824, 113
        %v2734 = vpop.permute.xlu0 %2733
        %2735 = vrot.lane.b32.xlu0 %v1825, 113
        %v2736 = vpop.permute.xlu0 %2735
        %2737 = vrot.lane.b32.xlu0 %v1826, 113
        %v2738 = vpop.permute.xlu0 %2737
        %2739 = vrot.lane.b32.xlu0 %v1827, 113
        %v2740 = vpop.permute.xlu0 %2739
        %vm2741 = vcmask 924672
        %v2742 = vsel %vm2741, %v2726, %v2728
        %v2743 = vsel %vm2741, %v2730, %v2732
        %v2744 = vsel %vm2741, %v2734, %v2736
        %v2745 = vsel %vm2741, %v2738, %v2740
        %2754 = vst [vmem:[#allocation2] sm:$0xff] %v2742
        %2755 = vst.msk [vmem:[#allocation2 + $0x8] sm:$0xff] %vm2741, %v2728
        %2756 = vst [vmem:[#allocation2 + $0x10] sm:$0xff] %v2743
        %2757 = vst.msk [vmem:[#allocation2 + $0x18] sm:$0xff] %vm2741, %v2732
        %2758 = vst [vmem:[#allocation2 + $0x20] sm:$0xff] %v2744
        %2759 = vst.msk [vmem:[#allocation2 + $0x28] sm:$0xff] %vm2741, %v2736
        %2760 = vst [vmem:[#allocation2 + $0x30] sm:$0xff] %v2745
        %2761 = vst.msk [vmem:[#allocation2 + $0x38] sm:$0xff] %vm2741, %v2740
        %vm2762 = vcmask 1048456
        %2763 = vst.msk [vmem:[#allocation2 + $0x8] sm:$0xff] %vm2762, 0.0
        %2764 = vst.msk [vmem:[#allocation2 + $0x18] sm:$0xff] %vm2762, 0.0
        %2765 = vst.msk [vmem:[#allocation2 + $0x28] sm:$0xff] %vm2762, 0.0
        %2766 = vst.msk [vmem:[#allocation2 + $0x38] sm:$0xff] %vm2762, 0.0
        %v2767 = vld [vmem:[#allocation2] sm:$0xff]
        %v2768 = vld [vmem:[#allocation2 + $0x8] sm:$0xff]
        %v2769 = vld [vmem:[#allocation2 + $0x10] sm:$0xff]
        %v2770 = vld [vmem:[#allocation2 + $0x18] sm:$0xff]
        %v2771 = vld [vmem:[#allocation2 + $0x20] sm:$0xff]
        %v2772 = vld [vmem:[#allocation2 + $0x28] sm:$0xff]
        %v2773 = vld [vmem:[#allocation2 + $0x30] sm:$0xff]
        %v2774 = vld [vmem:[#allocation2 + $0x38] sm:$0xff]
        %s2775 = scalar_lea.vmem %s1, 6
        %v2776 = vld [vmem:[%s2775] ss:$8 sm:$0x3]
        %v2778 = vlaneseq
        %v2779 = vshrl.u32 %v2778, 7
        %v2780 = vsub.s32 0, %v2779
        %v2781 = vrot.slane %v2776, %v2780
        %v2782 = vlaneseq
        %v2783 = vshrl.u32 %v2782, 7
        %v2784 = vsub.s32 1, %v2783
        %v2785 = vrot.slane %v2776, %v2784
        %v2788 = vmul.f32 %v2767, %v2781
        %v2789 = vmul.f32 %v2768, %v2785
        %v2790 = vmul.f32 %v2769, %v2781
        %v2791 = vmul.f32 %v2770, %v2785
        %v2792 = vmul.f32 %v2771, %v2781
        %v2793 = vmul.f32 %v2772, %v2785
        %v2794 = vmul.f32 %v2773, %v2781
        %v2795 = vmul.f32 %v2774, %v2785
        %v2796 = vpack.c.bf16 %v2790, %v2788
        %v2797 = vpack.c.bf16 %v2791, %v2789
        %v2798 = vpack.c.bf16 %v2794, %v2792
        %v2799 = vpack.c.bf16 %v2795, %v2793
        %s2800 = scalar_lea.vmem %s12, 96
        %v2801 = vld [vmem:[%s2800] sm:$0xf]
        %v2802 = vld [vmem:[%s2800 + $0x4] sm:$0xf]
        %v2803 = vld [vmem:[%s2800 + $0x8] sm:$0xf]
        %v2804 = vld [vmem:[%s2800 + $0xc] sm:$0xf]
        %v2809 = vunpack.c.l.b16 %v2801
        %v2810 = vunpack.c.l.b16 %v2802
        %v2811 = vunpack.c.l.b16 %v2803
        %v2812 = vunpack.c.l.b16 %v2804
        %v2813 = vpack.c.b16 %v2810, %v2809
        %v2814 = vpack.c.b16 %v2812, %v2811
        %v2816 = vsel %vm778, %v2813, 0
        %v2819 = vsel %vm778, %v2814, 0
        %2821 = vmatprep.subr.bf16.mxu0 %v2797
        %2822 = vmatpush1.bf16.msra.mxu0 %v2796
        %2823 = vmatprep.subr.bf16.mxu0 %v2799
        %2824 = vmatpush1.bf16.msra.mxu0 %v2798
        %2825 = vmatprep.subr.bf16.mxu0 0
        %2826 = vmatpush1.bf16.msra.mxu0 0
        %2827 = vmatprep.subr.bf16.mxu0 0
        %2828 = vmatpush1.bf16.msra.mxu0 0
        %2829 = vmatprep.subr.bf16.mxu0 0
        %2830 = vmatpush1.bf16.msra.mxu0 0
        %2831 = vmatprep.subr.bf16.mxu0 0
        %2832 = vmatpush1.bf16.msra.mxu0 0
        %2833 = vmatprep.subr.bf16.mxu0 0
        %2834 = vmatpush1.bf16.msra.mxu0 0
        %2835 = vmatprep.subr.bf16.mxu0 0
        %2836 = vmatpush1.bf16.msra.mxu0 0
        %2837 = vmatprep.subr.bf16.mxu0 0
        %2838 = vmatpush1.bf16.msra.mxu0 0
        %2839 = vmatprep.subr.bf16.mxu0 0
        %2840 = vmatpush1.bf16.msra.mxu0 0
        %2841 = vmatprep.subr.bf16.mxu0 0
        %2842 = vmatpush1.bf16.msra.mxu0 0
        %2843 = vmatprep.subr.bf16.mxu0 0
        %2844 = vmatpush1.bf16.msra.mxu0 0
        %2845 = vmatprep.subr.bf16.mxu0 0
        %2846 = vmatpush1.bf16.msra.mxu0 0
        %2847 = vmatprep.subr.bf16.mxu0 0
        %2848 = vmatpush1.bf16.msra.mxu0 0
        %2849 = vmatprep.subr.bf16.mxu0 0
        %2850 = vmatpush1.bf16.msra.mxu0 0
        %2851 = vmatprep.subr.bf16.mxu0 0
        %2852 = vmatpush1.bf16.msra.mxu0 0
        %2853 = vmatprep.mubr.bf16.mxu0 0
        %2854 = vmatmul.mubr.bf16.gmra.mrb[0].mxu0 %v2816
        %v2855 = vpop.f32.mrb[0].mxu0
        %v2856 = vadd.f32 0.0, %v2855
        %v2857 = vpop.f32.mrb[0].mxu0
        %v2858 = vadd.f32 0.0, %v2857
        %v2859 = vpop.f32.mrb[0].mxu0
        %v2860 = vadd.f32 0.0, %v2859
        %v2861 = vpop.f32.mrb[0].mxu0
        %v2862 = vadd.f32 0.0, %v2861
        %2863 = vmatprep.mubr.bf16.mxu0 0
        %2864 = vmatmul.mubr.bf16.gmra.mrb[0].mxu0 %v2819
        %v2865 = vpop.f32.mrb[0].mxu0
        %v2866 = vadd.f32 0.0, %v2865
        %v2867 = vpop.f32.mrb[0].mxu0
        %v2868 = vadd.f32 0.0, %v2867
        %v2869 = vpop.f32.mrb[0].mxu0
        %v2870 = vadd.f32 0.0, %v2869
        %v2871 = vpop.f32.mrb[0].mxu0
        %v2872 = vadd.f32 0.0, %v2871
        %2873 = vdwg.mxu0
        %v2874 = vadd.f32 %v2717, %v2856
        %v2875 = vadd.f32 %v2718, %v2858
        %v2876 = vadd.f32 %v2719, %v2860
        %v2877 = vadd.f32 %v2720, %v2862
        %v2878 = vadd.f32 %v2721, %v2866
        %v2879 = vadd.f32 %v2722, %v2868
        %v2880 = vadd.f32 %v2723, %v2870
        %v2881 = vadd.f32 %v2724, %v2872
        %2882 = vrot.lane.b32.xlu0 %v1820, 112
        %v2883 = vpop.permute.xlu0 %2882
        %2884 = vrot.lane.b32.xlu0 %v1821, 112
        %v2885 = vpop.permute.xlu0 %2884
        %2886 = vrot.lane.b32.xlu0 %v1822, 112
        %v2887 = vpop.permute.xlu0 %2886
        %2888 = vrot.lane.b32.xlu0 %v1823, 112
        %v2889 = vpop.permute.xlu0 %2888
        %2890 = vrot.lane.b32.xlu0 %v1824, 112
        %v2891 = vpop.permute.xlu0 %2890
        %2892 = vrot.lane.b32.xlu0 %v1825, 112
        %v2893 = vpop.permute.xlu0 %2892
        %2894 = vrot.lane.b32.xlu0 %v1826, 112
        %v2895 = vpop.permute.xlu0 %2894
        %2896 = vrot.lane.b32.xlu0 %v1827, 112
        %v2897 = vpop.permute.xlu0 %2896
        %vm2898 = vcmask 916480
        %v2899 = vsel %vm2898, %v2883, %v2885
        %v2900 = vsel %vm2898, %v2887, %v2889
        %v2901 = vsel %vm2898, %v2891, %v2893
        %v2902 = vsel %vm2898, %v2895, %v2897
        %2911 = vst [vmem:[#allocation2] sm:$0xff] %v2899
        %2912 = vst.msk [vmem:[#allocation2 + $0x8] sm:$0xff] %vm2898, %v2885
        %2913 = vst [vmem:[#allocation2 + $0x10] sm:$0xff] %v2900
        %2914 = vst.msk [vmem:[#allocation2 + $0x18] sm:$0xff] %vm2898, %v2889
        %2915 = vst [vmem:[#allocation2 + $0x20] sm:$0xff] %v2901
        %2916 = vst.msk [vmem:[#allocation2 + $0x28] sm:$0xff] %vm2898, %v2893
        %2917 = vst [vmem:[#allocation2 + $0x30] sm:$0xff] %v2902
        %2918 = vst.msk [vmem:[#allocation2 + $0x38] sm:$0xff] %vm2898, %v2897
        %vm2919 = vcmask 1048448
        %2920 = vst.msk [vmem:[#allocation2 + $0x8] sm:$0xff] %vm2919, 0.0
        %2921 = vst.msk [vmem:[#allocation2 + $0x18] sm:$0xff] %vm2919, 0.0
        %2922 = vst.msk [vmem:[#allocation2 + $0x28] sm:$0xff] %vm2919, 0.0
        %2923 = vst.msk [vmem:[#allocation2 + $0x38] sm:$0xff] %vm2919, 0.0
        %v2924 = vld [vmem:[#allocation2] sm:$0xff]
        %v2925 = vld [vmem:[#allocation2 + $0x8] sm:$0xff]
        %v2926 = vld [vmem:[#allocation2 + $0x10] sm:$0xff]
        %v2927 = vld [vmem:[#allocation2 + $0x18] sm:$0xff]
        %v2928 = vld [vmem:[#allocation2 + $0x20] sm:$0xff]
        %v2929 = vld [vmem:[#allocation2 + $0x28] sm:$0xff]
        %v2930 = vld [vmem:[#allocation2 + $0x30] sm:$0xff]
        %v2931 = vld [vmem:[#allocation2 + $0x38] sm:$0xff]
        %s2932 = scalar_lea.vmem %s1, 7
        %v2933 = vld [vmem:[%s2932] ss:$8 sm:$0x3]
        %v2935 = vlaneseq
        %v2936 = vshrl.u32 %v2935, 7
        %v2937 = vsub.s32 0, %v2936
        %v2938 = vrot.slane %v2933, %v2937
        %v2939 = vlaneseq
        %v2940 = vshrl.u32 %v2939, 7
        %v2941 = vsub.s32 1, %v2940
        %v2942 = vrot.slane %v2933, %v2941
        %v2945 = vmul.f32 %v2924, %v2938
        %v2946 = vmul.f32 %v2925, %v2942
        %v2947 = vmul.f32 %v2926, %v2938
        %v2948 = vmul.f32 %v2927, %v2942
        %v2949 = vmul.f32 %v2928, %v2938
        %v2950 = vmul.f32 %v2929, %v2942
        %v2951 = vmul.f32 %v2930, %v2938
        %v2952 = vmul.f32 %v2931, %v2942
        %v2953 = vpack.c.bf16 %v2947, %v2945
        %v2954 = vpack.c.bf16 %v2948, %v2946
        %v2955 = vpack.c.bf16 %v2951, %v2949
        %v2956 = vpack.c.bf16 %v2952, %v2950
        %s2957 = scalar_lea.vmem %s12, 112
        %v2958 = vld [vmem:[%s2957] sm:$0xf]
        %v2959 = vld [vmem:[%s2957 + $0x4] sm:$0xf]
        %v2960 = vld [vmem:[%s2957 + $0x8] sm:$0xf]
        %v2961 = vld [vmem:[%s2957 + $0xc] sm:$0xf]
        %v2966 = vunpack.c.l.b16 %v2958
        %v2967 = vunpack.c.l.b16 %v2959
        %v2968 = vunpack.c.l.b16 %v2960
        %v2969 = vunpack.c.l.b16 %v2961
        %v2970 = vpack.c.b16 %v2967, %v2966
        %v2971 = vpack.c.b16 %v2969, %v2968
        %v2973 = vsel %vm778, %v2970, 0
        %v2976 = vsel %vm778, %v2971, 0
        %2978 = vmatprep.subr.bf16.mxu0 %v2954
        %2979 = vmatpush1.bf16.msra.mxu0 %v2953
        %2980 = vmatprep.subr.bf16.mxu0 %v2956
        %2981 = vmatpush1.bf16.msra.mxu0 %v2955
        %2982 = vmatprep.subr.bf16.mxu0 0
        %2983 = vmatpush1.bf16.msra.mxu0 0
        %2984 = vmatprep.subr.bf16.mxu0 0
        %2985 = vmatpush1.bf16.msra.mxu0 0
        %2986 = vmatprep.subr.bf16.mxu0 0
        %2987 = vmatpush1.bf16.msra.mxu0 0
        %2988 = vmatprep.subr.bf16.mxu0 0
        %2989 = vmatpush1.bf16.msra.mxu0 0
        %2990 = vmatprep.subr.bf16.mxu0 0
        %2991 = vmatpush1.bf16.msra.mxu0 0
        %2992 = vmatprep.subr.bf16.mxu0 0
        %2993 = vmatpush1.bf16.msra.mxu0 0
        %2994 = vmatprep.subr.bf16.mxu0 0
        %2995 = vmatpush1.bf16.msra.mxu0 0
        %2996 = vmatprep.subr.bf16.mxu0 0
        %2997 = vmatpush1.bf16.msra.mxu0 0
        %2998 = vmatprep.subr.bf16.mxu0 0
        %2999 = vmatpush1.bf16.msra.mxu0 0
        %3000 = vmatprep.subr.bf16.mxu0 0
        %3001 = vmatpush1.bf16.msra.mxu0 0
        %3002 = vmatprep.subr.bf16.mxu0 0
        %3003 = vmatpush1.bf16.msra.mxu0 0
        %3004 = vmatprep.subr.bf16.mxu0 0
        %3005 = vmatpush1.bf16.msra.mxu0 0
        %3006 = vmatprep.subr.bf16.mxu0 0
        %3007 = vmatpush1.bf16.msra.mxu0 0
        %3008 = vmatprep.subr.bf16.mxu0 0
        %3009 = vmatpush1.bf16.msra.mxu0 0
        %3010 = vmatprep.mubr.bf16.mxu0 0
        %3011 = vmatmul.mubr.bf16.gmra.mrb[0].mxu0 %v2973
        %v3012 = vpop.f32.mrb[0].mxu0
        %v3013 = vadd.f32 0.0, %v3012
        %v3014 = vpop.f32.mrb[0].mxu0
        %v3015 = vadd.f32 0.0, %v3014
        %v3016 = vpop.f32.mrb[0].mxu0
        %v3017 = vadd.f32 0.0, %v3016
        %v3018 = vpop.f32.mrb[0].mxu0
        %v3019 = vadd.f32 0.0, %v3018
        %3020 = vmatprep.mubr.bf16.mxu0 0
        %3021 = vmatmul.mubr.bf16.gmra.mrb[0].mxu0 %v2976
        %v3022 = vpop.f32.mrb[0].mxu0
        %v3023 = vadd.f32 0.0, %v3022
        %v3024 = vpop.f32.mrb[0].mxu0
        %v3025 = vadd.f32 0.0, %v3024
        %v3026 = vpop.f32.mrb[0].mxu0
        %v3027 = vadd.f32 0.0, %v3026
        %v3028 = vpop.f32.mrb[0].mxu0
        %v3029 = vadd.f32 0.0, %v3028
        %3030 = vdwg.mxu0
        %v3031 = vadd.f32 %v2874, %v3013
        %v3032 = vadd.f32 %v2875, %v3015
        %v3033 = vadd.f32 %v2876, %v3017
        %v3034 = vadd.f32 %v2877, %v3019
        %v3035 = vadd.f32 %v2878, %v3023
        %v3036 = vadd.f32 %v2879, %v3025
        %v3037 = vadd.f32 %v2880, %v3027
        %v3038 = vadd.f32 %v2881, %v3029
        %3039 = vrot.lane.b32.xlu0 %v1820, 111
        %v3040 = vpop.permute.xlu0 %3039
        %3041 = vrot.lane.b32.xlu0 %v1821, 111
        %v3042 = vpop.permute.xlu0 %3041
        %3043 = vrot.lane.b32.xlu0 %v1822, 111
        %v3044 = vpop.permute.xlu0 %3043
        %3045 = vrot.lane.b32.xlu0 %v1823, 111
        %v3046 = vpop.permute.xlu0 %3045
        %3047 = vrot.lane.b32.xlu0 %v1824, 111
        %v3048 = vpop.permute.xlu0 %3047
        %3049 = vrot.lane.b32.xlu0 %v1825, 111
        %v3050 = vpop.permute.xlu0 %3049
        %3051 = vrot.lane.b32.xlu0 %v1826, 111
        %v3052 = vpop.permute.xlu0 %3051
        %3053 = vrot.lane.b32.xlu0 %v1827, 111
        %v3054 = vpop.permute.xlu0 %3053
        %vm3055 = vcmask 908288
        %v3056 = vsel %vm3055, %v3040, %v3042
        %v3057 = vsel %vm3055, %v3044, %v3046
        %v3058 = vsel %vm3055, %v3048, %v3050
        %v3059 = vsel %vm3055, %v3052, %v3054
        %3068 = vst [vmem:[#allocation2] sm:$0xff] %v3056
        %3069 = vst.msk [vmem:[#allocation2 + $0x8] sm:$0xff] %vm3055, %v3042
        %3070 = vst [vmem:[#allocation2 + $0x10] sm:$0xff] %v3057
        %3071 = vst.msk [vmem:[#allocation2 + $0x18] sm:$0xff] %vm3055, %v3046
        %3072 = vst [vmem:[#allocation2 + $0x20] sm:$0xff] %v3058
        %3073 = vst.msk [vmem:[#allocation2 + $0x28] sm:$0xff] %vm3055, %v3050
        %3074 = vst [vmem:[#allocation2 + $0x30] sm:$0xff] %v3059
        %3075 = vst.msk [vmem:[#allocation2 + $0x38] sm:$0xff] %vm3055, %v3054
        %vm3076 = vcmask 1048440
        %3077 = vst.msk [vmem:[#allocation2 + $0x8] sm:$0xff] %vm3076, 0.0
        %3078 = vst.msk [vmem:[#allocation2 + $0x18] sm:$0xff] %vm3076, 0.0
        %3079 = vst.msk [vmem:[#allocation2 + $0x28] sm:$0xff] %vm3076, 0.0
        %3080 = vst.msk [vmem:[#allocation2 + $0x38] sm:$0xff] %vm3076, 0.0
        %v3081 = vld [vmem:[#allocation2] sm:$0xff]
        %v3082 = vld [vmem:[#allocation2 + $0x8] sm:$0xff]
        %v3083 = vld [vmem:[#allocation2 + $0x10] sm:$0xff]
        %v3084 = vld [vmem:[#allocation2 + $0x18] sm:$0xff]
        %v3085 = vld [vmem:[#allocation2 + $0x20] sm:$0xff]
        %v3086 = vld [vmem:[#allocation2 + $0x28] sm:$0xff]
        %v3087 = vld [vmem:[#allocation2 + $0x30] sm:$0xff]
        %v3088 = vld [vmem:[#allocation2 + $0x38] sm:$0xff]
        %s3089 = scalar_lea.vmem %s1, 16
        %v3090 = vld [vmem:[%s3089] ss:$8 sm:$0x3]
        %v3092 = vlaneseq
        %v3093 = vshrl.u32 %v3092, 7
        %v3094 = vsub.s32 0, %v3093
        %v3095 = vrot.slane %v3090, %v3094
        %v3096 = vlaneseq
        %v3097 = vshrl.u32 %v3096, 7
        %v3098 = vsub.s32 1, %v3097
        %v3099 = vrot.slane %v3090, %v3098
        %v3102 = vmul.f32 %v3081, %v3095
        %v3103 = vmul.f32 %v3082, %v3099
        %v3104 = vmul.f32 %v3083, %v3095
        %v3105 = vmul.f32 %v3084, %v3099
        %v3106 = vmul.f32 %v3085, %v3095
        %v3107 = vmul.f32 %v3086, %v3099
        %v3108 = vmul.f32 %v3087, %v3095
        %v3109 = vmul.f32 %v3088, %v3099
        %v3110 = vpack.c.bf16 %v3104, %v3102
        %v3111 = vpack.c.bf16 %v3105, %v3103
        %v3112 = vpack.c.bf16 %v3108, %v3106
        %v3113 = vpack.c.bf16 %v3109, %v3107
        %s3114 = scalar_lea.vmem %s12, 128
        %v3115 = vld [vmem:[%s3114] sm:$0xf]
        %v3116 = vld [vmem:[%s3114 + $0x4] sm:$0xf]
        %v3117 = vld [vmem:[%s3114 + $0x8] sm:$0xf]
        %v3118 = vld [vmem:[%s3114 + $0xc] sm:$0xf]
        %v3123 = vunpack.c.l.b16 %v3115
        %v3124 = vunpack.c.l.b16 %v3116
        %v3125 = vunpack.c.l.b16 %v3117
        %v3126 = vunpack.c.l.b16 %v3118
        %v3127 = vpack.c.b16 %v3124, %v3123
        %v3128 = vpack.c.b16 %v3126, %v3125
        %v3130 = vsel %vm778, %v3127, 0
        %v3133 = vsel %vm778, %v3128, 0
        %3135 = vmatprep.subr.bf16.mxu0 %v3111
        %3136 = vmatpush1.bf16.msra.mxu0 %v3110
        %3137 = vmatprep.subr.bf16.mxu0 %v3113
        %3138 = vmatpush1.bf16.msra.mxu0 %v3112
        %3139 = vmatprep.subr.bf16.mxu0 0
        %3140 = vmatpush1.bf16.msra.mxu0 0
        %3141 = vmatprep.subr.bf16.mxu0 0
        %3142 = vmatpush1.bf16.msra.mxu0 0
        %3143 = vmatprep.subr.bf16.mxu0 0
        %3144 = vmatpush1.bf16.msra.mxu0 0
        %3145 = vmatprep.subr.bf16.mxu0 0
        %3146 = vmatpush1.bf16.msra.mxu0 0
        %3147 = vmatprep.subr.bf16.mxu0 0
        %3148 = vmatpush1.bf16.msra.mxu0 0
        %3149 = vmatprep.subr.bf16.mxu0 0
        %3150 = vmatpush1.bf16.msra.mxu0 0
        %3151 = vmatprep.subr.bf16.mxu0 0
        %3152 = vmatpush1.bf16.msra.mxu0 0
        %3153 = vmatprep.subr.bf16.mxu0 0
        %3154 = vmatpush1.bf16.msra.mxu0 0
        %3155 = vmatprep.subr.bf16.mxu0 0
        %3156 = vmatpush1.bf16.msra.mxu0 0
        %3157 = vmatprep.subr.bf16.mxu0 0
        %3158 = vmatpush1.bf16.msra.mxu0 0
        %3159 = vmatprep.subr.bf16.mxu0 0
        %3160 = vmatpush1.bf16.msra.mxu0 0
        %3161 = vmatprep.subr.bf16.mxu0 0
        %3162 = vmatpush1.bf16.msra.mxu0 0
        %3163 = vmatprep.subr.bf16.mxu0 0
        %3164 = vmatpush1.bf16.msra.mxu0 0
        %3165 = vmatprep.subr.bf16.mxu0 0
        %3166 = vmatpush1.bf16.msra.mxu0 0
        %3167 = vmatprep.mubr.bf16.mxu0 0
        %3168 = vmatmul.mubr.bf16.gmra.mrb[0].mxu0 %v3130
        %v3169 = vpop.f32.mrb[0].mxu0
        %v3170 = vadd.f32 0.0, %v3169
        %v3171 = vpop.f32.mrb[0].mxu0
        %v3172 = vadd.f32 0.0, %v3171
        %v3173 = vpop.f32.mrb[0].mxu0
        %v3174 = vadd.f32 0.0, %v3173
        %v3175 = vpop.f32.mrb[0].mxu0
        %v3176 = vadd.f32 0.0, %v3175
        %3177 = vmatprep.mubr.bf16.mxu0 0
        %3178 = vmatmul.mubr.bf16.gmra.mrb[0].mxu0 %v3133
        %v3179 = vpop.f32.mrb[0].mxu0
        %v3180 = vadd.f32 0.0, %v3179
        %v3181 = vpop.f32.mrb[0].mxu0
        %v3182 = vadd.f32 0.0, %v3181
        %v3183 = vpop.f32.mrb[0].mxu0
        %v3184 = vadd.f32 0.0, %v3183
        %v3185 = vpop.f32.mrb[0].mxu0
        %v3186 = vadd.f32 0.0, %v3185
        %3187 = vdwg.mxu0
        %v3188 = vadd.f32 %v3031, %v3170
        %v3189 = vadd.f32 %v3032, %v3172
        %v3190 = vadd.f32 %v3033, %v3174
        %v3191 = vadd.f32 %v3034, %v3176
        %v3192 = vadd.f32 %v3035, %v3180
        %v3193 = vadd.f32 %v3036, %v3182
        %v3194 = vadd.f32 %v3037, %v3184
        %v3195 = vadd.f32 %v3038, %v3186
        %v3196 = vld [vmem:[%s13] sm:$0xff]
        %v3197 = vld [vmem:[%s13 + $0x8] sm:$0xff]
        %v3198 = vld [vmem:[%s13 + $0x10] sm:$0xff]
        %v3199 = vld [vmem:[%s13 + $0x18] sm:$0xff]
        %3201 = vset.pattern.permute.xlu0 0
        %3202 = vperm.xlu0 %3201, %v3196
        %v3203 = vpop.permute.xlu0 %3202
        %3206 = vset.pattern.permute.xlu0 0
        %3207 = vperm.xlu0 %3206, %v3197
        %v3208 = vpop.permute.xlu0 %3207
        %3211 = vset.pattern.permute.xlu0 0
        %3212 = vperm.xlu0 %3211, %v3198
        %v3213 = vpop.permute.xlu0 %3212
        %3216 = vset.pattern.permute.xlu0 0
        %3217 = vperm.xlu0 %3216, %v3199
        %v3218 = vpop.permute.xlu0 %3217
        %v3220 = vadd.f32 %v3188, %v3203
        %v3221 = vadd.f32 %v3189, %v3203
        %v3222 = vadd.f32 %v3190, %v3208
        %v3223 = vadd.f32 %v3191, %v3208
        %v3224 = vadd.f32 %v3192, %v3213
        %v3225 = vadd.f32 %v3193, %v3213
        %v3226 = vadd.f32 %v3194, %v3218
        %v3227 = vadd.f32 %v3195, %v3218
        %v3228 = vmax.f32 %v3220, 0.0
        %v3229 = vmax.f32 %v3221, 0.0
        %v3230 = vmax.f32 %v3222, 0.0
        %v3231 = vmax.f32 %v3223, 0.0
        %v3232 = vmax.f32 %v3224, 0.0
        %v3233 = vmax.f32 %v3225, 0.0
        %v3234 = vmax.f32 %v3226, 0.0
        %v3235 = vmax.f32 %v3227, 0.0
        %v3236 = vld [vmem:[%s14] sm:$0xf]
        %v3237 = vld [vmem:[%s14 + $0x4] sm:$0xf]
        %v3238 = vld [vmem:[%s14 + $0x8] sm:$0xf]
        %v3239 = vld [vmem:[%s14 + $0xc] sm:$0xf]
        %v3240 = vpack.c.bf16 %v3230, %v3228
        %v3241 = vpack.c.bf16 %v3231, %v3229
        %v3242 = vpack.c.bf16 %v3234, %v3232
        %v3243 = vpack.c.bf16 %v3235, %v3233
        %v3244 = vld [vmem:[%s15] sm:$0xff]
        %v3245 = vld [vmem:[%s15 + $0x8] sm:$0xff]
        %v3246 = vld [vmem:[%s15 + $0x10] sm:$0xff]
        %v3247 = vld [vmem:[%s15 + $0x18] sm:$0xff]
        %3249 = vset.pattern.permute.xlu0 0
        %3250 = vperm.xlu0 %3249, %v3244
        %v3251 = vpop.permute.xlu0 %3250
        %3254 = vset.pattern.permute.xlu0 0
        %3255 = vperm.xlu0 %3254, %v3245
        %v3256 = vpop.permute.xlu0 %3255
        %3259 = vset.pattern.permute.xlu0 0
        %3260 = vperm.xlu0 %3259, %v3246
        %v3261 = vpop.permute.xlu0 %3260
        %3264 = vset.pattern.permute.xlu0 0
        %3265 = vperm.xlu0 %3264, %v3247
        %v3266 = vpop.permute.xlu0 %3265
        %v3272 = vunpack.c.l.b16 %v3236
        %v3273 = vunpack.c.l.b16 %v3237
        %v3274 = vunpack.c.l.b16 %v3238
        %v3275 = vunpack.c.l.b16 %v3239
        %v3276 = vpack.c.b16 %v3273, %v3272
        %v3277 = vpack.c.b16 %v3275, %v3274
        %v3279 = vsel %vm778, %v3276, 0
        %v3282 = vsel %vm778, %v3277, 0
        %3284 = vmatprep.subr.bf16.mxu0 %v3241
        %3285 = vmatpush1.bf16.msra.mxu0 %v3240
        %3286 = vmatprep.subr.bf16.mxu0 %v3243
        %3287 = vmatpush1.bf16.msra.mxu0 %v3242
        %3288 = vmatprep.subr.bf16.mxu0 0
        %3289 = vmatpush1.bf16.msra.mxu0 0
        %3290 = vmatprep.subr.bf16.mxu0 0
        %3291 = vmatpush1.bf16.msra.mxu0 0
        %3292 = vmatprep.subr.bf16.mxu0 0
        %3293 = vmatpush1.bf16.msra.mxu0 0
        %3294 = vmatprep.subr.bf16.mxu0 0
        %3295 = vmatpush1.bf16.msra.mxu0 0
        %3296 = vmatprep.subr.bf16.mxu0 0
        %3297 = vmatpush1.bf16.msra.mxu0 0
        %3298 = vmatprep.subr.bf16.mxu0 0
        %3299 = vmatpush1.bf16.msra.mxu0 0
        %3300 = vmatprep.subr.bf16.mxu0 0
        %3301 = vmatpush1.bf16.msra.mxu0 0
        %3302 = vmatprep.subr.bf16.mxu0 0
        %3303 = vmatpush1.bf16.msra.mxu0 0
        %3304 = vmatprep.subr.bf16.mxu0 0
        %3305 = vmatpush1.bf16.msra.mxu0 0
        %3306 = vmatprep.subr.bf16.mxu0 0
        %3307 = vmatpush1.bf16.msra.mxu0 0
        %3308 = vmatprep.subr.bf16.mxu0 0
        %3309 = vmatpush1.bf16.msra.mxu0 0
        %3310 = vmatprep.subr.bf16.mxu0 0
        %3311 = vmatpush1.bf16.msra.mxu0 0
        %3312 = vmatprep.subr.bf16.mxu0 0
        %3313 = vmatpush1.bf16.msra.mxu0 0
        %3314 = vmatprep.subr.bf16.mxu0 0
        %3315 = vmatpush1.bf16.msra.mxu0 0
        %3316 = vmatprep.mubr.bf16.mxu0 0
        %3317 = vmatmul.mubr.bf16.gmra.mrb[0].mxu0 %v3279
        %v3318 = vpop.f32.mrb[0].mxu0
        %v3319 = vadd.f32 %v3251, %v3318
        %v3320 = vpop.f32.mrb[0].mxu0
        %v3321 = vadd.f32 %v3251, %v3320
        %v3322 = vpop.f32.mrb[0].mxu0
        %v3323 = vadd.f32 %v3256, %v3322
        %v3324 = vpop.f32.mrb[0].mxu0
        %v3325 = vadd.f32 %v3256, %v3324
        %3326 = vmatprep.mubr.bf16.mxu0 0
        %3327 = vmatmul.mubr.bf16.gmra.mrb[0].mxu0 %v3282
        %v3328 = vpop.f32.mrb[0].mxu0
        %v3329 = vadd.f32 %v3261, %v3328
        %v3330 = vpop.f32.mrb[0].mxu0
        %v3331 = vadd.f32 %v3261, %v3330
        %v3332 = vpop.f32.mrb[0].mxu0
        %v3333 = vadd.f32 %v3266, %v3332
        %v3334 = vpop.f32.mrb[0].mxu0
        %v3335 = vadd.f32 %v3266, %v3334
        %3336 = vdwg.mxu0
        %s3337 = sld [smem:[#allocation3 + $0x1]]
        %v3338 = vld [vmem:[%s10] sm:$0xf]
        %v3339 = vld [vmem:[%s10 + $0x4] sm:$0xf]
        %v3340 = vld [vmem:[%s10 + $0x8] sm:$0xf]
        %v3341 = vld [vmem:[%s10 + $0xc] sm:$0xf]
        %v3342 = vpack.c.bf16 %v729, %v727
        %v3343 = vpack.c.bf16 %v730, %v728
        %v3344 = vpack.c.bf16 %v733, %v731
        %v3345 = vpack.c.bf16 %v734, %v732
        %v3346 = vld [vmem:[%s11] sm:$0xff]
        %v3347 = vld [vmem:[%s11 + $0x8] sm:$0xff]
        %v3348 = vld [vmem:[%s11 + $0x10] sm:$0xff]
        %v3349 = vld [vmem:[%s11 + $0x18] sm:$0xff]
        %3351 = vset.pattern.permute.xlu0 0
        %3352 = vperm.xlu0 %3351, %v3346
        %v3353 = vpop.permute.xlu0 %3352
        %3356 = vset.pattern.permute.xlu0 0
        %3357 = vperm.xlu0 %3356, %v3347
        %v3358 = vpop.permute.xlu0 %3357
        %3361 = vset.pattern.permute.xlu0 0
        %3362 = vperm.xlu0 %3361, %v3348
        %v3363 = vpop.permute.xlu0 %3362
        %3366 = vset.pattern.permute.xlu0 0
        %3367 = vperm.xlu0 %3366, %v3349
        %v3368 = vpop.permute.xlu0 %3367
        %v3374 = vunpack.c.l.b16 %v3338
        %v3375 = vunpack.c.l.b16 %v3339
        %v3376 = vunpack.c.l.b16 %v3340
        %v3377 = vunpack.c.l.b16 %v3341
        %v3378 = vpack.c.b16 %v3375, %v3374
        %v3379 = vpack.c.b16 %v3377, %v3376
        %v3381 = vsel %vm778, %v3378, 0
        %v3384 = vsel %vm778, %v3379, 0
        %3386 = vmatprep.subr.bf16.mxu0 %v3343
        %3387 = vmatpush1.bf16.msra.mxu0 %v3342
        %3388 = vmatprep.subr.bf16.mxu0 %v3345
        %3389 = vmatpush1.bf16.msra.mxu0 %v3344
        %3390 = vmatprep.subr.bf16.mxu0 0
        %3391 = vmatpush1.bf16.msra.mxu0 0
        %3392 = vmatprep.subr.bf16.mxu0 0
        %3393 = vmatpush1.bf16.msra.mxu0 0
        %3394 = vmatprep.subr.bf16.mxu0 0
        %3395 = vmatpush1.bf16.msra.mxu0 0
        %3396 = vmatprep.subr.bf16.mxu0 0
        %3397 = vmatpush1.bf16.msra.mxu0 0
        %3398 = vmatprep.subr.bf16.mxu0 0
        %3399 = vmatpush1.bf16.msra.mxu0 0
        %3400 = vmatprep.subr.bf16.mxu0 0
        %3401 = vmatpush1.bf16.msra.mxu0 0
        %3402 = vmatprep.subr.bf16.mxu0 0
        %3403 = vmatpush1.bf16.msra.mxu0 0
        %3404 = vmatprep.subr.bf16.mxu0 0
        %3405 = vmatpush1.bf16.msra.mxu0 0
        %3406 = vmatprep.subr.bf16.mxu0 0
        %3407 = vmatpush1.bf16.msra.mxu0 0
        %3408 = vmatprep.subr.bf16.mxu0 0
        %3409 = vmatpush1.bf16.msra.mxu0 0
        %3410 = vmatprep.subr.bf16.mxu0 0
        %3411 = vmatpush1.bf16.msra.mxu0 0
        %3412 = vmatprep.subr.bf16.mxu0 0
        %3413 = vmatpush1.bf16.msra.mxu0 0
        %3414 = vmatprep.subr.bf16.mxu0 0
        %3415 = vmatpush1.bf16.msra.mxu0 0
        %3416 = vmatprep.subr.bf16.mxu0 0
        %3417 = vmatpush1.bf16.msra.mxu0 0
        %3418 = vmatprep.mubr.bf16.mxu0 0
        %3419 = vmatmul.mubr.bf16.gmra.mrb[0].mxu0 %v3381
        %v3420 = vpop.f32.mrb[0].mxu0
        %v3421 = vadd.f32 %v3353, %v3420
        %v3422 = vpop.f32.mrb[0].mxu0
        %v3423 = vadd.f32 %v3353, %v3422
        %v3424 = vpop.f32.mrb[0].mxu0
        %v3425 = vadd.f32 %v3358, %v3424
        %v3426 = vpop.f32.mrb[0].mxu0
        %v3427 = vadd.f32 %v3358, %v3426
        %3428 = vmatprep.mubr.bf16.mxu0 0
        %3429 = vmatmul.mubr.bf16.gmra.mrb[0].mxu0 %v3384
        %v3430 = vpop.f32.mrb[0].mxu0
        %v3431 = vadd.f32 %v3363, %v3430
        %v3432 = vpop.f32.mrb[0].mxu0
        %v3433 = vadd.f32 %v3363, %v3432
        %v3434 = vpop.f32.mrb[0].mxu0
        %v3435 = vadd.f32 %v3368, %v3434
        %v3436 = vpop.f32.mrb[0].mxu0
        %v3437 = vadd.f32 %v3368, %v3436
        %3438 = vdwg.mxu0
        %v3439 = vpack.c.bf16 %v3425, %v3421
        %v3440 = vpack.c.bf16 %v3427, %v3423
        %v3441 = vpack.c.bf16 %v3435, %v3431
        %v3442 = vpack.c.bf16 %v3437, %v3433
        %3443 = vmatprep.subr.bf16.mxu0 %v1621
        %3444 = vmatpush1.bf16.msra.mxu0 %v1620
        %3445 = vmatprep.subr.bf16.mxu0 %v1623
        %3446 = vmatpush1.bf16.msra.mxu0 %v1622
        %3447 = vmatprep.subr.bf16.mxu0 %v1625
        %3448 = vmatpush1.bf16.msra.mxu0 %v1624
        %3449 = vmatprep.subr.bf16.mxu0 %v1627
        %3450 = vmatpush1.bf16.msra.mxu0 %v1626
        %3451 = vmatprep.subr.bf16.mxu0 %v1629
        %3452 = vmatpush1.bf16.msra.mxu0 %v1628
        %3453 = vmatprep.subr.bf16.mxu0 %v1631
        %3454 = vmatpush1.bf16.msra.mxu0 %v1630
        %3455 = vmatprep.subr.bf16.mxu0 %v1633
        %3456 = vmatpush1.bf16.msra.mxu0 %v1632
        %3457 = vmatprep.subr.bf16.mxu0 %v1635
        %3458 = vmatpush1.bf16.msra.mxu0 %v1634
        %3459 = vmatprep.subr.bf16.mxu0 %v1637
        %3460 = vmatpush1.bf16.msra.mxu0 %v1636
        %3461 = vmatprep.subr.bf16.mxu0 %v1639
        %3462 = vmatpush1.bf16.msra.mxu0 %v1638
        %3463 = vmatprep.subr.bf16.mxu0 %v1641
        %3464 = vmatpush1.bf16.msra.mxu0 %v1640
        %3465 = vmatprep.subr.bf16.mxu0 %v1643
        %3466 = vmatpush1.bf16.msra.mxu0 %v1642
        %3467 = vmatprep.subr.bf16.mxu0 %v1645
        %3468 = vmatpush1.bf16.msra.mxu0 %v1644
        %3469 = vmatprep.subr.bf16.mxu0 %v1647
        %3470 = vmatpush1.bf16.msra.mxu0 %v1646
        %3471 = vmatprep.subr.bf16.mxu0 %v1649
        %3472 = vmatpush1.bf16.msra.mxu0 %v1648
        %3473 = vmatprep.subr.bf16.mxu0 %v1651
        %3474 = vmatpush1.bf16.msra.mxu0 %v1650
        %3475 = vmatprep.mubr.bf16.mxu0 %v3440
        %3476 = vmatmul.mubr.bf16.gmra.mrb[0].mxu0 %v3439
        %v3477 = vpop.f32.mrb[0].mxu0
        %v3478 = vadd.f32 0.0, %v3477
        %v3479 = vpop.f32.mrb[0].mxu0
        %v3480 = vadd.f32 0.0, %v3479
        %v3481 = vpop.f32.mrb[0].mxu0
        %v3482 = vadd.f32 0.0, %v3481
        %v3483 = vpop.f32.mrb[0].mxu0
        %v3484 = vadd.f32 0.0, %v3483
        %3485 = vmatprep.mubr.bf16.mxu0 %v3442
        %3486 = vmatmul.mubr.bf16.gmra.mrb[0].mxu0 %v3441
        %v3487 = vpop.f32.mrb[0].mxu0
        %v3488 = vadd.f32 0.0, %v3487
        %v3489 = vpop.f32.mrb[0].mxu0
        %v3490 = vadd.f32 0.0, %v3489
        %v3491 = vpop.f32.mrb[0].mxu0
        %v3492 = vadd.f32 0.0, %v3491
        %v3493 = vpop.f32.mrb[0].mxu0
        %v3494 = vadd.f32 0.0, %v3493
        %3495 = vdwg.mxu0
        %v3496 = vstv %s3337
        %v3497 = vmul.f32 %v3496, %v3478
        %v3498 = vmul.f32 %v3496, %v3480
        %v3499 = vmul.f32 %v3496, %v3482
        %v3500 = vmul.f32 %v3496, %v3484
        %v3501 = vmul.f32 %v3496, %v3488
        %v3502 = vmul.f32 %v3496, %v3490
        %v3503 = vmul.f32 %v3496, %v3492
        %v3504 = vmul.f32 %v3496, %v3494
        %v3505 = vadd.f32 %v3497, %v727
        %v3506 = vadd.f32 %v3498, %v728
        %v3507 = vadd.f32 %v3499, %v729
        %v3508 = vadd.f32 %v3500, %v730
        %v3509 = vadd.f32 %v3501, %v731
        %v3510 = vadd.f32 %v3502, %v732
        %v3511 = vadd.f32 %v3503, %v733
        %v3512 = vadd.f32 %v3504, %v734
        %3521 = vrot.lane.b32.xlu0 %v3505, 17
        %v3522 = vpop.permute.xlu0 %3521
        %3523 = vrot.lane.b32.xlu0 %v3506, 17
        %v3524 = vpop.permute.xlu0 %3523
        %3525 = vrot.lane.b32.xlu0 %v3507, 17
        %v3526 = vpop.permute.xlu0 %3525
        %3527 = vrot.lane.b32.xlu0 %v3508, 17
        %v3528 = vpop.permute.xlu0 %3527
        %3529 = vrot.lane.b32.xlu0 %v3509, 17
        %v3530 = vpop.permute.xlu0 %3529
        %3531 = vrot.lane.b32.xlu0 %v3510, 17
        %v3532 = vpop.permute.xlu0 %3531
        %3533 = vrot.lane.b32.xlu0 %v3511, 17
        %v3534 = vpop.permute.xlu0 %3533
        %3535 = vrot.lane.b32.xlu0 %v3512, 17
        %v3536 = vpop.permute.xlu0 %3535
        %v3537 = vsel %vm1852, %v3522, %v3524
        %v3538 = vsel %vm1852, %v3526, %v3528
        %v3539 = vsel %vm1852, %v3530, %v3532
        %v3540 = vsel %vm1852, %v3534, %v3536
        %3549 = vst.msk [vmem:[#allocation2] sm:$0xff] %vm1865, %v3522
        %3550 = vst [vmem:[#allocation2 + $0x8] sm:$0xff] %v3537
        %3551 = vst.msk [vmem:[#allocation2 + $0x10] sm:$0xff] %vm1865, %v3526
        %3552 = vst [vmem:[#allocation2 + $0x18] sm:$0xff] %v3538
        %3553 = vst.msk [vmem:[#allocation2 + $0x20] sm:$0xff] %vm1865, %v3530
        %3554 = vst [vmem:[#allocation2 + $0x28] sm:$0xff] %v3539
        %3555 = vst.msk [vmem:[#allocation2 + $0x30] sm:$0xff] %vm1865, %v3534
        %3556 = vst [vmem:[#allocation2 + $0x38] sm:$0xff] %v3540
        %3557 = vst.msk [vmem:[#allocation2] sm:$0xff] %vm1852, 0.0
        %3558 = vst.msk [vmem:[#allocation2 + $0x10] sm:$0xff] %vm1852, 0.0
        %3559 = vst.msk [vmem:[#allocation2 + $0x20] sm:$0xff] %vm1852, 0.0
        %3560 = vst.msk [vmem:[#allocation2 + $0x30] sm:$0xff] %vm1852, 0.0
        %v3561 = vld [vmem:[#allocation2] sm:$0xff]
        %v3562 = vld [vmem:[#allocation2 + $0x8] sm:$0xff]
        %v3563 = vld [vmem:[#allocation2 + $0x10] sm:$0xff]
        %v3564 = vld [vmem:[#allocation2 + $0x18] sm:$0xff]
        %v3565 = vld [vmem:[#allocation2 + $0x20] sm:$0xff]
        %v3566 = vld [vmem:[#allocation2 + $0x28] sm:$0xff]
        %v3567 = vld [vmem:[#allocation2 + $0x30] sm:$0xff]
        %v3568 = vld [vmem:[#allocation2 + $0x38] sm:$0xff]
        %v3569 = vld [vmem:[%s1] ss:$8 sm:$0x3]
        %v3571 = vlaneseq
        %v3572 = vshrl.u32 %v3571, 7
        %v3573 = vsub.s32 0, %v3572
        %v3574 = vrot.slane %v3569, %v3573
        %v3575 = vlaneseq
        %v3576 = vshrl.u32 %v3575, 7
        %v3577 = vsub.s32 1, %v3576
        %v3578 = vrot.slane %v3569, %v3577
        %v3581 = vmul.f32 %v3561, %v3574
        %v3582 = vmul.f32 %v3562, %v3578
        %v3583 = vmul.f32 %v3563, %v3574
        %v3584 = vmul.f32 %v3564, %v3578
        %v3585 = vmul.f32 %v3565, %v3574
        %v3586 = vmul.f32 %v3566, %v3578
        %v3587 = vmul.f32 %v3567, %v3574
        %v3588 = vmul.f32 %v3568, %v3578
        %v3589 = vpack.c.bf16 %v3583, %v3581
        %v3590 = vpack.c.bf16 %v3584, %v3582
        %v3591 = vpack.c.bf16 %v3587, %v3585
        %v3592 = vpack.c.bf16 %v3588, %v3586
        %v3593 = vld [vmem:[%s16] sm:$0xf]
        %v3594 = vld [vmem:[%s16 + $0x4] sm:$0xf]
        %v3595 = vld [vmem:[%s16 + $0x8] sm:$0xf]
        %v3596 = vld [vmem:[%s16 + $0xc] sm:$0xf]
        %3597 = vrot.lane.b32.xlu0 %v3505, 16
        %v3598 = vpop.permute.xlu0 %3597
        %3599 = vrot.lane.b32.xlu0 %v3506, 16
        %v3600 = vpop.permute.xlu0 %3599
        %3601 = vrot.lane.b32.xlu0 %v3507, 16
        %v3602 = vpop.permute.xlu0 %3601
        %3603 = vrot.lane.b32.xlu0 %v3508, 16
        %v3604 = vpop.permute.xlu0 %3603
        %3605 = vrot.lane.b32.xlu0 %v3509, 16
        %v3606 = vpop.permute.xlu0 %3605
        %3607 = vrot.lane.b32.xlu0 %v3510, 16
        %v3608 = vpop.permute.xlu0 %3607
        %3609 = vrot.lane.b32.xlu0 %v3511, 16
        %v3610 = vpop.permute.xlu0 %3609
        %3611 = vrot.lane.b32.xlu0 %v3512, 16
        %v3612 = vpop.permute.xlu0 %3611
        %v3613 = vsel %vm972, %v3598, %v3600
        %v3614 = vsel %vm972, %v3602, %v3604
        %v3615 = vsel %vm972, %v3606, %v3608
        %v3616 = vsel %vm972, %v3610, %v3612
        %3625 = vst.msk [vmem:[#allocation2] sm:$0xff] %vm1942, %v3598
        %3626 = vst [vmem:[#allocation2 + $0x8] sm:$0xff] %v3613
        %3627 = vst.msk [vmem:[#allocation2 + $0x10] sm:$0xff] %vm1942, %v3602
        %3628 = vst [vmem:[#allocation2 + $0x18] sm:$0xff] %v3614
        %3629 = vst.msk [vmem:[#allocation2 + $0x20] sm:$0xff] %vm1942, %v3606
        %3630 = vst [vmem:[#allocation2 + $0x28] sm:$0xff] %v3615
        %3631 = vst.msk [vmem:[#allocation2 + $0x30] sm:$0xff] %vm1942, %v3610
        %3632 = vst [vmem:[#allocation2 + $0x38] sm:$0xff] %v3616
        %3633 = vst.msk [vmem:[#allocation2] sm:$0xff] %vm972, 0.0
        %3634 = vst.msk [vmem:[#allocation2 + $0x10] sm:$0xff] %vm972, 0.0
        %3635 = vst.msk [vmem:[#allocation2 + $0x20] sm:$0xff] %vm972, 0.0
        %3636 = vst.msk [vmem:[#allocation2 + $0x30] sm:$0xff] %vm972, 0.0
        %v3637 = vld [vmem:[#allocation2] sm:$0xff]
        %v3638 = vld [vmem:[#allocation2 + $0x8] sm:$0xff]
        %v3639 = vld [vmem:[#allocation2 + $0x10] sm:$0xff]
        %v3640 = vld [vmem:[#allocation2 + $0x18] sm:$0xff]
        %v3641 = vld [vmem:[#allocation2 + $0x20] sm:$0xff]
        %v3642 = vld [vmem:[#allocation2 + $0x28] sm:$0xff]
        %v3643 = vld [vmem:[#allocation2 + $0x30] sm:$0xff]
        %v3644 = vld [vmem:[#allocation2 + $0x38] sm:$0xff]
        %v3645 = vld [vmem:[%s1963] ss:$8 sm:$0x3]
        %v3647 = vlaneseq
        %v3648 = vshrl.u32 %v3647, 7
        %v3649 = vsub.s32 0, %v3648
        %v3650 = vrot.slane %v3645, %v3649
        %v3651 = vlaneseq
        %v3652 = vshrl.u32 %v3651, 7
        %v3653 = vsub.s32 1, %v3652
        %v3654 = vrot.slane %v3645, %v3653
        %v3657 = vmul.f32 %v3637, %v3650
        %v3658 = vmul.f32 %v3638, %v3654
        %v3659 = vmul.f32 %v3639, %v3650
        %v3660 = vmul.f32 %v3640, %v3654
        %v3661 = vmul.f32 %v3641, %v3650
        %v3662 = vmul.f32 %v3642, %v3654
        %v3663 = vmul.f32 %v3643, %v3650
        %v3664 = vmul.f32 %v3644, %v3654
        %v3665 = vpack.c.bf16 %v3659, %v3657
        %v3666 = vpack.c.bf16 %v3660, %v3658
        %v3667 = vpack.c.bf16 %v3663, %v3661
        %v3668 = vpack.c.bf16 %v3664, %v3662
        %s3669 = scalar_lea.vmem %s16, 16
        %v3670 = vld [vmem:[%s3669] sm:$0xf]
        %v3671 = vld [vmem:[%s3669 + $0x4] sm:$0xf]
        %v3672 = vld [vmem:[%s3669 + $0x8] sm:$0xf]
        %v3673 = vld [vmem:[%s3669 + $0xc] sm:$0xf]
        %v3678 = vunpack.c.l.b16 %v3670
        %v3679 = vunpack.c.l.b16 %v3671
        %v3680 = vunpack.c.l.b16 %v3672
        %v3681 = vunpack.c.l.b16 %v3673
        %v3682 = vpack.c.b16 %v3679, %v3678
        %v3683 = vpack.c.b16 %v3681, %v3680
        %v3685 = vsel %vm778, %v3682, 0
        %v3688 = vsel %vm778, %v3683, 0
        %3690 = vmatprep.subr.bf16.mxu0 %v3666
        %3691 = vmatpush1.bf16.msra.mxu0 %v3665
        %3692 = vmatprep.subr.bf16.mxu0 %v3668
        %3693 = vmatpush1.bf16.msra.mxu0 %v3667
        %3694 = vmatprep.subr.bf16.mxu0 0
        %3695 = vmatpush1.bf16.msra.mxu0 0
        %3696 = vmatprep.subr.bf16.mxu0 0
        %3697 = vmatpush1.bf16.msra.mxu0 0
        %3698 = vmatprep.subr.bf16.mxu0 0
        %3699 = vmatpush1.bf16.msra.mxu0 0
        %3700 = vmatprep.subr.bf16.mxu0 0
        %3701 = vmatpush1.bf16.msra.mxu0 0
        %3702 = vmatprep.subr.bf16.mxu0 0
        %3703 = vmatpush1.bf16.msra.mxu0 0
        %3704 = vmatprep.subr.bf16.mxu0 0
        %3705 = vmatpush1.bf16.msra.mxu0 0
        %3706 = vmatprep.subr.bf16.mxu0 0
        %3707 = vmatpush1.bf16.msra.mxu0 0
        %3708 = vmatprep.subr.bf16.mxu0 0
        %3709 = vmatpush1.bf16.msra.mxu0 0
        %3710 = vmatprep.subr.bf16.mxu0 0
        %3711 = vmatpush1.bf16.msra.mxu0 0
        %3712 = vmatprep.subr.bf16.mxu0 0
        %3713 = vmatpush1.bf16.msra.mxu0 0
        %3714 = vmatprep.subr.bf16.mxu0 0
        %3715 = vmatpush1.bf16.msra.mxu0 0
        %3716 = vmatprep.subr.bf16.mxu0 0
        %3717 = vmatpush1.bf16.msra.mxu0 0
        %3718 = vmatprep.subr.bf16.mxu0 0
        %3719 = vmatpush1.bf16.msra.mxu0 0
        %3720 = vmatprep.subr.bf16.mxu0 0
        %3721 = vmatpush1.bf16.msra.mxu0 0
        %3722 = vmatprep.mubr.bf16.mxu0 0
        %3723 = vmatmul.mubr.bf16.gmra.mrb[0].mxu0 %v3685
        %v3724 = vpop.f32.mrb[0].mxu0
        %v3725 = vadd.f32 0.0, %v3724
        %v3726 = vpop.f32.mrb[0].mxu0
        %v3727 = vadd.f32 0.0, %v3726
        %v3728 = vpop.f32.mrb[0].mxu0
        %v3729 = vadd.f32 0.0, %v3728
        %v3730 = vpop.f32.mrb[0].mxu0
        %v3731 = vadd.f32 0.0, %v3730
        %3732 = vmatprep.mubr.bf16.mxu0 0
        %3733 = vmatmul.mubr.bf16.gmra.mrb[0].mxu0 %v3688
        %v3734 = vpop.f32.mrb[0].mxu0
        %v3735 = vadd.f32 0.0, %v3734
        %v3736 = vpop.f32.mrb[0].mxu0
        %v3737 = vadd.f32 0.0, %v3736
        %v3738 = vpop.f32.mrb[0].mxu0
        %v3739 = vadd.f32 0.0, %v3738
        %v3740 = vpop.f32.mrb[0].mxu0
        %v3741 = vadd.f32 0.0, %v3740
        %3742 = vdwg.mxu0
        %v3747 = vunpack.c.l.b16 %v3593
        %v3748 = vunpack.c.l.b16 %v3594
        %v3749 = vunpack.c.l.b16 %v3595
        %v3750 = vunpack.c.l.b16 %v3596
        %v3751 = vpack.c.b16 %v3748, %v3747
        %v3752 = vpack.c.b16 %v3750, %v3749
        %v3754 = vsel %vm778, %v3751, 0
        %v3757 = vsel %vm778, %v3752, 0
        %3759 = vmatprep.subr.bf16.mxu0 %v3590
        %3760 = vmatpush1.bf16.msra.mxu0 %v3589
        %3761 = vmatprep.subr.bf16.mxu0 %v3592
        %3762 = vmatpush1.bf16.msra.mxu0 %v3591
        %3763 = vmatprep.subr.bf16.mxu0 0
        %3764 = vmatpush1.bf16.msra.mxu0 0
        %3765 = vmatprep.subr.bf16.mxu0 0
        %3766 = vmatpush1.bf16.msra.mxu0 0
        %3767 = vmatprep.subr.bf16.mxu0 0
        %3768 = vmatpush1.bf16.msra.mxu0 0
        %3769 = vmatprep.subr.bf16.mxu0 0
        %3770 = vmatpush1.bf16.msra.mxu0 0
        %3771 = vmatprep.subr.bf16.mxu0 0
        %3772 = vmatpush1.bf16.msra.mxu0 0
        %3773 = vmatprep.subr.bf16.mxu0 0
        %3774 = vmatpush1.bf16.msra.mxu0 0
        %3775 = vmatprep.subr.bf16.mxu0 0
        %3776 = vmatpush1.bf16.msra.mxu0 0
        %3777 = vmatprep.subr.bf16.mxu0 0
        %3778 = vmatpush1.bf16.msra.mxu0 0
        %3779 = vmatprep.subr.bf16.mxu0 0
        %3780 = vmatpush1.bf16.msra.mxu0 0
        %3781 = vmatprep.subr.bf16.mxu0 0
        %3782 = vmatpush1.bf16.msra.mxu0 0
        %3783 = vmatprep.subr.bf16.mxu0 0
        %3784 = vmatpush1.bf16.msra.mxu0 0
        %3785 = vmatprep.subr.bf16.mxu0 0
        %3786 = vmatpush1.bf16.msra.mxu0 0
        %3787 = vmatprep.subr.bf16.mxu0 0
        %3788 = vmatpush1.bf16.msra.mxu0 0
        %3789 = vmatprep.subr.bf16.mxu0 0
        %3790 = vmatpush1.bf16.msra.mxu0 0
        %3791 = vmatprep.mubr.bf16.mxu0 0
        %3792 = vmatmul.mubr.bf16.gmra.mrb[0].mxu0 %v3754
        %v3793 = vpop.f32.mrb[0].mxu0
        %v3794 = vadd.f32 %v3725, %v3793
        %v3795 = vpop.f32.mrb[0].mxu0
        %v3796 = vadd.f32 %v3727, %v3795
        %v3797 = vpop.f32.mrb[0].mxu0
        %v3798 = vadd.f32 %v3729, %v3797
        %v3799 = vpop.f32.mrb[0].mxu0
        %v3800 = vadd.f32 %v3731, %v3799
        %3801 = vmatprep.mubr.bf16.mxu0 0
        %3802 = vmatmul.mubr.bf16.gmra.mrb[0].mxu0 %v3757
        %v3803 = vpop.f32.mrb[0].mxu0
        %v3804 = vadd.f32 %v3735, %v3803
        %v3805 = vpop.f32.mrb[0].mxu0
        %v3806 = vadd.f32 %v3737, %v3805
        %v3807 = vpop.f32.mrb[0].mxu0
        %v3808 = vadd.f32 %v3739, %v3807
        %v3809 = vpop.f32.mrb[0].mxu0
        %v3810 = vadd.f32 %v3741, %v3809
        %3811 = vdwg.mxu0
        %3812 = vrot.lane.b32.xlu0 %v3505, 15
        %v3813 = vpop.permute.xlu0 %3812
        %3814 = vrot.lane.b32.xlu0 %v3506, 15
        %v3815 = vpop.permute.xlu0 %3814
        %3816 = vrot.lane.b32.xlu0 %v3507, 15
        %v3817 = vpop.permute.xlu0 %3816
        %3818 = vrot.lane.b32.xlu0 %v3508, 15
        %v3819 = vpop.permute.xlu0 %3818
        %3820 = vrot.lane.b32.xlu0 %v3509, 15
        %v3821 = vpop.permute.xlu0 %3820
        %3822 = vrot.lane.b32.xlu0 %v3510, 15
        %v3823 = vpop.permute.xlu0 %3822
        %3824 = vrot.lane.b32.xlu0 %v3511, 15
        %v3825 = vpop.permute.xlu0 %3824
        %3826 = vrot.lane.b32.xlu0 %v3512, 15
        %v3827 = vpop.permute.xlu0 %3826
        %v3828 = vsel %vm2147, %v3813, %v3815
        %v3829 = vsel %vm2147, %v3817, %v3819
        %v3830 = vsel %vm2147, %v3821, %v3823
        %v3831 = vsel %vm2147, %v3825, %v3827
        %3840 = vst.msk [vmem:[#allocation2] sm:$0xff] %vm2160, %v3813
        %3841 = vst [vmem:[#allocation2 + $0x8] sm:$0xff] %v3828
        %3842 = vst.msk [vmem:[#allocation2 + $0x10] sm:$0xff] %vm2160, %v3817
        %3843 = vst [vmem:[#allocation2 + $0x18] sm:$0xff] %v3829
        %3844 = vst.msk [vmem:[#allocation2 + $0x20] sm:$0xff] %vm2160, %v3821
        %3845 = vst [vmem:[#allocation2 + $0x28] sm:$0xff] %v3830
        %3846 = vst.msk [vmem:[#allocation2 + $0x30] sm:$0xff] %vm2160, %v3825
        %3847 = vst [vmem:[#allocation2 + $0x38] sm:$0xff] %v3831
        %3848 = vst.msk [vmem:[#allocation2] sm:$0xff] %vm2147, 0.0
        %3849 = vst.msk [vmem:[#allocation2 + $0x10] sm:$0xff] %vm2147, 0.0
        %3850 = vst.msk [vmem:[#allocation2 + $0x20] sm:$0xff] %vm2147, 0.0
        %3851 = vst.msk [vmem:[#allocation2 + $0x30] sm:$0xff] %vm2147, 0.0
        %v3852 = vld [vmem:[#allocation2] sm:$0xff]
        %v3853 = vld [vmem:[#allocation2 + $0x8] sm:$0xff]
        %v3854 = vld [vmem:[#allocation2 + $0x10] sm:$0xff]
        %v3855 = vld [vmem:[#allocation2 + $0x18] sm:$0xff]
        %v3856 = vld [vmem:[#allocation2 + $0x20] sm:$0xff]
        %v3857 = vld [vmem:[#allocation2 + $0x28] sm:$0xff]
        %v3858 = vld [vmem:[#allocation2 + $0x30] sm:$0xff]
        %v3859 = vld [vmem:[#allocation2 + $0x38] sm:$0xff]
        %v3860 = vld [vmem:[%s2181] ss:$8 sm:$0x3]
        %v3862 = vlaneseq
        %v3863 = vshrl.u32 %v3862, 7
        %v3864 = vsub.s32 0, %v3863
        %v3865 = vrot.slane %v3860, %v3864
        %v3866 = vlaneseq
        %v3867 = vshrl.u32 %v3866, 7
        %v3868 = vsub.s32 1, %v3867
        %v3869 = vrot.slane %v3860, %v3868
        %v3872 = vmul.f32 %v3852, %v3865
        %v3873 = vmul.f32 %v3853, %v3869
        %v3874 = vmul.f32 %v3854, %v3865
        %v3875 = vmul.f32 %v3855, %v3869
        %v3876 = vmul.f32 %v3856, %v3865
        %v3877 = vmul.f32 %v3857, %v3869
        %v3878 = vmul.f32 %v3858, %v3865
        %v3879 = vmul.f32 %v3859, %v3869
        %v3880 = vpack.c.bf16 %v3874, %v3872
        %v3881 = vpack.c.bf16 %v3875, %v3873
        %v3882 = vpack.c.bf16 %v3878, %v3876
        %v3883 = vpack.c.bf16 %v3879, %v3877
        %s3884 = scalar_lea.vmem %s16, 32
        %v3885 = vld [vmem:[%s3884] sm:$0xf]
        %v3886 = vld [vmem:[%s3884 + $0x4] sm:$0xf]
        %v3887 = vld [vmem:[%s3884 + $0x8] sm:$0xf]
        %v3888 = vld [vmem:[%s3884 + $0xc] sm:$0xf]
        %v3893 = vunpack.c.l.b16 %v3885
        %v3894 = vunpack.c.l.b16 %v3886
        %v3895 = vunpack.c.l.b16 %v3887
        %v3896 = vunpack.c.l.b16 %v3888
        %v3897 = vpack.c.b16 %v3894, %v3893
        %v3898 = vpack.c.b16 %v3896, %v3895
        %v3900 = vsel %vm778, %v3897, 0
        %v3903 = vsel %vm778, %v3898, 0
        %3905 = vmatprep.subr.bf16.mxu0 %v3881
        %3906 = vmatpush1.bf16.msra.mxu0 %v3880
        %3907 = vmatprep.subr.bf16.mxu0 %v3883
        %3908 = vmatpush1.bf16.msra.mxu0 %v3882
        %3909 = vmatprep.subr.bf16.mxu0 0
        %3910 = vmatpush1.bf16.msra.mxu0 0
        %3911 = vmatprep.subr.bf16.mxu0 0
        %3912 = vmatpush1.bf16.msra.mxu0 0
        %3913 = vmatprep.subr.bf16.mxu0 0
        %3914 = vmatpush1.bf16.msra.mxu0 0
        %3915 = vmatprep.subr.bf16.mxu0 0
        %3916 = vmatpush1.bf16.msra.mxu0 0
        %3917 = vmatprep.subr.bf16.mxu0 0
        %3918 = vmatpush1.bf16.msra.mxu0 0
        %3919 = vmatprep.subr.bf16.mxu0 0
        %3920 = vmatpush1.bf16.msra.mxu0 0
        %3921 = vmatprep.subr.bf16.mxu0 0
        %3922 = vmatpush1.bf16.msra.mxu0 0
        %3923 = vmatprep.subr.bf16.mxu0 0
        %3924 = vmatpush1.bf16.msra.mxu0 0
        %3925 = vmatprep.subr.bf16.mxu0 0
        %3926 = vmatpush1.bf16.msra.mxu0 0
        %3927 = vmatprep.subr.bf16.mxu0 0
        %3928 = vmatpush1.bf16.msra.mxu0 0
        %3929 = vmatprep.subr.bf16.mxu0 0
        %3930 = vmatpush1.bf16.msra.mxu0 0
        %3931 = vmatprep.subr.bf16.mxu0 0
        %3932 = vmatpush1.bf16.msra.mxu0 0
        %3933 = vmatprep.subr.bf16.mxu0 0
        %3934 = vmatpush1.bf16.msra.mxu0 0
        %3935 = vmatprep.subr.bf16.mxu0 0
        %3936 = vmatpush1.bf16.msra.mxu0 0
        %3937 = vmatprep.mubr.bf16.mxu0 0
        %3938 = vmatmul.mubr.bf16.gmra.mrb[0].mxu0 %v3900
        %v3939 = vpop.f32.mrb[0].mxu0
        %v3940 = vadd.f32 0.0, %v3939
        %v3941 = vpop.f32.mrb[0].mxu0
        %v3942 = vadd.f32 0.0, %v3941
        %v3943 = vpop.f32.mrb[0].mxu0
        %v3944 = vadd.f32 0.0, %v3943
        %v3945 = vpop.f32.mrb[0].mxu0
        %v3946 = vadd.f32 0.0, %v3945
        %3947 = vmatprep.mubr.bf16.mxu0 0
        %3948 = vmatmul.mubr.bf16.gmra.mrb[0].mxu0 %v3903
        %v3949 = vpop.f32.mrb[0].mxu0
        %v3950 = vadd.f32 0.0, %v3949
        %v3951 = vpop.f32.mrb[0].mxu0
        %v3952 = vadd.f32 0.0, %v3951
        %v3953 = vpop.f32.mrb[0].mxu0
        %v3954 = vadd.f32 0.0, %v3953
        %v3955 = vpop.f32.mrb[0].mxu0
        %v3956 = vadd.f32 0.0, %v3955
        %3957 = vdwg.mxu0
        %v3958 = vadd.f32 %v3794, %v3940
        %v3959 = vadd.f32 %v3796, %v3942
        %v3960 = vadd.f32 %v3798, %v3944
        %v3961 = vadd.f32 %v3800, %v3946
        %v3962 = vadd.f32 %v3804, %v3950
        %v3963 = vadd.f32 %v3806, %v3952
        %v3964 = vadd.f32 %v3808, %v3954
        %v3965 = vadd.f32 %v3810, %v3956
        %3966 = vrot.lane.b32.xlu0 %v3505, 1
        %v3967 = vpop.permute.xlu0 %3966
        %3968 = vrot.lane.b32.xlu0 %v3506, 1
        %v3969 = vpop.permute.xlu0 %3968
        %3970 = vrot.lane.b32.xlu0 %v3507, 1
        %v3971 = vpop.permute.xlu0 %3970
        %3972 = vrot.lane.b32.xlu0 %v3508, 1
        %v3973 = vpop.permute.xlu0 %3972
        %3974 = vrot.lane.b32.xlu0 %v3509, 1
        %v3975 = vpop.permute.xlu0 %3974
        %3976 = vrot.lane.b32.xlu0 %v3510, 1
        %v3977 = vpop.permute.xlu0 %3976
        %3978 = vrot.lane.b32.xlu0 %v3511, 1
        %v3979 = vpop.permute.xlu0 %3978
        %3980 = vrot.lane.b32.xlu0 %v3512, 1
        %v3981 = vpop.permute.xlu0 %3980
        %v3982 = vsel %vm2304, %v3967, %v3969
        %v3983 = vsel %vm2304, %v3971, %v3973
        %v3984 = vsel %vm2304, %v3975, %v3977
        %v3985 = vsel %vm2304, %v3979, %v3981
        %3994 = vst.msk [vmem:[#allocation2] sm:$0xff] %vm2317, %v3967
        %3995 = vst [vmem:[#allocation2 + $0x8] sm:$0xff] %v3982
        %3996 = vst.msk [vmem:[#allocation2 + $0x10] sm:$0xff] %vm2317, %v3971
        %3997 = vst [vmem:[#allocation2 + $0x18] sm:$0xff] %v3983
        %3998 = vst.msk [vmem:[#allocation2 + $0x20] sm:$0xff] %vm2317, %v3975
        %3999 = vst [vmem:[#allocation2 + $0x28] sm:$0xff] %v3984
        %4000 = vst.msk [vmem:[#allocation2 + $0x30] sm:$0xff] %vm2317, %v3979
        %4001 = vst [vmem:[#allocation2 + $0x38] sm:$0xff] %v3985
        %4002 = vst.msk [vmem:[#allocation2] sm:$0xff] %vm2304, 0.0
        %4003 = vst.msk [vmem:[#allocation2 + $0x10] sm:$0xff] %vm2304, 0.0
        %4004 = vst.msk [vmem:[#allocation2 + $0x20] sm:$0xff] %vm2304, 0.0
        %4005 = vst.msk [vmem:[#allocation2 + $0x30] sm:$0xff] %vm2304, 0.0
        %v4006 = vld [vmem:[#allocation2] sm:$0xff]
        %v4007 = vld [vmem:[#allocation2 + $0x8] sm:$0xff]
        %v4008 = vld [vmem:[#allocation2 + $0x10] sm:$0xff]
        %v4009 = vld [vmem:[#allocation2 + $0x18] sm:$0xff]
        %v4010 = vld [vmem:[#allocation2 + $0x20] sm:$0xff]
        %v4011 = vld [vmem:[#allocation2 + $0x28] sm:$0xff]
        %v4012 = vld [vmem:[#allocation2 + $0x30] sm:$0xff]
        %v4013 = vld [vmem:[#allocation2 + $0x38] sm:$0xff]
        %v4014 = vld [vmem:[%s2338] ss:$8 sm:$0x3]
        %v4016 = vlaneseq
        %v4017 = vshrl.u32 %v4016, 7
        %v4018 = vsub.s32 0, %v4017
        %v4019 = vrot.slane %v4014, %v4018
        %v4020 = vlaneseq
        %v4021 = vshrl.u32 %v4020, 7
        %v4022 = vsub.s32 1, %v4021
        %v4023 = vrot.slane %v4014, %v4022
        %v4026 = vmul.f32 %v4006, %v4019
        %v4027 = vmul.f32 %v4007, %v4023
        %v4028 = vmul.f32 %v4008, %v4019
        %v4029 = vmul.f32 %v4009, %v4023
        %v4030 = vmul.f32 %v4010, %v4019
        %v4031 = vmul.f32 %v4011, %v4023
        %v4032 = vmul.f32 %v4012, %v4019
        %v4033 = vmul.f32 %v4013, %v4023
        %v4034 = vpack.c.bf16 %v4028, %v4026
        %v4035 = vpack.c.bf16 %v4029, %v4027
        %v4036 = vpack.c.bf16 %v4032, %v4030
        %v4037 = vpack.c.bf16 %v4033, %v4031
        %s4038 = scalar_lea.vmem %s16, 48
        %v4039 = vld [vmem:[%s4038] sm:$0xf]
        %v4040 = vld [vmem:[%s4038 + $0x4] sm:$0xf]
        %v4041 = vld [vmem:[%s4038 + $0x8] sm:$0xf]
        %v4042 = vld [vmem:[%s4038 + $0xc] sm:$0xf]
        %v4047 = vunpack.c.l.b16 %v4039
        %v4048 = vunpack.c.l.b16 %v4040
        %v4049 = vunpack.c.l.b16 %v4041
        %v4050 = vunpack.c.l.b16 %v4042
        %v4051 = vpack.c.b16 %v4048, %v4047
        %v4052 = vpack.c.b16 %v4050, %v4049
        %v4054 = vsel %vm778, %v4051, 0
        %v4057 = vsel %vm778, %v4052, 0
        %4059 = vmatprep.subr.bf16.mxu0 %v4035
        %4060 = vmatpush1.bf16.msra.mxu0 %v4034
        %4061 = vmatprep.subr.bf16.mxu0 %v4037
        %4062 = vmatpush1.bf16.msra.mxu0 %v4036
        %4063 = vmatprep.subr.bf16.mxu0 0
        %4064 = vmatpush1.bf16.msra.mxu0 0
        %4065 = vmatprep.subr.bf16.mxu0 0
        %4066 = vmatpush1.bf16.msra.mxu0 0
        %4067 = vmatprep.subr.bf16.mxu0 0
        %4068 = vmatpush1.bf16.msra.mxu0 0
        %4069 = vmatprep.subr.bf16.mxu0 0
        %4070 = vmatpush1.bf16.msra.mxu0 0
        %4071 = vmatprep.subr.bf16.mxu0 0
        %4072 = vmatpush1.bf16.msra.mxu0 0
        %4073 = vmatprep.subr.bf16.mxu0 0
        %4074 = vmatpush1.bf16.msra.mxu0 0
        %4075 = vmatprep.subr.bf16.mxu0 0
        %4076 = vmatpush1.bf16.msra.mxu0 0
        %4077 = vmatprep.subr.bf16.mxu0 0
        %4078 = vmatpush1.bf16.msra.mxu0 0
        %4079 = vmatprep.subr.bf16.mxu0 0
        %4080 = vmatpush1.bf16.msra.mxu0 0
        %4081 = vmatprep.subr.bf16.mxu0 0
        %4082 = vmatpush1.bf16.msra.mxu0 0
        %4083 = vmatprep.subr.bf16.mxu0 0
        %4084 = vmatpush1.bf16.msra.mxu0 0
        %4085 = vmatprep.subr.bf16.mxu0 0
        %4086 = vmatpush1.bf16.msra.mxu0 0
        %4087 = vmatprep.subr.bf16.mxu0 0
        %4088 = vmatpush1.bf16.msra.mxu0 0
        %4089 = vmatprep.subr.bf16.mxu0 0
        %4090 = vmatpush1.bf16.msra.mxu0 0
        %4091 = vmatprep.mubr.bf16.mxu0 0
        %4092 = vmatmul.mubr.bf16.gmra.mrb[0].mxu0 %v4054
        %v4093 = vpop.f32.mrb[0].mxu0
        %v4094 = vadd.f32 0.0, %v4093
        %v4095 = vpop.f32.mrb[0].mxu0
        %v4096 = vadd.f32 0.0, %v4095
        %v4097 = vpop.f32.mrb[0].mxu0
        %v4098 = vadd.f32 0.0, %v4097
        %v4099 = vpop.f32.mrb[0].mxu0
        %v4100 = vadd.f32 0.0, %v4099
        %4101 = vmatprep.mubr.bf16.mxu0 0
        %4102 = vmatmul.mubr.bf16.gmra.mrb[0].mxu0 %v4057
        %v4103 = vpop.f32.mrb[0].mxu0
        %v4104 = vadd.f32 0.0, %v4103
        %v4105 = vpop.f32.mrb[0].mxu0
        %v4106 = vadd.f32 0.0, %v4105
        %v4107 = vpop.f32.mrb[0].mxu0
        %v4108 = vadd.f32 0.0, %v4107
        %v4109 = vpop.f32.mrb[0].mxu0
        %v4110 = vadd.f32 0.0, %v4109
        %4111 = vdwg.mxu0
        %v4112 = vadd.f32 %v3958, %v4094
        %v4113 = vadd.f32 %v3959, %v4096
        %v4114 = vadd.f32 %v3960, %v4098
        %v4115 = vadd.f32 %v3961, %v4100
        %v4116 = vadd.f32 %v3962, %v4104
        %v4117 = vadd.f32 %v3963, %v4106
        %v4118 = vadd.f32 %v3964, %v4108
        %v4119 = vadd.f32 %v3965, %v4110
        %4120 = vst [vmem:[#allocation2] sm:$0xff] %v3505
        %4121 = vst [vmem:[#allocation2 + $0x8] sm:$0xff] %v3506
        %4122 = vst [vmem:[#allocation2 + $0x10] sm:$0xff] %v3507
        %4123 = vst [vmem:[#allocation2 + $0x18] sm:$0xff] %v3508
        %4124 = vst [vmem:[#allocation2 + $0x20] sm:$0xff] %v3509
        %4125 = vst [vmem:[#allocation2 + $0x28] sm:$0xff] %v3510
        %4126 = vst [vmem:[#allocation2 + $0x30] sm:$0xff] %v3511
        %4127 = vst [vmem:[#allocation2 + $0x38] sm:$0xff] %v3512
        %v4128 = vld [vmem:[#allocation2] sm:$0xff]
        %v4129 = vld [vmem:[#allocation2 + $0x8] sm:$0xff]
        %v4130 = vld [vmem:[#allocation2 + $0x10] sm:$0xff]
        %v4131 = vld [vmem:[#allocation2 + $0x18] sm:$0xff]
        %v4132 = vld [vmem:[#allocation2 + $0x20] sm:$0xff]
        %v4133 = vld [vmem:[#allocation2 + $0x28] sm:$0xff]
        %v4134 = vld [vmem:[#allocation2 + $0x30] sm:$0xff]
        %v4135 = vld [vmem:[#allocation2 + $0x38] sm:$0xff]
        %v4136 = vld [vmem:[%s2461] ss:$8 sm:$0x3]
        %v4138 = vlaneseq
        %v4139 = vshrl.u32 %v4138, 7
        %v4140 = vsub.s32 0, %v4139
        %v4141 = vrot.slane %v4136, %v4140
        %v4142 = vlaneseq
        %v4143 = vshrl.u32 %v4142, 7
        %v4144 = vsub.s32 1, %v4143
        %v4145 = vrot.slane %v4136, %v4144
        %v4148 = vmul.f32 %v4128, %v4141
        %v4149 = vmul.f32 %v4129, %v4145
        %v4150 = vmul.f32 %v4130, %v4141
        %v4151 = vmul.f32 %v4131, %v4145
        %v4152 = vmul.f32 %v4132, %v4141
        %v4153 = vmul.f32 %v4133, %v4145
        %v4154 = vmul.f32 %v4134, %v4141
        %v4155 = vmul.f32 %v4135, %v4145
        %v4156 = vpack.c.bf16 %v4150, %v4148
        %v4157 = vpack.c.bf16 %v4151, %v4149
        %v4158 = vpack.c.bf16 %v4154, %v4152
        %v4159 = vpack.c.bf16 %v4155, %v4153
        %s4160 = scalar_lea.vmem %s16, 64
        %v4161 = vld [vmem:[%s4160] sm:$0xf]
        %v4162 = vld [vmem:[%s4160 + $0x4] sm:$0xf]
        %v4163 = vld [vmem:[%s4160 + $0x8] sm:$0xf]
        %v4164 = vld [vmem:[%s4160 + $0xc] sm:$0xf]
        %v4169 = vunpack.c.l.b16 %v4161
        %v4170 = vunpack.c.l.b16 %v4162
        %v4171 = vunpack.c.l.b16 %v4163
        %v4172 = vunpack.c.l.b16 %v4164
        %v4173 = vpack.c.b16 %v4170, %v4169
        %v4174 = vpack.c.b16 %v4172, %v4171
        %v4176 = vsel %vm778, %v4173, 0
        %v4179 = vsel %vm778, %v4174, 0
        %4181 = vmatprep.subr.bf16.mxu0 %v4157
        %4182 = vmatpush1.bf16.msra.mxu0 %v4156
        %4183 = vmatprep.subr.bf16.mxu0 %v4159
        %4184 = vmatpush1.bf16.msra.mxu0 %v4158
        %4185 = vmatprep.subr.bf16.mxu0 0
        %4186 = vmatpush1.bf16.msra.mxu0 0
        %4187 = vmatprep.subr.bf16.mxu0 0
        %4188 = vmatpush1.bf16.msra.mxu0 0
        %4189 = vmatprep.subr.bf16.mxu0 0
        %4190 = vmatpush1.bf16.msra.mxu0 0
        %4191 = vmatprep.subr.bf16.mxu0 0
        %4192 = vmatpush1.bf16.msra.mxu0 0
        %4193 = vmatprep.subr.bf16.mxu0 0
        %4194 = vmatpush1.bf16.msra.mxu0 0
        %4195 = vmatprep.subr.bf16.mxu0 0
        %4196 = vmatpush1.bf16.msra.mxu0 0
        %4197 = vmatprep.subr.bf16.mxu0 0
        %4198 = vmatpush1.bf16.msra.mxu0 0
        %4199 = vmatprep.subr.bf16.mxu0 0
        %4200 = vmatpush1.bf16.msra.mxu0 0
        %4201 = vmatprep.subr.bf16.mxu0 0
        %4202 = vmatpush1.bf16.msra.mxu0 0
        %4203 = vmatprep.subr.bf16.mxu0 0
        %4204 = vmatpush1.bf16.msra.mxu0 0
        %4205 = vmatprep.subr.bf16.mxu0 0
        %4206 = vmatpush1.bf16.msra.mxu0 0
        %4207 = vmatprep.subr.bf16.mxu0 0
        %4208 = vmatpush1.bf16.msra.mxu0 0
        %4209 = vmatprep.subr.bf16.mxu0 0
        %4210 = vmatpush1.bf16.msra.mxu0 0
        %4211 = vmatprep.subr.bf16.mxu0 0
        %4212 = vmatpush1.bf16.msra.mxu0 0
        %4213 = vmatprep.mubr.bf16.mxu0 0
        %4214 = vmatmul.mubr.bf16.gmra.mrb[0].mxu0 %v4176
        %v4215 = vpop.f32.mrb[0].mxu0
        %v4216 = vadd.f32 0.0, %v4215
        %v4217 = vpop.f32.mrb[0].mxu0
        %v4218 = vadd.f32 0.0, %v4217
        %v4219 = vpop.f32.mrb[0].mxu0
        %v4220 = vadd.f32 0.0, %v4219
        %v4221 = vpop.f32.mrb[0].mxu0
        %v4222 = vadd.f32 0.0, %v4221
        %4223 = vmatprep.mubr.bf16.mxu0 0
        %4224 = vmatmul.mubr.bf16.gmra.mrb[0].mxu0 %v4179
        %v4225 = vpop.f32.mrb[0].mxu0
        %v4226 = vadd.f32 0.0, %v4225
        %v4227 = vpop.f32.mrb[0].mxu0
        %v4228 = vadd.f32 0.0, %v4227
        %v4229 = vpop.f32.mrb[0].mxu0
        %v4230 = vadd.f32 0.0, %v4229
        %v4231 = vpop.f32.mrb[0].mxu0
        %v4232 = vadd.f32 0.0, %v4231
        %4233 = vdwg.mxu0
        %v4234 = vadd.f32 %v4112, %v4216
        %v4235 = vadd.f32 %v4113, %v4218
        %v4236 = vadd.f32 %v4114, %v4220
        %v4237 = vadd.f32 %v4115, %v4222
        %v4238 = vadd.f32 %v4116, %v4226
        %v4239 = vadd.f32 %v4117, %v4228
        %v4240 = vadd.f32 %v4118, %v4230
        %v4241 = vadd.f32 %v4119, %v4232
        %4242 = vrot.lane.b32.xlu0 %v3505, 127
        %v4243 = vpop.permute.xlu0 %4242
        %4244 = vrot.lane.b32.xlu0 %v3506, 127
        %v4245 = vpop.permute.xlu0 %4244
        %4246 = vrot.lane.b32.xlu0 %v3507, 127
        %v4247 = vpop.permute.xlu0 %4246
        %4248 = vrot.lane.b32.xlu0 %v3508, 127
        %v4249 = vpop.permute.xlu0 %4248
        %4250 = vrot.lane.b32.xlu0 %v3509, 127
        %v4251 = vpop.permute.xlu0 %4250
        %4252 = vrot.lane.b32.xlu0 %v3510, 127
        %v4253 = vpop.permute.xlu0 %4252
        %4254 = vrot.lane.b32.xlu0 %v3511, 127
        %v4255 = vpop.permute.xlu0 %4254
        %4256 = vrot.lane.b32.xlu0 %v3512, 127
        %v4257 = vpop.permute.xlu0 %4256
        %v4258 = vsel %vm2584, %v4243, %v4245
        %v4259 = vsel %vm2584, %v4247, %v4249
        %v4260 = vsel %vm2584, %v4251, %v4253
        %v4261 = vsel %vm2584, %v4255, %v4257
        %4270 = vst [vmem:[#allocation2] sm:$0xff] %v4258
        %4271 = vst.msk [vmem:[#allocation2 + $0x8] sm:$0xff] %vm2584, %v4245
        %4272 = vst [vmem:[#allocation2 + $0x10] sm:$0xff] %v4259
        %4273 = vst.msk [vmem:[#allocation2 + $0x18] sm:$0xff] %vm2584, %v4249
        %4274 = vst [vmem:[#allocation2 + $0x20] sm:$0xff] %v4260
        %4275 = vst.msk [vmem:[#allocation2 + $0x28] sm:$0xff] %vm2584, %v4253
        %4276 = vst [vmem:[#allocation2 + $0x30] sm:$0xff] %v4261
        %4277 = vst.msk [vmem:[#allocation2 + $0x38] sm:$0xff] %vm2584, %v4257
        %4278 = vst.msk [vmem:[#allocation2 + $0x8] sm:$0xff] %vm2605, 0.0
        %4279 = vst.msk [vmem:[#allocation2 + $0x18] sm:$0xff] %vm2605, 0.0
        %4280 = vst.msk [vmem:[#allocation2 + $0x28] sm:$0xff] %vm2605, 0.0
        %4281 = vst.msk [vmem:[#allocation2 + $0x38] sm:$0xff] %vm2605, 0.0
        %v4282 = vld [vmem:[#allocation2] sm:$0xff]
        %v4283 = vld [vmem:[#allocation2 + $0x8] sm:$0xff]
        %v4284 = vld [vmem:[#allocation2 + $0x10] sm:$0xff]
        %v4285 = vld [vmem:[#allocation2 + $0x18] sm:$0xff]
        %v4286 = vld [vmem:[#allocation2 + $0x20] sm:$0xff]
        %v4287 = vld [vmem:[#allocation2 + $0x28] sm:$0xff]
        %v4288 = vld [vmem:[#allocation2 + $0x30] sm:$0xff]
        %v4289 = vld [vmem:[#allocation2 + $0x38] sm:$0xff]
        %v4290 = vld [vmem:[%s2618] ss:$8 sm:$0x3]
        %v4292 = vlaneseq
        %v4293 = vshrl.u32 %v4292, 7
        %v4294 = vsub.s32 0, %v4293
        %v4295 = vrot.slane %v4290, %v4294
        %v4296 = vlaneseq
        %v4297 = vshrl.u32 %v4296, 7
        %v4298 = vsub.s32 1, %v4297
        %v4299 = vrot.slane %v4290, %v4298
        %v4302 = vmul.f32 %v4282, %v4295
        %v4303 = vmul.f32 %v4283, %v4299
        %v4304 = vmul.f32 %v4284, %v4295
        %v4305 = vmul.f32 %v4285, %v4299
        %v4306 = vmul.f32 %v4286, %v4295
        %v4307 = vmul.f32 %v4287, %v4299
        %v4308 = vmul.f32 %v4288, %v4295
        %v4309 = vmul.f32 %v4289, %v4299
        %v4310 = vpack.c.bf16 %v4304, %v4302
        %v4311 = vpack.c.bf16 %v4305, %v4303
        %v4312 = vpack.c.bf16 %v4308, %v4306
        %v4313 = vpack.c.bf16 %v4309, %v4307
        %s4314 = scalar_lea.vmem %s16, 80
        %v4315 = vld [vmem:[%s4314] sm:$0xf]
        %v4316 = vld [vmem:[%s4314 + $0x4] sm:$0xf]
        %v4317 = vld [vmem:[%s4314 + $0x8] sm:$0xf]
        %v4318 = vld [vmem:[%s4314 + $0xc] sm:$0xf]
        %v4323 = vunpack.c.l.b16 %v4315
        %v4324 = vunpack.c.l.b16 %v4316
        %v4325 = vunpack.c.l.b16 %v4317
        %v4326 = vunpack.c.l.b16 %v4318
        %v4327 = vpack.c.b16 %v4324, %v4323
        %v4328 = vpack.c.b16 %v4326, %v4325
        %v4330 = vsel %vm778, %v4327, 0
        %v4333 = vsel %vm778, %v4328, 0
        %4335 = vmatprep.subr.bf16.mxu0 %v4311
        %4336 = vmatpush1.bf16.msra.mxu0 %v4310
        %4337 = vmatprep.subr.bf16.mxu0 %v4313
        %4338 = vmatpush1.bf16.msra.mxu0 %v4312
        %4339 = vmatprep.subr.bf16.mxu0 0
        %4340 = vmatpush1.bf16.msra.mxu0 0
        %4341 = vmatprep.subr.bf16.mxu0 0
        %4342 = vmatpush1.bf16.msra.mxu0 0
        %4343 = vmatprep.subr.bf16.mxu0 0
        %4344 = vmatpush1.bf16.msra.mxu0 0
        %4345 = vmatprep.subr.bf16.mxu0 0
        %4346 = vmatpush1.bf16.msra.mxu0 0
        %4347 = vmatprep.subr.bf16.mxu0 0
        %4348 = vmatpush1.bf16.msra.mxu0 0
        %4349 = vmatprep.subr.bf16.mxu0 0
        %4350 = vmatpush1.bf16.msra.mxu0 0
        %4351 = vmatprep.subr.bf16.mxu0 0
        %4352 = vmatpush1.bf16.msra.mxu0 0
        %4353 = vmatprep.subr.bf16.mxu0 0
        %4354 = vmatpush1.bf16.msra.mxu0 0
        %4355 = vmatprep.subr.bf16.mxu0 0
        %4356 = vmatpush1.bf16.msra.mxu0 0
        %4357 = vmatprep.subr.bf16.mxu0 0
        %4358 = vmatpush1.bf16.msra.mxu0 0
        %4359 = vmatprep.subr.bf16.mxu0 0
        %4360 = vmatpush1.bf16.msra.mxu0 0
        %4361 = vmatprep.subr.bf16.mxu0 0
        %4362 = vmatpush1.bf16.msra.mxu0 0
        %4363 = vmatprep.subr.bf16.mxu0 0
        %4364 = vmatpush1.bf16.msra.mxu0 0
        %4365 = vmatprep.subr.bf16.mxu0 0
        %4366 = vmatpush1.bf16.msra.mxu0 0
        %4367 = vmatprep.mubr.bf16.mxu0 0
        %4368 = vmatmul.mubr.bf16.gmra.mrb[0].mxu0 %v4330
        %v4369 = vpop.f32.mrb[0].mxu0
        %v4370 = vadd.f32 0.0, %v4369
        %v4371 = vpop.f32.mrb[0].mxu0
        %v4372 = vadd.f32 0.0, %v4371
        %v4373 = vpop.f32.mrb[0].mxu0
        %v4374 = vadd.f32 0.0, %v4373
        %v4375 = vpop.f32.mrb[0].mxu0
        %v4376 = vadd.f32 0.0, %v4375
        %4377 = vmatprep.mubr.bf16.mxu0 0
        %4378 = vmatmul.mubr.bf16.gmra.mrb[0].mxu0 %v4333
        %v4379 = vpop.f32.mrb[0].mxu0
        %v4380 = vadd.f32 0.0, %v4379
        %v4381 = vpop.f32.mrb[0].mxu0
        %v4382 = vadd.f32 0.0, %v4381
        %v4383 = vpop.f32.mrb[0].mxu0
        %v4384 = vadd.f32 0.0, %v4383
        %v4385 = vpop.f32.mrb[0].mxu0
        %v4386 = vadd.f32 0.0, %v4385
        %4387 = vdwg.mxu0
        %v4388 = vadd.f32 %v4234, %v4370
        %v4389 = vadd.f32 %v4235, %v4372
        %v4390 = vadd.f32 %v4236, %v4374
        %v4391 = vadd.f32 %v4237, %v4376
        %v4392 = vadd.f32 %v4238, %v4380
        %v4393 = vadd.f32 %v4239, %v4382
        %v4394 = vadd.f32 %v4240, %v4384
        %v4395 = vadd.f32 %v4241, %v4386
        %4396 = vrot.lane.b32.xlu0 %v3505, 113
        %v4397 = vpop.permute.xlu0 %4396
        %4398 = vrot.lane.b32.xlu0 %v3506, 113
        %v4399 = vpop.permute.xlu0 %4398
        %4400 = vrot.lane.b32.xlu0 %v3507, 113
        %v4401 = vpop.permute.xlu0 %4400
        %4402 = vrot.lane.b32.xlu0 %v3508, 113
        %v4403 = vpop.permute.xlu0 %4402
        %4404 = vrot.lane.b32.xlu0 %v3509, 113
        %v4405 = vpop.permute.xlu0 %4404
        %4406 = vrot.lane.b32.xlu0 %v3510, 113
        %v4407 = vpop.permute.xlu0 %4406
        %4408 = vrot.lane.b32.xlu0 %v3511, 113
        %v4409 = vpop.permute.xlu0 %4408
        %4410 = vrot.lane.b32.xlu0 %v3512, 113
        %v4411 = vpop.permute.xlu0 %4410
        %v4412 = vsel %vm2741, %v4397, %v4399
        %v4413 = vsel %vm2741, %v4401, %v4403
        %v4414 = vsel %vm2741, %v4405, %v4407
        %v4415 = vsel %vm2741, %v4409, %v4411
        %4424 = vst [vmem:[#allocation2] sm:$0xff] %v4412
        %4425 = vst.msk [vmem:[#allocation2 + $0x8] sm:$0xff] %vm2741, %v4399
        %4426 = vst [vmem:[#allocation2 + $0x10] sm:$0xff] %v4413
        %4427 = vst.msk [vmem:[#allocation2 + $0x18] sm:$0xff] %vm2741, %v4403
        %4428 = vst [vmem:[#allocation2 + $0x20] sm:$0xff] %v4414
        %4429 = vst.msk [vmem:[#allocation2 + $0x28] sm:$0xff] %vm2741, %v4407
        %4430 = vst [vmem:[#allocation2 + $0x30] sm:$0xff] %v4415
        %4431 = vst.msk [vmem:[#allocation2 + $0x38] sm:$0xff] %vm2741, %v4411
        %4432 = vst.msk [vmem:[#allocation2 + $0x8] sm:$0xff] %vm2762, 0.0
        %4433 = vst.msk [vmem:[#allocation2 + $0x18] sm:$0xff] %vm2762, 0.0
        %4434 = vst.msk [vmem:[#allocation2 + $0x28] sm:$0xff] %vm2762, 0.0
        %4435 = vst.msk [vmem:[#allocation2 + $0x38] sm:$0xff] %vm2762, 0.0
        %v4436 = vld [vmem:[#allocation2] sm:$0xff]
        %v4437 = vld [vmem:[#allocation2 + $0x8] sm:$0xff]
        %v4438 = vld [vmem:[#allocation2 + $0x10] sm:$0xff]
        %v4439 = vld [vmem:[#allocation2 + $0x18] sm:$0xff]
        %v4440 = vld [vmem:[#allocation2 + $0x20] sm:$0xff]
        %v4441 = vld [vmem:[#allocation2 + $0x28] sm:$0xff]
        %v4442 = vld [vmem:[#allocation2 + $0x30] sm:$0xff]
        %v4443 = vld [vmem:[#allocation2 + $0x38] sm:$0xff]
        %v4444 = vld [vmem:[%s2775] ss:$8 sm:$0x3]
        %v4446 = vlaneseq
        %v4447 = vshrl.u32 %v4446, 7
        %v4448 = vsub.s32 0, %v4447
        %v4449 = vrot.slane %v4444, %v4448
        %v4450 = vlaneseq
        %v4451 = vshrl.u32 %v4450, 7
        %v4452 = vsub.s32 1, %v4451
        %v4453 = vrot.slane %v4444, %v4452
        %v4456 = vmul.f32 %v4436, %v4449
        %v4457 = vmul.f32 %v4437, %v4453
        %v4458 = vmul.f32 %v4438, %v4449
        %v4459 = vmul.f32 %v4439, %v4453
        %v4460 = vmul.f32 %v4440, %v4449
        %v4461 = vmul.f32 %v4441, %v4453
        %v4462 = vmul.f32 %v4442, %v4449
        %v4463 = vmul.f32 %v4443, %v4453
        %v4464 = vpack.c.bf16 %v4458, %v4456
        %v4465 = vpack.c.bf16 %v4459, %v4457
        %v4466 = vpack.c.bf16 %v4462, %v4460
        %v4467 = vpack.c.bf16 %v4463, %v4461
        %s4468 = scalar_lea.vmem %s16, 96
        %v4469 = vld [vmem:[%s4468] sm:$0xf]
        %v4470 = vld [vmem:[%s4468 + $0x4] sm:$0xf]
        %v4471 = vld [vmem:[%s4468 + $0x8] sm:$0xf]
        %v4472 = vld [vmem:[%s4468 + $0xc] sm:$0xf]
        %v4477 = vunpack.c.l.b16 %v4469
        %v4478 = vunpack.c.l.b16 %v4470
        %v4479 = vunpack.c.l.b16 %v4471
        %v4480 = vunpack.c.l.b16 %v4472
        %v4481 = vpack.c.b16 %v4478, %v4477
        %v4482 = vpack.c.b16 %v4480, %v4479
        %v4484 = vsel %vm778, %v4481, 0
        %v4487 = vsel %vm778, %v4482, 0
        %4489 = vmatprep.subr.bf16.mxu0 %v4465
        %4490 = vmatpush1.bf16.msra.mxu0 %v4464
        %4491 = vmatprep.subr.bf16.mxu0 %v4467
        %4492 = vmatpush1.bf16.msra.mxu0 %v4466
        %4493 = vmatprep.subr.bf16.mxu0 0
        %4494 = vmatpush1.bf16.msra.mxu0 0
        %4495 = vmatprep.subr.bf16.mxu0 0
        %4496 = vmatpush1.bf16.msra.mxu0 0
        %4497 = vmatprep.subr.bf16.mxu0 0
        %4498 = vmatpush1.bf16.msra.mxu0 0
        %4499 = vmatprep.subr.bf16.mxu0 0
        %4500 = vmatpush1.bf16.msra.mxu0 0
        %4501 = vmatprep.subr.bf16.mxu0 0
        %4502 = vmatpush1.bf16.msra.mxu0 0
        %4503 = vmatprep.subr.bf16.mxu0 0
        %4504 = vmatpush1.bf16.msra.mxu0 0
        %4505 = vmatprep.subr.bf16.mxu0 0
        %4506 = vmatpush1.bf16.msra.mxu0 0
        %4507 = vmatprep.subr.bf16.mxu0 0
        %4508 = vmatpush1.bf16.msra.mxu0 0
        %4509 = vmatprep.subr.bf16.mxu0 0
        %4510 = vmatpush1.bf16.msra.mxu0 0
        %4511 = vmatprep.subr.bf16.mxu0 0
        %4512 = vmatpush1.bf16.msra.mxu0 0
        %4513 = vmatprep.subr.bf16.mxu0 0
        %4514 = vmatpush1.bf16.msra.mxu0 0
        %4515 = vmatprep.subr.bf16.mxu0 0
        %4516 = vmatpush1.bf16.msra.mxu0 0
        %4517 = vmatprep.subr.bf16.mxu0 0
        %4518 = vmatpush1.bf16.msra.mxu0 0
        %4519 = vmatprep.subr.bf16.mxu0 0
        %4520 = vmatpush1.bf16.msra.mxu0 0
        %4521 = vmatprep.mubr.bf16.mxu0 0
        %4522 = vmatmul.mubr.bf16.gmra.mrb[0].mxu0 %v4484
        %v4523 = vpop.f32.mrb[0].mxu0
        %v4524 = vadd.f32 0.0, %v4523
        %v4525 = vpop.f32.mrb[0].mxu0
        %v4526 = vadd.f32 0.0, %v4525
        %v4527 = vpop.f32.mrb[0].mxu0
        %v4528 = vadd.f32 0.0, %v4527
        %v4529 = vpop.f32.mrb[0].mxu0
        %v4530 = vadd.f32 0.0, %v4529
        %4531 = vmatprep.mubr.bf16.mxu0 0
        %4532 = vmatmul.mubr.bf16.gmra.mrb[0].mxu0 %v4487
        %v4533 = vpop.f32.mrb[0].mxu0
        %v4534 = vadd.f32 0.0, %v4533
        %v4535 = vpop.f32.mrb[0].mxu0
        %v4536 = vadd.f32 0.0, %v4535
        %v4537 = vpop.f32.mrb[0].mxu0
        %v4538 = vadd.f32 0.0, %v4537
        %v4539 = vpop.f32.mrb[0].mxu0
        %v4540 = vadd.f32 0.0, %v4539
        %4541 = vdwg.mxu0
        %v4542 = vadd.f32 %v4388, %v4524
        %v4543 = vadd.f32 %v4389, %v4526
        %v4544 = vadd.f32 %v4390, %v4528
        %v4545 = vadd.f32 %v4391, %v4530
        %v4546 = vadd.f32 %v4392, %v4534
        %v4547 = vadd.f32 %v4393, %v4536
        %v4548 = vadd.f32 %v4394, %v4538
        %v4549 = vadd.f32 %v4395, %v4540
        %4550 = vrot.lane.b32.xlu0 %v3505, 112
        %v4551 = vpop.permute.xlu0 %4550
        %4552 = vrot.lane.b32.xlu0 %v3506, 112
        %v4553 = vpop.permute.xlu0 %4552
        %4554 = vrot.lane.b32.xlu0 %v3507, 112
        %v4555 = vpop.permute.xlu0 %4554
        %4556 = vrot.lane.b32.xlu0 %v3508, 112
        %v4557 = vpop.permute.xlu0 %4556
        %4558 = vrot.lane.b32.xlu0 %v3509, 112
        %v4559 = vpop.permute.xlu0 %4558
        %4560 = vrot.lane.b32.xlu0 %v3510, 112
        %v4561 = vpop.permute.xlu0 %4560
        %4562 = vrot.lane.b32.xlu0 %v3511, 112
        %v4563 = vpop.permute.xlu0 %4562
        %4564 = vrot.lane.b32.xlu0 %v3512, 112
        %v4565 = vpop.permute.xlu0 %4564
        %v4566 = vsel %vm2898, %v4551, %v4553
        %v4567 = vsel %vm2898, %v4555, %v4557
        %v4568 = vsel %vm2898, %v4559, %v4561
        %v4569 = vsel %vm2898, %v4563, %v4565
        %4578 = vst [vmem:[#allocation2] sm:$0xff] %v4566
        %4579 = vst.msk [vmem:[#allocation2 + $0x8] sm:$0xff] %vm2898, %v4553
        %4580 = vst [vmem:[#allocation2 + $0x10] sm:$0xff] %v4567
        %4581 = vst.msk [vmem:[#allocation2 + $0x18] sm:$0xff] %vm2898, %v4557
        %4582 = vst [vmem:[#allocation2 + $0x20] sm:$0xff] %v4568
        %4583 = vst.msk [vmem:[#allocation2 + $0x28] sm:$0xff] %vm2898, %v4561
        %4584 = vst [vmem:[#allocation2 + $0x30] sm:$0xff] %v4569
        %4585 = vst.msk [vmem:[#allocation2 + $0x38] sm:$0xff] %vm2898, %v4565
        %4586 = vst.msk [vmem:[#allocation2 + $0x8] sm:$0xff] %vm2919, 0.0
        %4587 = vst.msk [vmem:[#allocation2 + $0x18] sm:$0xff] %vm2919, 0.0
        %4588 = vst.msk [vmem:[#allocation2 + $0x28] sm:$0xff] %vm2919, 0.0
        %4589 = vst.msk [vmem:[#allocation2 + $0x38] sm:$0xff] %vm2919, 0.0
        %v4590 = vld [vmem:[#allocation2] sm:$0xff]
        %v4591 = vld [vmem:[#allocation2 + $0x8] sm:$0xff]
        %v4592 = vld [vmem:[#allocation2 + $0x10] sm:$0xff]
        %v4593 = vld [vmem:[#allocation2 + $0x18] sm:$0xff]
        %v4594 = vld [vmem:[#allocation2 + $0x20] sm:$0xff]
        %v4595 = vld [vmem:[#allocation2 + $0x28] sm:$0xff]
        %v4596 = vld [vmem:[#allocation2 + $0x30] sm:$0xff]
        %v4597 = vld [vmem:[#allocation2 + $0x38] sm:$0xff]
        %v4598 = vld [vmem:[%s2932] ss:$8 sm:$0x3]
        %v4600 = vlaneseq
        %v4601 = vshrl.u32 %v4600, 7
        %v4602 = vsub.s32 0, %v4601
        %v4603 = vrot.slane %v4598, %v4602
        %v4604 = vlaneseq
        %v4605 = vshrl.u32 %v4604, 7
        %v4606 = vsub.s32 1, %v4605
        %v4607 = vrot.slane %v4598, %v4606
        %v4610 = vmul.f32 %v4590, %v4603
        %v4611 = vmul.f32 %v4591, %v4607
        %v4612 = vmul.f32 %v4592, %v4603
        %v4613 = vmul.f32 %v4593, %v4607
        %v4614 = vmul.f32 %v4594, %v4603
        %v4615 = vmul.f32 %v4595, %v4607
        %v4616 = vmul.f32 %v4596, %v4603
        %v4617 = vmul.f32 %v4597, %v4607
        %v4618 = vpack.c.bf16 %v4612, %v4610
        %v4619 = vpack.c.bf16 %v4613, %v4611
        %v4620 = vpack.c.bf16 %v4616, %v4614
        %v4621 = vpack.c.bf16 %v4617, %v4615
        %s4622 = scalar_lea.vmem %s16, 112
        %v4623 = vld [vmem:[%s4622] sm:$0xf]
        %v4624 = vld [vmem:[%s4622 + $0x4] sm:$0xf]
        %v4625 = vld [vmem:[%s4622 + $0x8] sm:$0xf]
        %v4626 = vld [vmem:[%s4622 + $0xc] sm:$0xf]
        %v4631 = vunpack.c.l.b16 %v4623
        %v4632 = vunpack.c.l.b16 %v4624
        %v4633 = vunpack.c.l.b16 %v4625
        %v4634 = vunpack.c.l.b16 %v4626
        %v4635 = vpack.c.b16 %v4632, %v4631
        %v4636 = vpack.c.b16 %v4634, %v4633
        %v4638 = vsel %vm778, %v4635, 0
        %v4641 = vsel %vm778, %v4636, 0
        %4643 = vmatprep.subr.bf16.mxu0 %v4619
        %4644 = vmatpush1.bf16.msra.mxu0 %v4618
        %4645 = vmatprep.subr.bf16.mxu0 %v4621
        %4646 = vmatpush1.bf16.msra.mxu0 %v4620
        %4647 = vmatprep.subr.bf16.mxu0 0
        %4648 = vmatpush1.bf16.msra.mxu0 0
        %4649 = vmatprep.subr.bf16.mxu0 0
        %4650 = vmatpush1.bf16.msra.mxu0 0
        %4651 = vmatprep.subr.bf16.mxu0 0
        %4652 = vmatpush1.bf16.msra.mxu0 0
        %4653 = vmatprep.subr.bf16.mxu0 0
        %4654 = vmatpush1.bf16.msra.mxu0 0
        %4655 = vmatprep.subr.bf16.mxu0 0
        %4656 = vmatpush1.bf16.msra.mxu0 0
        %4657 = vmatprep.subr.bf16.mxu0 0
        %4658 = vmatpush1.bf16.msra.mxu0 0
        %4659 = vmatprep.subr.bf16.mxu0 0
        %4660 = vmatpush1.bf16.msra.mxu0 0
        %4661 = vmatprep.subr.bf16.mxu0 0
        %4662 = vmatpush1.bf16.msra.mxu0 0
        %4663 = vmatprep.subr.bf16.mxu0 0
        %4664 = vmatpush1.bf16.msra.mxu0 0
        %4665 = vmatprep.subr.bf16.mxu0 0
        %4666 = vmatpush1.bf16.msra.mxu0 0
        %4667 = vmatprep.subr.bf16.mxu0 0
        %4668 = vmatpush1.bf16.msra.mxu0 0
        %4669 = vmatprep.subr.bf16.mxu0 0
        %4670 = vmatpush1.bf16.msra.mxu0 0
        %4671 = vmatprep.subr.bf16.mxu0 0
        %4672 = vmatpush1.bf16.msra.mxu0 0
        %4673 = vmatprep.subr.bf16.mxu0 0
        %4674 = vmatpush1.bf16.msra.mxu0 0
        %4675 = vmatprep.mubr.bf16.mxu0 0
        %4676 = vmatmul.mubr.bf16.gmra.mrb[0].mxu0 %v4638
        %v4677 = vpop.f32.mrb[0].mxu0
        %v4678 = vadd.f32 0.0, %v4677
        %v4679 = vpop.f32.mrb[0].mxu0
        %v4680 = vadd.f32 0.0, %v4679
        %v4681 = vpop.f32.mrb[0].mxu0
        %v4682 = vadd.f32 0.0, %v4681
        %v4683 = vpop.f32.mrb[0].mxu0
        %v4684 = vadd.f32 0.0, %v4683
        %4685 = vmatprep.mubr.bf16.mxu0 0
        %4686 = vmatmul.mubr.bf16.gmra.mrb[0].mxu0 %v4641
        %v4687 = vpop.f32.mrb[0].mxu0
        %v4688 = vadd.f32 0.0, %v4687
        %v4689 = vpop.f32.mrb[0].mxu0
        %v4690 = vadd.f32 0.0, %v4689
        %v4691 = vpop.f32.mrb[0].mxu0
        %v4692 = vadd.f32 0.0, %v4691
        %v4693 = vpop.f32.mrb[0].mxu0
        %v4694 = vadd.f32 0.0, %v4693
        %4695 = vdwg.mxu0
        %v4696 = vadd.f32 %v4542, %v4678
        %v4697 = vadd.f32 %v4543, %v4680
        %v4698 = vadd.f32 %v4544, %v4682
        %v4699 = vadd.f32 %v4545, %v4684
        %v4700 = vadd.f32 %v4546, %v4688
        %v4701 = vadd.f32 %v4547, %v4690
        %v4702 = vadd.f32 %v4548, %v4692
        %v4703 = vadd.f32 %v4549, %v4694
        %4704 = vrot.lane.b32.xlu0 %v3505, 111
        %v4705 = vpop.permute.xlu0 %4704
        %4706 = vrot.lane.b32.xlu0 %v3506, 111
        %v4707 = vpop.permute.xlu0 %4706
        %4708 = vrot.lane.b32.xlu0 %v3507, 111
        %v4709 = vpop.permute.xlu0 %4708
        %4710 = vrot.lane.b32.xlu0 %v3508, 111
        %v4711 = vpop.permute.xlu0 %4710
        %4712 = vrot.lane.b32.xlu0 %v3509, 111
        %v4713 = vpop.permute.xlu0 %4712
        %4714 = vrot.lane.b32.xlu0 %v3510, 111
        %v4715 = vpop.permute.xlu0 %4714
        %4716 = vrot.lane.b32.xlu0 %v3511, 111
        %v4717 = vpop.permute.xlu0 %4716
        %4718 = vrot.lane.b32.xlu0 %v3512, 111
        %v4719 = vpop.permute.xlu0 %4718
        %v4720 = vsel %vm3055, %v4705, %v4707
        %v4721 = vsel %vm3055, %v4709, %v4711
        %v4722 = vsel %vm3055, %v4713, %v4715
        %v4723 = vsel %vm3055, %v4717, %v4719
        %4732 = vst [vmem:[#allocation2] sm:$0xff] %v4720
        %4733 = vst.msk [vmem:[#allocation2 + $0x8] sm:$0xff] %vm3055, %v4707
        %4734 = vst [vmem:[#allocation2 + $0x10] sm:$0xff] %v4721
        %4735 = vst.msk [vmem:[#allocation2 + $0x18] sm:$0xff] %vm3055, %v4711
        %4736 = vst [vmem:[#allocation2 + $0x20] sm:$0xff] %v4722
        %4737 = vst.msk [vmem:[#allocation2 + $0x28] sm:$0xff] %vm3055, %v4715
        %4738 = vst [vmem:[#allocation2 + $0x30] sm:$0xff] %v4723
        %4739 = vst.msk [vmem:[#allocation2 + $0x38] sm:$0xff] %vm3055, %v4719
        %4740 = vst.msk [vmem:[#allocation2 + $0x8] sm:$0xff] %vm3076, 0.0
        %4741 = vst.msk [vmem:[#allocation2 + $0x18] sm:$0xff] %vm3076, 0.0
        %4742 = vst.msk [vmem:[#allocation2 + $0x28] sm:$0xff] %vm3076, 0.0
        %4743 = vst.msk [vmem:[#allocation2 + $0x38] sm:$0xff] %vm3076, 0.0
        %v4744 = vld [vmem:[#allocation2] sm:$0xff]
        %v4745 = vld [vmem:[#allocation2 + $0x8] sm:$0xff]
        %v4746 = vld [vmem:[#allocation2 + $0x10] sm:$0xff]
        %v4747 = vld [vmem:[#allocation2 + $0x18] sm:$0xff]
        %v4748 = vld [vmem:[#allocation2 + $0x20] sm:$0xff]
        %v4749 = vld [vmem:[#allocation2 + $0x28] sm:$0xff]
        %v4750 = vld [vmem:[#allocation2 + $0x30] sm:$0xff]
        %v4751 = vld [vmem:[#allocation2 + $0x38] sm:$0xff]
        %v4752 = vld [vmem:[%s3089] ss:$8 sm:$0x3]
        %v4754 = vlaneseq
        %v4755 = vshrl.u32 %v4754, 7
        %v4756 = vsub.s32 0, %v4755
        %v4757 = vrot.slane %v4752, %v4756
        %v4758 = vlaneseq
        %v4759 = vshrl.u32 %v4758, 7
        %v4760 = vsub.s32 1, %v4759
        %v4761 = vrot.slane %v4752, %v4760
        %v4764 = vmul.f32 %v4744, %v4757
        %v4765 = vmul.f32 %v4745, %v4761
        %v4766 = vmul.f32 %v4746, %v4757
        %v4767 = vmul.f32 %v4747, %v4761
        %v4768 = vmul.f32 %v4748, %v4757
        %v4769 = vmul.f32 %v4749, %v4761
        %v4770 = vmul.f32 %v4750, %v4757
        %v4771 = vmul.f32 %v4751, %v4761
        %v4772 = vpack.c.bf16 %v4766, %v4764
        %v4773 = vpack.c.bf16 %v4767, %v4765
        %v4774 = vpack.c.bf16 %v4770, %v4768
        %v4775 = vpack.c.bf16 %v4771, %v4769
        %s4776 = scalar_lea.vmem %s16, 128
        %v4777 = vld [vmem:[%s4776] sm:$0xf]
        %v4778 = vld [vmem:[%s4776 + $0x4] sm:$0xf]
        %v4779 = vld [vmem:[%s4776 + $0x8] sm:$0xf]
        %v4780 = vld [vmem:[%s4776 + $0xc] sm:$0xf]
        %v4785 = vunpack.c.l.b16 %v4777
        %v4786 = vunpack.c.l.b16 %v4778
        %v4787 = vunpack.c.l.b16 %v4779
        %v4788 = vunpack.c.l.b16 %v4780
        %v4789 = vpack.c.b16 %v4786, %v4785
        %v4790 = vpack.c.b16 %v4788, %v4787
        %v4792 = vsel %vm778, %v4789, 0
        %v4795 = vsel %vm778, %v4790, 0
        %4797 = vmatprep.subr.bf16.mxu0 %v4773
        %4798 = vmatpush1.bf16.msra.mxu0 %v4772
        %4799 = vmatprep.subr.bf16.mxu0 %v4775
        %4800 = vmatpush1.bf16.msra.mxu0 %v4774
        %4801 = vmatprep.subr.bf16.mxu0 0
        %4802 = vmatpush1.bf16.msra.mxu0 0
        %4803 = vmatprep.subr.bf16.mxu0 0
        %4804 = vmatpush1.bf16.msra.mxu0 0
        %4805 = vmatprep.subr.bf16.mxu0 0
        %4806 = vmatpush1.bf16.msra.mxu0 0
        %4807 = vmatprep.subr.bf16.mxu0 0
        %4808 = vmatpush1.bf16.msra.mxu0 0
        %4809 = vmatprep.subr.bf16.mxu0 0
        %4810 = vmatpush1.bf16.msra.mxu0 0
        %4811 = vmatprep.subr.bf16.mxu0 0
        %4812 = vmatpush1.bf16.msra.mxu0 0
        %4813 = vmatprep.subr.bf16.mxu0 0
        %4814 = vmatpush1.bf16.msra.mxu0 0
        %4815 = vmatprep.subr.bf16.mxu0 0
        %4816 = vmatpush1.bf16.msra.mxu0 0
        %4817 = vmatprep.subr.bf16.mxu0 0
        %4818 = vmatpush1.bf16.msra.mxu0 0
        %4819 = vmatprep.subr.bf16.mxu0 0
        %4820 = vmatpush1.bf16.msra.mxu0 0
        %4821 = vmatprep.subr.bf16.mxu0 0
        %4822 = vmatpush1.bf16.msra.mxu0 0
        %4823 = vmatprep.subr.bf16.mxu0 0
        %4824 = vmatpush1.bf16.msra.mxu0 0
        %4825 = vmatprep.subr.bf16.mxu0 0
        %4826 = vmatpush1.bf16.msra.mxu0 0
        %4827 = vmatprep.subr.bf16.mxu0 0
        %4828 = vmatpush1.bf16.msra.mxu0 0
        %4829 = vmatprep.mubr.bf16.mxu0 0
        %4830 = vmatmul.mubr.bf16.gmra.mrb[0].mxu0 %v4792
        %v4831 = vpop.f32.mrb[0].mxu0
        %v4832 = vadd.f32 0.0, %v4831
        %v4833 = vpop.f32.mrb[0].mxu0
        %v4834 = vadd.f32 0.0, %v4833
        %v4835 = vpop.f32.mrb[0].mxu0
        %v4836 = vadd.f32 0.0, %v4835
        %v4837 = vpop.f32.mrb[0].mxu0
        %v4838 = vadd.f32 0.0, %v4837
        %4839 = vmatprep.mubr.bf16.mxu0 0
        %4840 = vmatmul.mubr.bf16.gmra.mrb[0].mxu0 %v4795
        %v4841 = vpop.f32.mrb[0].mxu0
        %v4842 = vadd.f32 0.0, %v4841
        %v4843 = vpop.f32.mrb[0].mxu0
        %v4844 = vadd.f32 0.0, %v4843
        %v4845 = vpop.f32.mrb[0].mxu0
        %v4846 = vadd.f32 0.0, %v4845
        %v4847 = vpop.f32.mrb[0].mxu0
        %v4848 = vadd.f32 0.0, %v4847
        %4849 = vdwg.mxu0
        %v4850 = vadd.f32 %v4696, %v4832
        %v4851 = vadd.f32 %v4697, %v4834
        %v4852 = vadd.f32 %v4698, %v4836
        %v4853 = vadd.f32 %v4699, %v4838
        %v4854 = vadd.f32 %v4700, %v4842
        %v4855 = vadd.f32 %v4701, %v4844
        %v4856 = vadd.f32 %v4702, %v4846
        %v4857 = vadd.f32 %v4703, %v4848
        %v4858 = vld [vmem:[%s17] sm:$0xff]
        %v4859 = vld [vmem:[%s17 + $0x8] sm:$0xff]
        %v4860 = vld [vmem:[%s17 + $0x10] sm:$0xff]
        %v4861 = vld [vmem:[%s17 + $0x18] sm:$0xff]
        %4863 = vset.pattern.permute.xlu0 0
        %4864 = vperm.xlu0 %4863, %v4858
        %v4865 = vpop.permute.xlu0 %4864
        %4868 = vset.pattern.permute.xlu0 0
        %4869 = vperm.xlu0 %4868, %v4859
        %v4870 = vpop.permute.xlu0 %4869
        %4873 = vset.pattern.permute.xlu0 0
        %4874 = vperm.xlu0 %4873, %v4860
        %v4875 = vpop.permute.xlu0 %4874
        %4878 = vset.pattern.permute.xlu0 0
        %4879 = vperm.xlu0 %4878, %v4861
        %v4880 = vpop.permute.xlu0 %4879
        %v4882 = vadd.f32 %v4850, %v4865
        %v4883 = vadd.f32 %v4851, %v4865
        %v4884 = vadd.f32 %v4852, %v4870
        %v4885 = vadd.f32 %v4853, %v4870
        %v4886 = vadd.f32 %v4854, %v4875
        %v4887 = vadd.f32 %v4855, %v4875
        %v4888 = vadd.f32 %v4856, %v4880
        %v4889 = vadd.f32 %v4857, %v4880
        %v4890 = vmax.f32 %v4882, 0.0
        %v4891 = vmax.f32 %v4883, 0.0
        %v4892 = vmax.f32 %v4884, 0.0
        %v4893 = vmax.f32 %v4885, 0.0
        %v4894 = vmax.f32 %v4886, 0.0
        %v4895 = vmax.f32 %v4887, 0.0
        %v4896 = vmax.f32 %v4888, 0.0
        %v4897 = vmax.f32 %v4889, 0.0
        %v4898 = vld [vmem:[%s18] sm:$0xf]
        %v4899 = vld [vmem:[%s18 + $0x4] sm:$0xf]
        %v4900 = vld [vmem:[%s18 + $0x8] sm:$0xf]
        %v4901 = vld [vmem:[%s18 + $0xc] sm:$0xf]
        %v4902 = vpack.c.bf16 %v4892, %v4890
        %v4903 = vpack.c.bf16 %v4893, %v4891
        %v4904 = vpack.c.bf16 %v4896, %v4894
        %v4905 = vpack.c.bf16 %v4897, %v4895
        %v4906 = vld [vmem:[%s19] sm:$0xff]
        %v4907 = vld [vmem:[%s19 + $0x8] sm:$0xff]
        %v4908 = vld [vmem:[%s19 + $0x10] sm:$0xff]
        %v4909 = vld [vmem:[%s19 + $0x18] sm:$0xff]
        %4911 = vset.pattern.permute.xlu0 0
        %4912 = vperm.xlu0 %4911, %v4906
        %v4913 = vpop.permute.xlu0 %4912
        %4916 = vset.pattern.permute.xlu0 0
        %4917 = vperm.xlu0 %4916, %v4907
        %v4918 = vpop.permute.xlu0 %4917
        %4921 = vset.pattern.permute.xlu0 0
        %4922 = vperm.xlu0 %4921, %v4908
        %v4923 = vpop.permute.xlu0 %4922
        %4926 = vset.pattern.permute.xlu0 0
        %4927 = vperm.xlu0 %4926, %v4909
        %v4928 = vpop.permute.xlu0 %4927
        %v4934 = vunpack.c.l.b16 %v4898
        %v4935 = vunpack.c.l.b16 %v4899
        %v4936 = vunpack.c.l.b16 %v4900
        %v4937 = vunpack.c.l.b16 %v4901
        %v4938 = vpack.c.b16 %v4935, %v4934
        %v4939 = vpack.c.b16 %v4937, %v4936
        %v4941 = vsel %vm778, %v4938, 0
        %v4944 = vsel %vm778, %v4939, 0
        %4946 = vmatprep.subr.bf16.mxu0 %v4903
        %4947 = vmatpush1.bf16.msra.mxu0 %v4902
        %4948 = vmatprep.subr.bf16.mxu0 %v4905
        %4949 = vmatpush1.bf16.msra.mxu0 %v4904
        %4950 = vmatprep.subr.bf16.mxu0 0
        %4951 = vmatpush1.bf16.msra.mxu0 0
        %4952 = vmatprep.subr.bf16.mxu0 0
        %4953 = vmatpush1.bf16.msra.mxu0 0
        %4954 = vmatprep.subr.bf16.mxu0 0
        %4955 = vmatpush1.bf16.msra.mxu0 0
        %4956 = vmatprep.subr.bf16.mxu0 0
        %4957 = vmatpush1.bf16.msra.mxu0 0
        %4958 = vmatprep.subr.bf16.mxu0 0
        %4959 = vmatpush1.bf16.msra.mxu0 0
        %4960 = vmatprep.subr.bf16.mxu0 0
        %4961 = vmatpush1.bf16.msra.mxu0 0
        %4962 = vmatprep.subr.bf16.mxu0 0
        %4963 = vmatpush1.bf16.msra.mxu0 0
        %4964 = vmatprep.subr.bf16.mxu0 0
        %4965 = vmatpush1.bf16.msra.mxu0 0
        %4966 = vmatprep.subr.bf16.mxu0 0
        %4967 = vmatpush1.bf16.msra.mxu0 0
        %4968 = vmatprep.subr.bf16.mxu0 0
        %4969 = vmatpush1.bf16.msra.mxu0 0
        %4970 = vmatprep.subr.bf16.mxu0 0
        %4971 = vmatpush1.bf16.msra.mxu0 0
        %4972 = vmatprep.subr.bf16.mxu0 0
        %4973 = vmatpush1.bf16.msra.mxu0 0
        %4974 = vmatprep.subr.bf16.mxu0 0
        %4975 = vmatpush1.bf16.msra.mxu0 0
        %4976 = vmatprep.subr.bf16.mxu0 0
        %4977 = vmatpush1.bf16.msra.mxu0 0
        %4978 = vmatprep.mubr.bf16.mxu0 0
        %4979 = vmatmul.mubr.bf16.gmra.mrb[0].mxu0 %v4941
        %v4980 = vpop.f32.mrb[0].mxu0
        %v4981 = vadd.f32 %v4913, %v4980
        %v4982 = vpop.f32.mrb[0].mxu0
        %v4983 = vadd.f32 %v4913, %v4982
        %v4984 = vpop.f32.mrb[0].mxu0
        %v4985 = vadd.f32 %v4918, %v4984
        %v4986 = vpop.f32.mrb[0].mxu0
        %v4987 = vadd.f32 %v4918, %v4986
        %4988 = vmatprep.mubr.bf16.mxu0 0
        %4989 = vmatmul.mubr.bf16.gmra.mrb[0].mxu0 %v4944
        %v4990 = vpop.f32.mrb[0].mxu0
        %v4991 = vadd.f32 %v4923, %v4990
        %v4992 = vpop.f32.mrb[0].mxu0
        %v4993 = vadd.f32 %v4923, %v4992
        %v4994 = vpop.f32.mrb[0].mxu0
        %v4995 = vadd.f32 %v4928, %v4994
        %v4996 = vpop.f32.mrb[0].mxu0
        %v4997 = vadd.f32 %v4928, %v4996
        %4998 = vdwg.mxu0
        %v4999 = vld [vmem:[%s20] sm:$0xf]
        %v5000 = vld [vmem:[%s20 + $0x4] sm:$0xf]
        %v5001 = vld [vmem:[%s20 + $0x8] sm:$0xf]
        %v5002 = vld [vmem:[%s20 + $0xc] sm:$0xf]
        %v5003 = vadd.f32 %v3319, %v4981
        %v5004 = vadd.f32 %v3321, %v4983
        %v5005 = vadd.f32 %v3323, %v4985
        %v5006 = vadd.f32 %v3325, %v4987
        %v5007 = vadd.f32 %v3329, %v4991
        %v5008 = vadd.f32 %v3331, %v4993
        %v5009 = vadd.f32 %v3333, %v4995
        %v5010 = vadd.f32 %v3335, %v4997
        %v5011 = vpack.c.bf16 %v5005, %v5003
        %v5012 = vpack.c.bf16 %v5006, %v5004
        %v5013 = vpack.c.bf16 %v5009, %v5007
        %v5014 = vpack.c.bf16 %v5010, %v5008
        %v5015 = vld [vmem:[%s21] sm:$0xff]
        %v5016 = vld [vmem:[%s21 + $0x8] sm:$0xff]
        %v5017 = vld [vmem:[%s21 + $0x10] sm:$0xff]
        %v5018 = vld [vmem:[%s21 + $0x18] sm:$0xff]
        %5020 = vset.pattern.permute.xlu0 0
        %5021 = vperm.xlu0 %5020, %v5015
        %v5022 = vpop.permute.xlu0 %5021
        %5025 = vset.pattern.permute.xlu0 0
        %5026 = vperm.xlu0 %5025, %v5016
        %v5027 = vpop.permute.xlu0 %5026
        %5030 = vset.pattern.permute.xlu0 0
        %5031 = vperm.xlu0 %5030, %v5017
        %v5032 = vpop.permute.xlu0 %5031
        %5035 = vset.pattern.permute.xlu0 0
        %5036 = vperm.xlu0 %5035, %v5018
        %v5037 = vpop.permute.xlu0 %5036
        %v5043 = vunpack.c.l.b16 %v4999
        %v5044 = vunpack.c.l.b16 %v5000
        %v5045 = vunpack.c.l.b16 %v5001
        %v5046 = vunpack.c.l.b16 %v5002
        %v5047 = vpack.c.b16 %v5044, %v5043
        %v5048 = vpack.c.b16 %v5046, %v5045
        %v5050 = vsel %vm778, %v5047, 0
        %v5053 = vsel %vm778, %v5048, 0
        %5055 = vmatprep.subr.bf16.mxu0 %v5012
        %5056 = vmatpush1.bf16.msra.mxu0 %v5011
        %5057 = vmatprep.subr.bf16.mxu0 %v5014
        %5058 = vmatpush1.bf16.msra.mxu0 %v5013
        %5059 = vmatprep.subr.bf16.mxu0 0
        %5060 = vmatpush1.bf16.msra.mxu0 0
        %5061 = vmatprep.subr.bf16.mxu0 0
        %5062 = vmatpush1.bf16.msra.mxu0 0
        %5063 = vmatprep.subr.bf16.mxu0 0
        %5064 = vmatpush1.bf16.msra.mxu0 0
        %5065 = vmatprep.subr.bf16.mxu0 0
        %5066 = vmatpush1.bf16.msra.mxu0 0
        %5067 = vmatprep.subr.bf16.mxu0 0
        %5068 = vmatpush1.bf16.msra.mxu0 0
        %5069 = vmatprep.subr.bf16.mxu0 0
        %5070 = vmatpush1.bf16.msra.mxu0 0
        %5071 = vmatprep.subr.bf16.mxu0 0
        %5072 = vmatpush1.bf16.msra.mxu0 0
        %5073 = vmatprep.subr.bf16.mxu0 0
        %5074 = vmatpush1.bf16.msra.mxu0 0
        %5075 = vmatprep.subr.bf16.mxu0 0
        %5076 = vmatpush1.bf16.msra.mxu0 0
        %5077 = vmatprep.subr.bf16.mxu0 0
        %5078 = vmatpush1.bf16.msra.mxu0 0
        %5079 = vmatprep.subr.bf16.mxu0 0
        %5080 = vmatpush1.bf16.msra.mxu0 0
        %5081 = vmatprep.subr.bf16.mxu0 0
        %5082 = vmatpush1.bf16.msra.mxu0 0
        %5083 = vmatprep.subr.bf16.mxu0 0
        %5084 = vmatpush1.bf16.msra.mxu0 0
        %5085 = vmatprep.subr.bf16.mxu0 0
        %5086 = vmatpush1.bf16.msra.mxu0 0
        %5087 = vmatprep.mubr.bf16.mxu0 0
        %5088 = vmatmul.mubr.bf16.gmra.mrb[0].mxu0 %v5050
        %v5089 = vpop.f32.mrb[0].mxu0
        %v5090 = vadd.f32 %v5022, %v5089
        %v5091 = vpop.f32.mrb[0].mxu0
        %v5092 = vadd.f32 %v5022, %v5091
        %v5093 = vpop.f32.mrb[0].mxu0
        %v5094 = vadd.f32 %v5027, %v5093
        %v5095 = vpop.f32.mrb[0].mxu0
        %v5096 = vadd.f32 %v5027, %v5095
        %5097 = vmatprep.mubr.bf16.mxu0 0
        %5098 = vmatmul.mubr.bf16.gmra.mrb[0].mxu0 %v5053
        %v5099 = vpop.f32.mrb[0].mxu0
        %v5100 = vadd.f32 %v5032, %v5099
        %v5101 = vpop.f32.mrb[0].mxu0
        %v5102 = vadd.f32 %v5032, %v5101
        %v5103 = vpop.f32.mrb[0].mxu0
        %v5104 = vadd.f32 %v5037, %v5103
        %v5105 = vpop.f32.mrb[0].mxu0
        %v5106 = vadd.f32 %v5037, %v5105
        %5107 = vdwg.mxu0
        %5108 = vst [vmem:[%s717] sm:$0xff] %v5090
        %5109 = vst [vmem:[%s717 + $0x8] sm:$0xff] %v5092
        %5110 = vst [vmem:[%s717 + $0x10] sm:$0xff] %v5094
        %5111 = vst [vmem:[%s717 + $0x18] sm:$0xff] %v5096
        %5112 = vst [vmem:[%s717 + $0x20] sm:$0xff] %v5100
        %5113 = vst [vmem:[%s717 + $0x28] sm:$0xff] %v5102
        %5114 = vst [vmem:[%s717 + $0x30] sm:$0xff] %v5104
        %5115 = vst [vmem:[%s717 + $0x38] sm:$0xff] %v5106
        %p5116 = scmp.lt.s32.totalorder %s34, 1
        %s5117 = scalar_select %p5116, %s34, 1
        %s5118 = smul.addr %s5117, 8
        %s5119 = smul.addr %s5118, 8
        %s5120 = scalar_lea.vmem %s22, %s5119
        // Predicated region
        $region113: #{ktm_forward.1} parent=107 // pred_check
          %p5121 = pneg %p524
        $region114: #{ktm_forward.1} parent=107 // pred_check_branch
          %5123 = sbr.rel (%p5121) target = $region116
        $region115: #{ktm_forward.1} parent=107 // pred_region
          _
        $region116: #{ktm_forward.1} parent=107 // pred_fallthru
          _
      $region108: #{ktm_forward.1} parent=5 // pred_fallthru
        _
      %p5124 = scmp.le.s32.totalorder 2, %s29
      // Predicated region
      $region117: #{ktm_forward.1} parent=5 // pred_check
        %p5125 = pneg %p5124
      $region118: #{ktm_forward.1} parent=5 // pred_check_branch
        %5127 = sbr.rel (%p5125) target = $region120
      $region119: #{ktm_forward.1} parent=5 // pred_region
        %s5128 = ssub.s32 %s29, 2
        // Predicated region
        $region121: #{ktm_forward.1} parent=119 // pred_check
          %p5129 = pneg %p530
        $region122: #{ktm_forward.1} parent=119 // pred_check_branch
          %5131 = sbr.rel (%p5129) target = $region124
        $region123: #{ktm_forward.1} parent=119 // pred_region
          %p5132 = scmp.lt.s32.totalorder %s35, 1
          %s5133 = scalar_select %p5132, %s35, 1
          %s5134 = smul.addr %s5133, 8
          %s5135 = smul.addr %s5134, 8
          %s5136 = scalar_lea.vmem %s22, %s5135
        $region124: #{ktm_forward.1} parent=119 // pred_fallthru
          _
      $region120: #{ktm_forward.1} parent=5 // pred_fallthru
        _
    $region6: #{ktm_forward.1} parent=1 // loop_footer
      %s33 = sadd.s32 1, %s29
    $region7: #{ktm_forward.1} parent=1 // loop_footer_branch
      %28 = sbr.rel target = $region3
    $region8: #{ktm_forward.1} parent=1 // loop_exit
      _
    %5137 = vsyncpa [#allocation4], 1
    %s5138 = scalar_lea.sflag [#allocation4], 1
    %5139 = vsyncpa %s5138, 1

</llo_original>
